<compile_context>
chip_gen: v7x
topology: tpu7x:2x2x1
jax: 0.10.0
libtpu: 0.0.40
codegen_flags: <defaults>
</compile_context>

<pallas_src>
import math
import numpy as np
import jax
import jax.numpy as jnp
from jax.experimental import pallas as pl
from jax.experimental.pallas import tpu as pltpu

EPSILON = 1e-10

# ---------------- configuration (small shapes consistent with the module) ----------------
B = 2                 # batch
L = 512               # data_length (waveform samples)
SR = 4000             # sample rate for mel filterbank
N_FFT = 64
HOP = 16
N_FREQ = N_FFT // 2 + 1            # 33
HALF_PAD = 64                      # lane-padded width for re / im halves
N_MELS = 32
C_BACKBONE = 32                    # backbone.num_channels
HIDDEN = 2048                      # fc1 output
NUM_CLASSES = 12                   # logits dim = num_classes - 1 = 11
LOGIT_PAD = 128                    # padded logits lane width
T = 1 + (L + 2 * (N_FFT // 2) - N_FFT) // HOP   # 33 frames (center=True)
BT = B * T


def _full_spec(shape):
    # whole-array block, single grid point
    return pl.BlockSpec(shape, lambda *_: (0,) * len(shape))


# ---------------------------------------------------------------------------
# Single fused kernel: log-mel + 3x3 conv (+ReLU) backbone + pooling + fc head
# ---------------------------------------------------------------------------
def fused_kernel(frames_ref, dft_ref, mel2_ref, wk_ref, convb_ref, avg_ref,
                 fc1b_ref, fc2b_ref, fc1w_hbm, fc2w_hbm,
                 spec_ref, feat_ref, logits_ref,
                 fc1w_vmem, fc2w_vmem, dma_sem):
    # ---- prefetch fc-head weights (HBM -> VMEM) so the DMA hides behind the front-end ----
    cp1 = pltpu.make_async_copy(fc1w_hbm, fc1w_vmem, dma_sem.at[0])
    cp2 = pltpu.make_async_copy(fc2w_hbm, fc2w_vmem, dma_sem.at[1])
    cp1.start()
    cp2.start()

    # ---- log-mel spectrogram: one MXU pass over lane-padded [re | im] DFT ----
    y = jnp.dot(frames_ref[...], dft_ref[...],
                preferred_element_type=jnp.float32)              # (BT, 128)
    power = y * y                                                # re^2 / im^2 in lane halves
    mel = jnp.dot(power, mel2_ref[...],
                  preferred_element_type=jnp.float32)            # (BT, M)
    logmel = jnp.log(mel + EPSILON)
    spec_ref[...] = logmel                                       # (BT, 32) masked store (tiny)

    # ---- Conv2d(1, C, 3, padding=1) + ReLU as ONE K=96 matmul ----
    # Row ids / per-batch time-boundary masks (built once; pure VPU, no MXU, no constants).
    rid = jax.lax.broadcasted_iota(jnp.int32, (BT, 1), 0)
    is_first = (rid == 0)
    is_last = (rid == T - 1)
    for b in range(1, B):
        is_first = is_first | (rid == b * T)
        is_last = is_last | (rid == (b + 1) * T - 1)
    zrow = jnp.zeros((1, N_MELS), jnp.float32)
    # time-shifted log-mel (row r <- row r-1 / r+1), zeroed at per-batch boundaries
    lm_m1 = jnp.where(is_first, 0.0,
                      jnp.concatenate([zrow, logmel[:-1, :]], axis=0))
    lm_p1 = jnp.where(is_last, 0.0,
                      jnp.concatenate([logmel[1:, :], zrow], axis=0))
    shifted = jnp.concatenate([lm_m1, logmel, lm_p1], axis=1)    # (BT, 96)
    feat = jnp.dot(shifted.astype(jnp.bfloat16), wk_ref[...],
                   preferred_element_type=jnp.float32) + convb_ref[...]
    feat = jnp.maximum(feat, 0.0)
    feat_ref[...] = feat                                         # lane-dense (BT, M*C)

    # ---- pooling head ----
    # mean over mel (torch.mean(x, dim=3)) folded into a block-averaging matmul
    tmean = jnp.dot(feat.astype(jnp.bfloat16), avg_ref[...],
                    preferred_element_type=jnp.float32)          # (BT, C)
    # per-batch max / mean over time via masked reductions on the full tile (no slices)
    parts = []
    for b in range(B):
        m = (rid >= b * T) & (rid < (b + 1) * T)
        x1_b = jnp.max(jnp.where(m, tmean, -jnp.inf), axis=0, keepdims=True)
        x2_b = jnp.sum(jnp.where(m, tmean, 0.0), axis=0, keepdims=True) * (1.0 / T)
        parts.append(x1_b + x2_b)
    x = jnp.concatenate(parts, axis=0)                           # (B, C)
    # TODO(synk): F.dropout(p=0.5) uses PyTorch's training=True default (stochastic mask
    #             + 1/(1-p) scaling); applied as identity (eval-mode) here.

    cp1.wait()                                                   # fc1 weights resident
    h = jnp.dot(x.astype(jnp.bfloat16), fc1w_vmem[...],
                preferred_element_type=jnp.float32) + fc1b_ref[...]
    h = jnp.maximum(h, 0.0)                                      # relu_(fc1(x))
    cp2.wait()                                                   # fc_audioset weights resident
    logits_ref[...] = jnp.dot(h.astype(jnp.bfloat16), fc2w_vmem[...],
                              preferred_element_type=jnp.float32) + fc2b_ref[...]


def fused_forward_call(frames, p):
    vmem_args = (frames, p["dft"], p["mel2"], p["wk"], p["convb_rep"],
                 p["avg_mat"], p["fc1_b"], p["fc2_b_pad"])
    hbm_args = (p["fc1_w"], p["fc2_w_pad"])
    return pl.pallas_call(
        fused_kernel,
        out_shape=(
            jax.ShapeDtypeStruct((BT, N_MELS), jnp.float32),                 # log-mel spec
            jax.ShapeDtypeStruct((BT, N_MELS * C_BACKBONE), jnp.float32),    # backbone feat
            jax.ShapeDtypeStruct((B, LOGIT_PAD), jnp.float32),               # padded logits
        ),
        grid=(1,),
        in_specs=([_full_spec(a.shape) for a in vmem_args]
                  + [pl.BlockSpec(memory_space=pl.ANY)] * len(hbm_args)),
        out_specs=(
            _full_spec((BT, N_MELS)),
            _full_spec((BT, N_MELS * C_BACKBONE)),
            _full_spec((B, LOGIT_PAD)),
        ),
        scratch_shapes=[
            pltpu.VMEM((C_BACKBONE, HIDDEN), jnp.bfloat16),       # fc1 weight buffer
            pltpu.VMEM((HIDDEN, LOGIT_PAD), jnp.bfloat16),        # fc_audioset weight buffer
            pltpu.SemaphoreType.DMA((2,)),
        ],
        compiler_params=pltpu.CompilerParams(dimension_semantics=("arbitrary",)),
    )(*vmem_args, *hbm_args)


# ---------------------------------------------------------------------------
# Wrapper glue: framing (reflect pad + gather) and output re-layout for the dict
# ---------------------------------------------------------------------------
def frame_waveform(waveform):
    # torchaudio Spectrogram default: center=True, pad_mode="reflect", periodic Hann
    pad = N_FFT // 2
    wpad = jnp.pad(waveform, ((0, 0), (pad, pad)), mode="reflect")
    t = 1 + (wpad.shape[1] - N_FFT) // HOP
    assert t == T
    idx = jnp.arange(t)[:, None] * HOP + jnp.arange(N_FFT)[None, :]
    frames = wpad[:, idx]                                        # (B, T, n_fft)
    return frames.reshape(B * t, N_FFT)


def original_forward(waveform, params):
    frames = frame_waveform(waveform)                            # (B*T, n_fft)
    spec_flat, feat_flat, logits_pad = fused_forward_call(frames, params)

    spec = spec_flat.reshape(B, 1, T, N_MELS)                    # (B, 1, T, M)
    backbone_feat = (feat_flat.reshape(B, T, N_MELS, C_BACKBONE)
                     .transpose(0, 3, 1, 2))                     # (B, C, T, M) for the returned dict
    pred_logits = logits_pad[:, :NUM_CLASSES - 1]                # (B, num_classes-1)
    return {"pred_logits": pred_logits, "backbone_feat": backbone_feat, "spec": spec}


# ---------------------------------------------------------------------------
# Parameters / precomputed constants
# ---------------------------------------------------------------------------
def init_params():
    # --- DFT (windowed, lane-padded [re | im]) and doubled HTK mel filterbank ---
    n = np.arange(N_FFT)
    k = np.arange(N_FREQ)
    window = 0.5 - 0.5 * np.cos(2.0 * np.pi * n / N_FFT)         # periodic Hann
    ang = 2.0 * np.pi * np.outer(n, k) / N_FFT
    dft = np.zeros((N_FFT, 2 * HALF_PAD), np.float32)
    dft[:, :N_FREQ] = window[:, None] * np.cos(ang)
    dft[:, HALF_PAD:HALF_PAD + N_FREQ] = window[:, None] * (-np.sin(ang))

    def hz_to_mel(f): return 2595.0 * np.log10(1.0 + f / 700.0)
    def mel_to_hz(m): return 700.0 * (10.0 ** (m / 2595.0) - 1.0)
    all_freqs = np.linspace(0.0, SR / 2.0, N_FREQ)
    m_pts = np.linspace(hz_to_mel(0.0), hz_to_mel(SR / 2.0), N_MELS + 2)
    f_pts = mel_to_hz(m_pts)
    f_diff = f_pts[1:] - f_pts[:-1]
    slopes = f_pts[None, :] - all_freqs[:, None]
    down = -slopes[:, :-2] / f_diff[:-1]
    up = slopes[:, 2:] / f_diff[1:]
    melfb = np.maximum(0.0, np.minimum(down, up)).astype(np.float32)   # (n_freq, n_mels)
    mel2 = np.zeros((2 * HALF_PAD, N_MELS), np.float32)
    mel2[:N_FREQ] = melfb
    mel2[HALF_PAD:HALF_PAD + N_FREQ] = melfb

    # --- conv weights -> single stacked (3*M, M*C) matmul slab (order = [t-1 | t | t+1]) ---
    key = jax.random.PRNGKey(0)
    k1, k2, k3 = jax.random.split(key, 3)
    # TODO(synk): with a real checkpoint, the (C,1,3,3) weight must be loaded as conv_w[ki,kj,c]
    #             = w_torch[c,0,ki,kj]; with random init the ordering is untested.
    conv_w = np.asarray(jax.random.normal(k1, (3, 3, C_BACKBONE), jnp.float32)) * (1.0 / 3.0)
    conv_b = np.zeros((C_BACKBONE,), np.float32)
    wk = np.zeros((3 * N_MELS, N_MELS * C_BACKBONE), np.float32)
    for ki in range(3):
        for kj in range(3):
            for m_out in range(N_MELS):
                m_in = m_out + kj - 1
                if 0 <= m_in < N_MELS:
                    wk[ki * N_MELS + m_in,
                       m_out * C_BACKBONE:(m_out + 1) * C_BACKBONE] = conv_w[ki, kj]
    convb_rep = np.tile(conv_b, N_MELS)[None, :].astype(np.float32)        # (1, M*C)

    # --- mel -> channel block-averaging matrix (mean over mel as a matmul) ---
    avg_mat = np.tile(np.eye(C_BACKBONE, dtype=np.float32) / N_MELS, (N_MELS, 1))  # (M*C, C)

    # --- fc head (init_layer: Xavier-style weights, zero bias); bf16 MXU operands ---
    fc1_w = (jax.random.normal(k2, (C_BACKBONE, HIDDEN), jnp.float32)
             * math.sqrt(2.0 / (C_BACKBONE + HIDDEN)))
    fc1_b = jnp.zeros((1, HIDDEN), jnp.float32)
    fc2_w = (jax.random.normal(k3, (HIDDEN, NUM_CLASSES - 1), jnp.float32)
             * math.sqrt(2.0 / (HIDDEN + NUM_CLASSES - 1)))
    fc2_w_pad = jnp.zeros((HIDDEN, LOGIT_PAD), jnp.float32).at[:, :NUM_CLASSES - 1].set(fc2_w)
    fc2_b_pad = jnp.zeros((1, LOGIT_PAD), jnp.float32)

    return {
        "dft": jnp.asarray(dft), "mel2": jnp.asarray(mel2),
        "wk": jnp.asarray(wk, dtype=jnp.bfloat16),
        "convb_rep": jnp.asarray(convb_rep),
        "avg_mat": jnp.asarray(avg_mat, dtype=jnp.bfloat16),
        "fc1_w": fc1_w.astype(jnp.bfloat16), "fc1_b": fc1_b,
        "fc2_w_pad": fc2_w_pad.astype(jnp.bfloat16), "fc2_b_pad": fc2_b_pad,
    }


if __name__ == "__main__":
    params = init_params()
    waveform = jax.random.normal(jax.random.PRNGKey(0), (B, L), jnp.float32)
    forward = jax.jit(original_forward)
    out = forward(waveform, params)
    jax.block_until_ready(out)
    assert out["pred_logits"].shape == (B, NUM_CLASSES - 1)
    assert out["backbone_feat"].shape == (B, C_BACKBONE, T, N_MELS)
    assert out["spec"].shape == (B, 1, T, N_MELS)
    print("KERNEL_OK")
</pallas_src>

<mosaic_0001>
module attributes {stable_mosaic.version = 11 : i64} {
  func.func @fused_kernel(%arg0: i32, %arg1: memref<66x64xf32, #tpu.memory_space<vmem>>, %arg2: memref<64x128xf32, #tpu.memory_space<vmem>>, %arg3: memref<128x32xf32, #tpu.memory_space<vmem>>, %arg4: memref<96x1024xbf16, #tpu.memory_space<vmem>>, %arg5: memref<1x1024xf32, #tpu.memory_space<vmem>>, %arg6: memref<1024x32xbf16, #tpu.memory_space<vmem>>, %arg7: memref<1x2048xf32, #tpu.memory_space<vmem>>, %arg8: memref<1x128xf32, #tpu.memory_space<vmem>>, %arg9: memref<32x2048xbf16, #tpu.memory_space<any>>, %arg10: memref<2048x128xbf16, #tpu.memory_space<any>>, %arg11: memref<66x32xf32, #tpu.memory_space<vmem>>, %arg12: memref<66x1024xf32, #tpu.memory_space<vmem>>, %arg13: memref<2x128xf32, #tpu.memory_space<vmem>>, %arg14: memref<32x2048xbf16, #tpu.memory_space<vmem>>, %arg15: memref<2048x128xbf16, #tpu.memory_space<vmem>>, %arg16: memref<2x!tpu.dma_semaphore, #tpu.memory_space<semaphore_mem>>) attributes {dimension_semantics = [#tpu.dimension_semantics<arbitrary>], iteration_bounds = array<i64: 1>, scalar_prefetch = 0 : i64, scratch_operands = 3 : i64, tpu.core_type = #tpu.core_type<tc>, window_params = [{pipeline_mode = #tpu.pipeline_mode<synchronous>, transform_indices = @transform_0, window_bounds = array<i64: 66, 64>}, {pipeline_mode = #tpu.pipeline_mode<synchronous>, transform_indices = @transform_1, window_bounds = array<i64: 64, 128>}, {pipeline_mode = #tpu.pipeline_mode<synchronous>, transform_indices = @transform_2, window_bounds = array<i64: 128, 32>}, {pipeline_mode = #tpu.pipeline_mode<synchronous>, transform_indices = @transform_3, window_bounds = array<i64: 96, 1024>}, {pipeline_mode = #tpu.pipeline_mode<synchronous>, transform_indices = @transform_4, window_bounds = array<i64: 1, 1024>}, {pipeline_mode = #tpu.pipeline_mode<synchronous>, transform_indices = @transform_5, window_bounds = array<i64: 1024, 32>}, {pipeline_mode = #tpu.pipeline_mode<synchronous>, transform_indices = @transform_6, window_bounds = array<i64: 1, 2048>}, {pipeline_mode = #tpu.pipeline_mode<synchronous>, transform_indices = @transform_7, window_bounds = array<i64: 1, 128>}, {}, {}, {pipeline_mode = #tpu.pipeline_mode<synchronous>, transform_indices = @transform_10, window_bounds = array<i64: 66, 32>}, {pipeline_mode = #tpu.pipeline_mode<synchronous>, transform_indices = @transform_11, window_bounds = array<i64: 66, 1024>}, {pipeline_mode = #tpu.pipeline_mode<synchronous>, transform_indices = @transform_12, window_bounds = array<i64: 2, 128>}]} {
    %c0_i32 = arith.constant 0 : i32
    %0 = tpu.memref_slice %arg16[%c0_i32] : memref<2x!tpu.dma_semaphore, #tpu.memory_space<semaphore_mem>> -> memref<1x!tpu.dma_semaphore, #tpu.memory_space<semaphore_mem>>
    %1 = tpu.memref_squeeze %0 : memref<1x!tpu.dma_semaphore, #tpu.memory_space<semaphore_mem>> -> memref<!tpu.dma_semaphore, #tpu.memory_space<semaphore_mem>>
    tpu.enqueue_dma source(%arg9 : memref<32x2048xbf16, #tpu.memory_space<any>>) target(%arg14 : memref<32x2048xbf16, #tpu.memory_space<vmem>>) target_semaphore(%1 : memref<!tpu.dma_semaphore, #tpu.memory_space<semaphore_mem>>)
    %c1_i32 = arith.constant 1 : i32
    %2 = tpu.memref_slice %arg16[%c1_i32] : memref<2x!tpu.dma_semaphore, #tpu.memory_space<semaphore_mem>> -> memref<1x!tpu.dma_semaphore, #tpu.memory_space<semaphore_mem>>
    %3 = tpu.memref_squeeze %2 : memref<1x!tpu.dma_semaphore, #tpu.memory_space<semaphore_mem>> -> memref<!tpu.dma_semaphore, #tpu.memory_space<semaphore_mem>>
    tpu.enqueue_dma source(%arg10 : memref<2048x128xbf16, #tpu.memory_space<any>>) target(%arg15 : memref<2048x128xbf16, #tpu.memory_space<vmem>>) target_semaphore(%3 : memref<!tpu.dma_semaphore, #tpu.memory_space<semaphore_mem>>)
    %c0 = arith.constant 0 : index
    %c0_0 = arith.constant 0 : index
    %4 = vector.load %arg1[%c0, %c0_0] : memref<66x64xf32, #tpu.memory_space<vmem>>, vector<66x64xf32>
    %c0_1 = arith.constant 0 : index
    %c0_2 = arith.constant 0 : index
    %5 = vector.load %arg2[%c0_1, %c0_2] : memref<64x128xf32, #tpu.memory_space<vmem>>, vector<64x128xf32>
    %cst = arith.constant dense<0.000000e+00> : vector<66x128xf32>
    %6 = tpu.matmul %4, %5, %cst {dimension_numbers = #tpu.dot_dimension_numbers<[1], [0], [0], [1], [0, 0, 1, 1], [], []>} : vector<66x64xf32>, vector<64x128xf32>, vector<66x128xf32> -> vector<66x128xf32>
    %7 = arith.mulf %6, %6 : vector<66x128xf32>
    %c0_3 = arith.constant 0 : index
    %c0_4 = arith.constant 0 : index
    %8 = vector.load %arg3[%c0_3, %c0_4] : memref<128x32xf32, #tpu.memory_space<vmem>>, vector<128x32xf32>
    %cst_5 = arith.constant dense<0.000000e+00> : vector<66x32xf32>
    %9 = tpu.matmul %7, %8, %cst_5 {dimension_numbers = #tpu.dot_dimension_numbers<[1], [0], [0], [1], [0, 0, 1, 1], [], []>} : vector<66x128xf32>, vector<128x32xf32>, vector<66x32xf32> -> vector<66x32xf32>
    %cst_6 = arith.constant 1.000000e-10 : f32
    %10 = vector.broadcast %cst_6 : f32 to vector<66x32xf32>
    %11 = arith.addf %9, %10 : vector<66x32xf32>
    %12 = math.log %11 : vector<66x32xf32>
    %c0_7 = arith.constant 0 : index
    %c0_8 = arith.constant 0 : index
    %13 = vector.load %arg11[%c0_7, %c0_8] : memref<66x32xf32, #tpu.memory_space<vmem>>, vector<66x32xf32>
    tpu.vector_store %arg11[%c0_7, %c0_8], %12 {strides = array<i32>} : memref<66x32xf32, #tpu.memory_space<vmem>>, vector<66x32xf32>,
    %14 = tpu.iota {dimensions = array<i32: 0>} : vector<66x1xi32>
    %c0_i32_9 = arith.constant 0 : i32
    %15 = vector.broadcast %c0_i32_9 : i32 to vector<66x1xi32>
    %16 = arith.cmpi eq, %14, %15 : vector<66x1xi32>
    %c32_i32 = arith.constant 32 : i32
    %17 = vector.broadcast %c32_i32 : i32 to vector<66x1xi32>
    %18 = arith.cmpi eq, %14, %17 : vector<66x1xi32>
    %c33_i32 = arith.constant 33 : i32
    %19 = vector.broadcast %c33_i32 : i32 to vector<66x1xi32>
    %20 = arith.cmpi eq, %14, %19 : vector<66x1xi32>
    %21 = arith.ori %16, %20 : vector<66x1xi1>
    %c65_i32 = arith.constant 65 : i32
    %22 = vector.broadcast %c65_i32 : i32 to vector<66x1xi32>
    %23 = arith.cmpi eq, %14, %22 : vector<66x1xi32>
    %24 = arith.ori %18, %23 : vector<66x1xi1>
    %cst_10 = arith.constant 0.000000e+00 : f32
    %25 = vector.broadcast %cst_10 : f32 to vector<1x32xf32>
    %26 = vector.extract_strided_slice %12 {offsets = [0, 0], sizes = [65, 32], strides = [1, 1]} : vector<66x32xf32> to vector<65x32xf32>
    %27 = tpu.concatenate %25, %26 in 0 : vector<1x32xf32>, vector<65x32xf32> -> vector<66x32xf32>
    %cst_11 = arith.constant 0.000000e+00 : f32
    %28 = vector.shape_cast %21 : vector<66x1xi1> to vector<66x1xi1>
    %29 = vector.broadcast %28 : vector<66x1xi1> to vector<66x32xi1>
    %30 = vector.broadcast %cst_11 : f32 to vector<66x32xf32>
    %31 = arith.select %29, %30, %27 : vector<66x32xi1>, vector<66x32xf32>
    %32 = vector.extract_strided_slice %12 {offsets = [1, 0], sizes = [65, 32], strides = [1, 1]} : vector<66x32xf32> to vector<65x32xf32>
    %33 = tpu.concatenate %32, %25 in 0 : vector<65x32xf32>, vector<1x32xf32> -> vector<66x32xf32>
    %cst_12 = arith.constant 0.000000e+00 : f32
    %34 = vector.shape_cast %24 : vector<66x1xi1> to vector<66x1xi1>
    %35 = vector.broadcast %34 : vector<66x1xi1> to vector<66x32xi1>
    %36 = vector.broadcast %cst_12 : f32 to vector<66x32xf32>
    %37 = arith.select %35, %36, %33 : vector<66x32xi1>, vector<66x32xf32>
    %38 = tpu.concatenate %31, %12, %37 in 1 : vector<66x32xf32>, vector<66x32xf32>, vector<66x32xf32> -> vector<66x96xf32>
    %39 = arith.truncf %38 : vector<66x96xf32> to vector<66x96xbf16>
    %c0_13 = arith.constant 0 : index
    %c0_14 = arith.constant 0 : index
    %40 = vector.load %arg4[%c0_13, %c0_14] : memref<96x1024xbf16, #tpu.memory_space<vmem>>, vector<96x1024xbf16>
    %cst_15 = arith.constant dense<0.000000e+00> : vector<66x1024xf32>
    %41 = tpu.matmul %39, %40, %cst_15 {dimension_numbers = #tpu.dot_dimension_numbers<[1], [0], [0], [1], [0, 0, 1, 1], [], []>} : vector<66x96xbf16>, vector<96x1024xbf16>, vector<66x1024xf32> -> vector<66x1024xf32>
    %c0_16 = arith.constant 0 : index
    %c0_17 = arith.constant 0 : index
    %42 = vector.load %arg5[%c0_16, %c0_17] : memref<1x1024xf32, #tpu.memory_space<vmem>>, vector<1x1024xf32>
    %43 = vector.broadcast %42 : vector<1x1024xf32> to vector<66x1024xf32>
    %44 = arith.addf %41, %43 : vector<66x1024xf32>
    %cst_18 = arith.constant 0.000000e+00 : f32
    %45 = vector.broadcast %cst_18 : f32 to vector<66x1024xf32>
    %46 = arith.maximumf %44, %45 : vector<66x1024xf32>
    %c0_19 = arith.constant 0 : index
    %c0_20 = arith.constant 0 : index
    %47 = vector.load %arg12[%c0_19, %c0_20] : memref<66x1024xf32, #tpu.memory_space<vmem>>, vector<66x1024xf32>
    tpu.vector_store %arg12[%c0_19, %c0_20], %46 {strides = array<i32>} : memref<66x1024xf32, #tpu.memory_space<vmem>>, vector<66x1024xf32>,
    %48 = arith.truncf %46 : vector<66x1024xf32> to vector<66x1024xbf16>
    %c0_21 = arith.constant 0 : index
    %c0_22 = arith.constant 0 : index
    %49 = vector.load %arg6[%c0_21, %c0_22] : memref<1024x32xbf16, #tpu.memory_space<vmem>>, vector<1024x32xbf16>
    %cst_23 = arith.constant dense<0.000000e+00> : vector<66x32xf32>
    %50 = tpu.matmul %48, %49, %cst_23 {dimension_numbers = #tpu.dot_dimension_numbers<[1], [0], [0], [1], [0, 0, 1, 1], [], []>} : vector<66x1024xbf16>, vector<1024x32xbf16>, vector<66x32xf32> -> vector<66x32xf32>
    %c0_i32_24 = arith.constant 0 : i32
    %51 = vector.broadcast %c0_i32_24 : i32 to vector<66x1xi32>
    %52 = arith.cmpi sge, %14, %51 : vector<66x1xi32>
    %c33_i32_25 = arith.constant 33 : i32
    %53 = vector.broadcast %c33_i32_25 : i32 to vector<66x1xi32>
    %54 = arith.cmpi slt, %14, %53 : vector<66x1xi32>
    %55 = arith.andi %52, %54 : vector<66x1xi1>
    %cst_26 = arith.constant 0xFF800000 : f32
    %56 = vector.shape_cast %55 : vector<66x1xi1> to vector<66x1xi1>
    %57 = vector.broadcast %56 : vector<66x1xi1> to vector<66x32xi1>
    %58 = vector.broadcast %cst_26 : f32 to vector<66x32xf32>
    %59 = arith.select %57, %50, %58 : vector<66x32xi1>, vector<66x32xf32>
    %cst_27 = arith.constant dense<0xFF800000> : vector<32xf32>
    %60 = vector.multi_reduction <maximumf>, %59, %cst_27 [0] : vector<66x32xf32> to vector<32xf32>
    %61 = vector.shape_cast %60 : vector<32xf32> to vector<1x32xf32>
    %cst_28 = arith.constant 0.000000e+00 : f32
    %62 = vector.shape_cast %55 : vector<66x1xi1> to vector<66x1xi1>
    %63 = vector.broadcast %62 : vector<66x1xi1> to vector<66x32xi1>
    %64 = vector.broadcast %cst_28 : f32 to vector<66x32xf32>
    %65 = arith.select %63, %50, %64 : vector<66x32xi1>, vector<66x32xf32>
    %cst_29 = arith.constant dense<0.000000e+00> : vector<32xf32>
    %66 = vector.multi_reduction <add>, %65, %cst_29 [0] : vector<66x32xf32> to vector<32xf32>
    %67 = vector.shape_cast %66 : vector<32xf32> to vector<1x32xf32>
    %cst_30 = arith.constant 0.0303030312 : f32
    %68 = vector.broadcast %cst_30 : f32 to vector<1x32xf32>
    %69 = arith.mulf %67, %68 : vector<1x32xf32>
    %70 = arith.addf %61, %69 : vector<1x32xf32>
    %c33_i32_31 = arith.constant 33 : i32
    %71 = vector.broadcast %c33_i32_31 : i32 to vector<66x1xi32>
    %72 = arith.cmpi sge, %14, %71 : vector<66x1xi32>
    %c66_i32 = arith.constant 66 : i32
    %73 = vector.broadcast %c66_i32 : i32 to vector<66x1xi32>
    %74 = arith.cmpi slt, %14, %73 : vector<66x1xi32>
    %75 = arith.andi %72, %74 : vector<66x1xi1>
    %cst_32 = arith.constant 0xFF800000 : f32
    %76 = vector.shape_cast %75 : vector<66x1xi1> to vector<66x1xi1>
    %77 = vector.broadcast %76 : vector<66x1xi1> to vector<66x32xi1>
    %78 = vector.broadcast %cst_32 : f32 to vector<66x32xf32>
    %79 = arith.select %77, %50, %78 : vector<66x32xi1>, vector<66x32xf32>
    %cst_33 = arith.constant dense<0xFF800000> : vector<32xf32>
    %80 = vector.multi_reduction <maximumf>, %79, %cst_33 [0] : vector<66x32xf32> to vector<32xf32>
    %81 = vector.shape_cast %80 : vector<32xf32> to vector<1x32xf32>
    %cst_34 = arith.constant 0.000000e+00 : f32
    %82 = vector.shape_cast %75 : vector<66x1xi1> to vector<66x1xi1>
    %83 = vector.broadcast %82 : vector<66x1xi1> to vector<66x32xi1>
    %84 = vector.broadcast %cst_34 : f32 to vector<66x32xf32>
    %85 = arith.select %83, %50, %84 : vector<66x32xi1>, vector<66x32xf32>
    %cst_35 = arith.constant dense<0.000000e+00> : vector<32xf32>
    %86 = vector.multi_reduction <add>, %85, %cst_35 [0] : vector<66x32xf32> to vector<32xf32>
    %87 = vector.shape_cast %86 : vector<32xf32> to vector<1x32xf32>
    %cst_36 = arith.constant 0.0303030312 : f32
    %88 = vector.broadcast %cst_36 : f32 to vector<1x32xf32>
    %89 = arith.mulf %87, %88 : vector<1x32xf32>
    %90 = arith.addf %81, %89 : vector<1x32xf32>
    %91 = tpu.concatenate %70, %90 in 0 : vector<1x32xf32>, vector<1x32xf32> -> vector<2x32xf32>
    %c0_i32_37 = arith.constant 0 : i32
    %92 = tpu.memref_slice %arg16[%c0_i32_37] : memref<2x!tpu.dma_semaphore, #tpu.memory_space<semaphore_mem>> -> memref<1x!tpu.dma_semaphore, #tpu.memory_space<semaphore_mem>>
    %93 = tpu.memref_squeeze %92 : memref<1x!tpu.dma_semaphore, #tpu.memory_space<semaphore_mem>> -> memref<!tpu.dma_semaphore, #tpu.memory_space<semaphore_mem>>
    tpu.wait_dma2 semaphore(%93 : memref<!tpu.dma_semaphore, #tpu.memory_space<semaphore_mem>>) src(%arg9 : memref<32x2048xbf16, #tpu.memory_space<any>>) dst(%arg14 : memref<32x2048xbf16, #tpu.memory_space<vmem>>)
    %94 = arith.truncf %91 : vector<2x32xf32> to vector<2x32xbf16>
    %c0_38 = arith.constant 0 : index
    %c0_39 = arith.constant 0 : index
    %95 = vector.load %arg14[%c0_38, %c0_39] : memref<32x2048xbf16, #tpu.memory_space<vmem>>, vector<32x2048xbf16>
    %cst_40 = arith.constant dense<0.000000e+00> : vector<2x2048xf32>
    %96 = tpu.matmul %94, %95, %cst_40 {dimension_numbers = #tpu.dot_dimension_numbers<[1], [0], [0], [1], [0, 0, 1, 1], [], []>} : vector<2x32xbf16>, vector<32x2048xbf16>, vector<2x2048xf32> -> vector<2x2048xf32>
    %c0_41 = arith.constant 0 : index
    %c0_42 = arith.constant 0 : index
    %97 = vector.load %arg7[%c0_41, %c0_42] : memref<1x2048xf32, #tpu.memory_space<vmem>>, vector<1x2048xf32>
    %98 = vector.broadcast %97 : vector<1x2048xf32> to vector<2x2048xf32>
    %99 = arith.addf %96, %98 : vector<2x2048xf32>
    %cst_43 = arith.constant 0.000000e+00 : f32
    %100 = vector.broadcast %cst_43 : f32 to vector<2x2048xf32>
    %101 = arith.maximumf %99, %100 : vector<2x2048xf32>
    %c1_i32_44 = arith.constant 1 : i32
    %102 = tpu.memref_slice %arg16[%c1_i32_44] : memref<2x!tpu.dma_semaphore, #tpu.memory_space<semaphore_mem>> -> memref<1x!tpu.dma_semaphore, #tpu.memory_space<semaphore_mem>>
    %103 = tpu.memref_squeeze %102 : memref<1x!tpu.dma_semaphore, #tpu.memory_space<semaphore_mem>> -> memref<!tpu.dma_semaphore, #tpu.memory_space<semaphore_mem>>
    tpu.wait_dma2 semaphore(%103 : memref<!tpu.dma_semaphore, #tpu.memory_space<semaphore_mem>>) src(%arg10 : memref<2048x128xbf16, #tpu.memory_space<any>>) dst(%arg15 : memref<2048x128xbf16, #tpu.memory_space<vmem>>)
    %104 = arith.truncf %101 : vector<2x2048xf32> to vector<2x2048xbf16>
    %c0_45 = arith.constant 0 : index
    %c0_46 = arith.constant 0 : index
    %105 = vector.load %arg15[%c0_45, %c0_46] : memref<2048x128xbf16, #tpu.memory_space<vmem>>, vector<2048x128xbf16>
    %cst_47 = arith.constant dense<0.000000e+00> : vector<2x128xf32>
    %106 = tpu.matmul %104, %105, %cst_47 {dimension_numbers = #tpu.dot_dimension_numbers<[1], [0], [0], [1], [0, 0, 1, 1], [], []>} : vector<2x2048xbf16>, vector<2048x128xbf16>, vector<2x128xf32> -> vector<2x128xf32>
    %c0_48 = arith.constant 0 : index
    %c0_49 = arith.constant 0 : index
    %107 = vector.load %arg8[%c0_48, %c0_49] : memref<1x128xf32, #tpu.memory_space<vmem>>, vector<1x128xf32>
    %108 = vector.broadcast %107 : vector<1x128xf32> to vector<2x128xf32>
    %109 = arith.addf %106, %108 : vector<2x128xf32>
    %c0_50 = arith.constant 0 : index
    %c0_51 = arith.constant 0 : index
    %110 = vector.load %arg13[%c0_50, %c0_51] : memref<2x128xf32, #tpu.memory_space<vmem>>, vector<2x128xf32>
    tpu.vector_store %arg13[%c0_50, %c0_51], %109 {strides = array<i32>} : memref<2x128xf32, #tpu.memory_space<vmem>>, vector<2x128xf32>,
    return
  }
  func.func @transform_0(%arg0: i32) -> (i32, i32) {
    %c0_i32 = arith.constant 0 : i32
    %c0_i32_0 = arith.constant 0 : i32
    %c0_i32_1 = arith.constant 0 : i32
    return %c0_i32, %c0_i32_0 : i32, i32
  }
  func.func @transform_1(%arg0: i32) -> (i32, i32) {
    %c0_i32 = arith.constant 0 : i32
    %c0_i32_0 = arith.constant 0 : i32
    %c0_i32_1 = arith.constant 0 : i32
    return %c0_i32, %c0_i32_0 : i32, i32
  }
  func.func @transform_2(%arg0: i32) -> (i32, i32) {
    %c0_i32 = arith.constant 0 : i32
    %c0_i32_0 = arith.constant 0 : i32
    %c0_i32_1 = arith.constant 0 : i32
    return %c0_i32, %c0_i32_0 : i32, i32
  }
  func.func @transform_3(%arg0: i32) -> (i32, i32) {
    %c0_i32 = arith.constant 0 : i32
    %c0_i32_0 = arith.constant 0 : i32
    %c0_i32_1 = arith.constant 0 : i32
    return %c0_i32, %c0_i32_0 : i32, i32
  }
  func.func @transform_4(%arg0: i32) -> (i32, i32) {
    %c0_i32 = arith.constant 0 : i32
    %c0_i32_0 = arith.constant 0 : i32
    %c0_i32_1 = arith.constant 0 : i32
    return %c0_i32, %c0_i32_0 : i32, i32
  }
  func.func @transform_5(%arg0: i32) -> (i32, i32) {
    %c0_i32 = arith.constant 0 : i32
    %c0_i32_0 = arith.constant 0 : i32
    %c0_i32_1 = arith.constant 0 : i32
    return %c0_i32, %c0_i32_0 : i32, i32
  }
  func.func @transform_6(%arg0: i32) -> (i32, i32) {
    %c0_i32 = arith.constant 0 : i32
    %c0_i32_0 = arith.constant 0 : i32
    %c0_i32_1 = arith.constant 0 : i32
    return %c0_i32, %c0_i32_0 : i32, i32
  }
  func.func @transform_7(%arg0: i32) -> (i32, i32) {
    %c0_i32 = arith.constant 0 : i32
    %c0_i32_0 = arith.constant 0 : i32
    %c0_i32_1 = arith.constant 0 : i32
    return %c0_i32, %c0_i32_0 : i32, i32
  }
  func.func @transform_10(%arg0: i32) -> (i32, i32) {
    %c0_i32 = arith.constant 0 : i32
    %c0_i32_0 = arith.constant 0 : i32
    %c0_i32_1 = arith.constant 0 : i32
    return %c0_i32, %c0_i32_0 : i32, i32
  }
  func.func @transform_11(%arg0: i32) -> (i32, i32) {
    %c0_i32 = arith.constant 0 : i32
    %c0_i32_0 = arith.constant 0 : i32
    %c0_i32_1 = arith.constant 0 : i32
    return %c0_i32, %c0_i32_0 : i32, i32
  }
  func.func @transform_12(%arg0: i32) -> (i32, i32) {
    %c0_i32 = arith.constant 0 : i32
    %c0_i32_0 = arith.constant 0 : i32
    %c0_i32_1 = arith.constant 0 : i32
    return %c0_i32, %c0_i32_0 : i32, i32
  }
}

</mosaic_0001>

<llo_original>
// kernel: original_forward.1
$region0: #{original_forward.1}
  #allocation0 [shape = 'u32[]', space=smem, size = 0x4, offset = 0x4, fixed_abs, tag = 'smem constant byte address 0x4 - core index']
  #allocation1 [shape = 'u32[144,128]{1,0:T(1,128)}', space=vmem, size = 0x12000, scoped, tag = 'internal scratch']
  #allocation2 [shape = 'bf16[32,2048]{1,0:T(16,128)(2,1)}', space=vmem, size = 0x20000, scoped, tag = 'scratch operand']
  #allocation3 [shape = 'bf16[2048,128]{1,0:T(16,128)(2,1)}', space=vmem, size = 0x80000, scoped, tag = 'scratch operand']
  #allocation4 [shape = 's32[2]{0}', space=sflag, size = 0x8, scoped, tag = 'scratch operand']
  #allocation7 [shape = 's32[]', space=sflag, size = 0x4, offset = 0, fixed_abs, tag = 'sflag constant byte address 0x0 - dummy sync flag']
  #allocation8 [shape = 's32[]', space=sflag, size = 0x4, offset = 0, fixed_abs, tag = 'sflag constant byte address 0x0 - dummy sync flag']
  %s0 = inlined_call_operand.vmem [shape: f32[66,64], index: 0, kind: input, shape index: {}]
  %s1 = inlined_call_operand.vmem [shape: f32[64,128], index: 1, kind: input, shape index: {}]
  %s2 = inlined_call_operand.vmem [shape: f32[128,32], index: 2, kind: input, shape index: {}]
  %s3 = inlined_call_operand.vmem [shape: bf16[96,1024], index: 3, kind: input, shape index: {}]
  %s4 = inlined_call_operand.vmem [shape: f32[1,1024], index: 4, kind: input, shape index: {}]
  %s5 = inlined_call_operand.vmem [shape: bf16[1024,32], index: 5, kind: input, shape index: {}]
  %s6 = inlined_call_operand.vmem [shape: f32[1,2048], index: 6, kind: input, shape index: {}]
  %s7 = inlined_call_operand.vmem [shape: f32[1,128], index: 7, kind: input, shape index: {}]
  %s8 = inlined_call_operand.vmem [shape: bf16[32,2048], index: 8, kind: input, shape index: {}]
  %s9 = inlined_call_operand.vmem [shape: bf16[2048,128], index: 9, kind: input, shape index: {}]
  %s10 = inlined_call_operand.vmem [shape: f32[66,32], index: 10, kind: output, shape index: {0}]
  %s11 = inlined_call_operand.vmem [shape: f32[66,1024], index: 11, kind: output, shape index: {1}]
  %s12 = inlined_call_operand.hbm [shape: f32[2,128], index: 12, kind: output, shape index: {2}]
  %13 = xla_tuple %s10, %s11, %s12
  %s14 = sld [smem:[#allocation0]]
  $region129: #{original_forward.1} parent=0
    _
  %s16 = ssub.s32 1, %s14
  %s17 = scalar_select 0, %s16, %s14
  $region1: #{original_forward.1} parent=0
    #allocation5 [shape = 'u8[1024]{0}', space=vmem, size = 0x400, scoped, tag = 'output window, operand 2, single buffered']
    #allocation6 [shape = 's32[1]{0}', space=sflag, size = 0x4, scoped, tag = 'scoped memory for original_forward.1']
    %18 = vsyncpa [#allocation6], 0
    // Predicated region
    $region2: #{original_forward.1} parent=1 // pred_check
      _
    $region3: #{original_forward.1} parent=1 // pred_check_branch
      %20 = sbr.rel (0) target = $region5
    $region4: #{original_forward.1} parent=1 // pred_region
      _
    $region5: #{original_forward.1} parent=1 // pred_fallthru
      _
    // Predicated region
    $region6: #{original_forward.1} parent=1 // pred_check
      _
    $region7: #{original_forward.1} parent=1 // pred_check_branch
      %22 = sbr.rel (0) target = $region9
    $region8: #{original_forward.1} parent=1 // pred_region
      _
    $region9: #{original_forward.1} parent=1 // pred_fallthru
      _
    // Predicated region
    $region10: #{original_forward.1} parent=1 // pred_check
      _
    $region11: #{original_forward.1} parent=1 // pred_check_branch
      %24 = sbr.rel (0) target = $region13
    $region12: #{original_forward.1} parent=1 // pred_region
      _
    $region13: #{original_forward.1} parent=1 // pred_fallthru
      _
    // Predicated region
    $region14: #{original_forward.1} parent=1 // pred_check
      _
    $region15: #{original_forward.1} parent=1 // pred_check_branch
      %26 = sbr.rel (0) target = $region17
    $region16: #{original_forward.1} parent=1 // pred_region
      _
    $region17: #{original_forward.1} parent=1 // pred_fallthru
      _
    // Predicated region
    $region18: #{original_forward.1} parent=1 // pred_check
      _
    $region19: #{original_forward.1} parent=1 // pred_check_branch
      %28 = sbr.rel (0) target = $region21
    $region20: #{original_forward.1} parent=1 // pred_region
      _
    $region21: #{original_forward.1} parent=1 // pred_fallthru
      _
    // Predicated region
    $region22: #{original_forward.1} parent=1 // pred_check
      _
    $region23: #{original_forward.1} parent=1 // pred_check_branch
      %30 = sbr.rel (0) target = $region25
    $region24: #{original_forward.1} parent=1 // pred_region
      _
    $region25: #{original_forward.1} parent=1 // pred_fallthru
      _
    // Predicated region
    $region26: #{original_forward.1} parent=1 // pred_check
      _
    $region27: #{original_forward.1} parent=1 // pred_check_branch
      %32 = sbr.rel (0) target = $region29
    $region28: #{original_forward.1} parent=1 // pred_region
      _
    $region29: #{original_forward.1} parent=1 // pred_fallthru
      _
    // Predicated region
    $region30: #{original_forward.1} parent=1 // pred_check
      _
    $region31: #{original_forward.1} parent=1 // pred_check_branch
      %34 = sbr.rel (0) target = $region33
    $region32: #{original_forward.1} parent=1 // pred_region
      _
    $region33: #{original_forward.1} parent=1 // pred_fallthru
      _
    %p37 = scmp.lt.u32.totalorder 4, 8
    %p38 = pneg %p37
    // Predicated region
    $region34: #{original_forward.1} parent=1 // pred_check
      _
    $region35: #{original_forward.1} parent=1 // pred_check_branch
      %40 = sbr.rel (%p37) target = $region37
    $region36: #{original_forward.1} parent=1 // pred_region
      %s181 = sand.u32 4, 7
      %p182 = scmp.eq.s32.totalorder %s181, 0
      %p183 = pneg %p182
      // Predicated region
      $region49: #{original_forward.1} parent=36 // pred_check
        _
      $region50: #{original_forward.1} parent=36 // pred_check_branch
        %185 = sbr.rel (%p182) target = $region52
      $region51: #{original_forward.1} parent=36 // pred_region
        %s186 = sand.u32 4, 7
        %s187 = ssub.s32 4, %s186
        %s188 = scalar_lea.vmem %s8, %s187
        %s189 = ssub.s32 4, %s186
        %s190 = scalar_lea.vmem [#allocation2], %s189
        loop: start=0, step=1, limit=1
        $region53: #{original_forward.1} parent=51 // loop_pre_header
          _
        $region54: #{original_forward.1} parent=51 // loop_header
          %s192 = sphi 0, %s196
          %p193 = scmp.ge.s32.totalorder %s192, 1
          %s197 = sphi %s8, %s8
          %s198 = sphi [#allocation2], [#allocation2]
        $region55: #{original_forward.1} parent=51 // loop_header_branch
          %195 = sbr.rel (%p193) target = $region59
        $region56: #{original_forward.1} parent=51 // loop_body
          _
        $region57: #{original_forward.1} parent=51 // loop_footer
          %s196 = sadd.s32 1, %s192
        $region58: #{original_forward.1} parent=51 // loop_footer_branch
          %191 = sbr.rel target = $region54
        $region59: #{original_forward.1} parent=51 // loop_exit
          _
        %s199 = sshllo.u32 0, %s186
        loop: start=0, step=1, limit=1
        $region60: #{original_forward.1} parent=51 // loop_pre_header
          _
        $region61: #{original_forward.1} parent=51 // loop_header
          %s201 = sphi 0, %s205
          %p202 = scmp.ge.s32.totalorder %s201, 1
          %s206 = sphi %s188, %s188
          %s207 = sphi %s190, %s190
        $region62: #{original_forward.1} parent=51 // loop_header_branch
          %204 = sbr.rel (%p202) target = $region66
        $region63: #{original_forward.1} parent=51 // loop_body
          %v208 = vld [vmem:[%s206] sm:%s199]
          %209 = vst [vmem:[%s207] sm:%s199] %v208
          %v210 = vld [vmem:[%s206 + $0x40] sm:%s199]
          %211 = vst [vmem:[%s207 + $0x4] sm:%s199] %v210
          %v212 = vld [vmem:[%s206 + $0x4] sm:%s199]
          %213 = vst [vmem:[%s207 + $0x8] sm:%s199] %v212
          %v214 = vld [vmem:[%s206 + $0x44] sm:%s199]
          %215 = vst [vmem:[%s207 + $0xc] sm:%s199] %v214
          %v216 = vld [vmem:[%s206 + $0x8] sm:%s199]
          %217 = vst [vmem:[%s207 + $0x10] sm:%s199] %v216
          %v218 = vld [vmem:[%s206 + $0x48] sm:%s199]
          %219 = vst [vmem:[%s207 + $0x14] sm:%s199] %v218
          %v220 = vld [vmem:[%s206 + $0xc] sm:%s199]
          %221 = vst [vmem:[%s207 + $0x18] sm:%s199] %v220
          %v222 = vld [vmem:[%s206 + $0x4c] sm:%s199]
          %223 = vst [vmem:[%s207 + $0x1c] sm:%s199] %v222
          %v224 = vld [vmem:[%s206 + $0x10] sm:%s199]
          %225 = vst [vmem:[%s207 + $0x20] sm:%s199] %v224
          %v226 = vld [vmem:[%s206 + $0x50] sm:%s199]
          %227 = vst [vmem:[%s207 + $0x24] sm:%s199] %v226
          %v228 = vld [vmem:[%s206 + $0x14] sm:%s199]
          %229 = vst [vmem:[%s207 + $0x28] sm:%s199] %v228
          %v230 = vld [vmem:[%s206 + $0x54] sm:%s199]
          %231 = vst [vmem:[%s207 + $0x2c] sm:%s199] %v230
          %v232 = vld [vmem:[%s206 + $0x18] sm:%s199]
          %233 = vst [vmem:[%s207 + $0x30] sm:%s199] %v232
          %v234 = vld [vmem:[%s206 + $0x58] sm:%s199]
          %235 = vst [vmem:[%s207 + $0x34] sm:%s199] %v234
          %v236 = vld [vmem:[%s206 + $0x1c] sm:%s199]
          %237 = vst [vmem:[%s207 + $0x38] sm:%s199] %v236
          %v238 = vld [vmem:[%s206 + $0x5c] sm:%s199]
          %239 = vst [vmem:[%s207 + $0x3c] sm:%s199] %v238
          %v240 = vld [vmem:[%s206 + $0x20] sm:%s199]
          %241 = vst [vmem:[%s207 + $0x40] sm:%s199] %v240
          %v242 = vld [vmem:[%s206 + $0x60] sm:%s199]
          %243 = vst [vmem:[%s207 + $0x44] sm:%s199] %v242
          %v244 = vld [vmem:[%s206 + $0x24] sm:%s199]
          %245 = vst [vmem:[%s207 + $0x48] sm:%s199] %v244
          %v246 = vld [vmem:[%s206 + $0x64] sm:%s199]
          %247 = vst [vmem:[%s207 + $0x4c] sm:%s199] %v246
          %v248 = vld [vmem:[%s206 + $0x28] sm:%s199]
          %249 = vst [vmem:[%s207 + $0x50] sm:%s199] %v248
          %v250 = vld [vmem:[%s206 + $0x68] sm:%s199]
          %251 = vst [vmem:[%s207 + $0x54] sm:%s199] %v250
          %v252 = vld [vmem:[%s206 + $0x2c] sm:%s199]
          %253 = vst [vmem:[%s207 + $0x58] sm:%s199] %v252
          %v254 = vld [vmem:[%s206 + $0x6c] sm:%s199]
          %255 = vst [vmem:[%s207 + $0x5c] sm:%s199] %v254
          %v256 = vld [vmem:[%s206 + $0x30] sm:%s199]
          %257 = vst [vmem:[%s207 + $0x60] sm:%s199] %v256
          %v258 = vld [vmem:[%s206 + $0x70] sm:%s199]
          %259 = vst [vmem:[%s207 + $0x64] sm:%s199] %v258
          %v260 = vld [vmem:[%s206 + $0x34] sm:%s199]
          %261 = vst [vmem:[%s207 + $0x68] sm:%s199] %v260
          %v262 = vld [vmem:[%s206 + $0x74] sm:%s199]
          %263 = vst [vmem:[%s207 + $0x6c] sm:%s199] %v262
          %v264 = vld [vmem:[%s206 + $0x38] sm:%s199]
          %265 = vst [vmem:[%s207 + $0x70] sm:%s199] %v264
          %v266 = vld [vmem:[%s206 + $0x78] sm:%s199]
          %267 = vst [vmem:[%s207 + $0x74] sm:%s199] %v266
          %v268 = vld [vmem:[%s206 + $0x3c] sm:%s199]
          %269 = vst [vmem:[%s207 + $0x78] sm:%s199] %v268
          %v270 = vld [vmem:[%s206 + $0x7c] sm:%s199]
          %271 = vst [vmem:[%s207 + $0x7c] sm:%s199] %v270
          %v272 = vld [vmem:[%s206 + $0x80] sm:%s199]
          %273 = vst [vmem:[%s207 + $0x80] sm:%s199] %v272
          %v274 = vld [vmem:[%s206 + $0xc0] sm:%s199]
          %275 = vst [vmem:[%s207 + $0x84] sm:%s199] %v274
          %v276 = vld [vmem:[%s206 + $0x84] sm:%s199]
          %277 = vst [vmem:[%s207 + $0x88] sm:%s199] %v276
          %v278 = vld [vmem:[%s206 + $0xc4] sm:%s199]
          %279 = vst [vmem:[%s207 + $0x8c] sm:%s199] %v278
          %v280 = vld [vmem:[%s206 + $0x88] sm:%s199]
          %281 = vst [vmem:[%s207 + $0x90] sm:%s199] %v280
          %v282 = vld [vmem:[%s206 + $0xc8] sm:%s199]
          %283 = vst [vmem:[%s207 + $0x94] sm:%s199] %v282
          %v284 = vld [vmem:[%s206 + $0x8c] sm:%s199]
          %285 = vst [vmem:[%s207 + $0x98] sm:%s199] %v284
          %v286 = vld [vmem:[%s206 + $0xcc] sm:%s199]
          %287 = vst [vmem:[%s207 + $0x9c] sm:%s199] %v286
          %v288 = vld [vmem:[%s206 + $0x90] sm:%s199]
          %289 = vst [vmem:[%s207 + $0xa0] sm:%s199] %v288
          %v290 = vld [vmem:[%s206 + $0xd0] sm:%s199]
          %291 = vst [vmem:[%s207 + $0xa4] sm:%s199] %v290
          %v292 = vld [vmem:[%s206 + $0x94] sm:%s199]
          %293 = vst [vmem:[%s207 + $0xa8] sm:%s199] %v292
          %v294 = vld [vmem:[%s206 + $0xd4] sm:%s199]
          %295 = vst [vmem:[%s207 + $0xac] sm:%s199] %v294
          %v296 = vld [vmem:[%s206 + $0x98] sm:%s199]
          %297 = vst [vmem:[%s207 + $0xb0] sm:%s199] %v296
          %v298 = vld [vmem:[%s206 + $0xd8] sm:%s199]
          %299 = vst [vmem:[%s207 + $0xb4] sm:%s199] %v298
          %v300 = vld [vmem:[%s206 + $0x9c] sm:%s199]
          %301 = vst [vmem:[%s207 + $0xb8] sm:%s199] %v300
          %v302 = vld [vmem:[%s206 + $0xdc] sm:%s199]
          %303 = vst [vmem:[%s207 + $0xbc] sm:%s199] %v302
          %v304 = vld [vmem:[%s206 + $0xa0] sm:%s199]
          %305 = vst [vmem:[%s207 + $0xc0] sm:%s199] %v304
          %v306 = vld [vmem:[%s206 + $0xe0] sm:%s199]
          %307 = vst [vmem:[%s207 + $0xc4] sm:%s199] %v306
          %v308 = vld [vmem:[%s206 + $0xa4] sm:%s199]
          %309 = vst [vmem:[%s207 + $0xc8] sm:%s199] %v308
          %v310 = vld [vmem:[%s206 + $0xe4] sm:%s199]
          %311 = vst [vmem:[%s207 + $0xcc] sm:%s199] %v310
          %v312 = vld [vmem:[%s206 + $0xa8] sm:%s199]
          %313 = vst [vmem:[%s207 + $0xd0] sm:%s199] %v312
          %v314 = vld [vmem:[%s206 + $0xe8] sm:%s199]
          %315 = vst [vmem:[%s207 + $0xd4] sm:%s199] %v314
          %v316 = vld [vmem:[%s206 + $0xac] sm:%s199]
          %317 = vst [vmem:[%s207 + $0xd8] sm:%s199] %v316
          %v318 = vld [vmem:[%s206 + $0xec] sm:%s199]
          %319 = vst [vmem:[%s207 + $0xdc] sm:%s199] %v318
          %v320 = vld [vmem:[%s206 + $0xb0] sm:%s199]
          %321 = vst [vmem:[%s207 + $0xe0] sm:%s199] %v320
          %v322 = vld [vmem:[%s206 + $0xf0] sm:%s199]
          %323 = vst [vmem:[%s207 + $0xe4] sm:%s199] %v322
          %v324 = vld [vmem:[%s206 + $0xb4] sm:%s199]
          %325 = vst [vmem:[%s207 + $0xe8] sm:%s199] %v324
          %v326 = vld [vmem:[%s206 + $0xf4] sm:%s199]
          %327 = vst [vmem:[%s207 + $0xec] sm:%s199] %v326
          %v328 = vld [vmem:[%s206 + $0xb8] sm:%s199]
          %329 = vst [vmem:[%s207 + $0xf0] sm:%s199] %v328
          %v330 = vld [vmem:[%s206 + $0xf8] sm:%s199]
          %331 = vst [vmem:[%s207 + $0xf4] sm:%s199] %v330
          %v332 = vld [vmem:[%s206 + $0xbc] sm:%s199]
          %333 = vst [vmem:[%s207 + $0xf8] sm:%s199] %v332
          %v334 = vld [vmem:[%s206 + $0xfc] sm:%s199]
          %335 = vst [vmem:[%s207 + $0xfc] sm:%s199] %v334
        $region64: #{original_forward.1} parent=51 // loop_footer
          %s205 = sadd.s32 1, %s201
        $region65: #{original_forward.1} parent=51 // loop_footer_branch
          %200 = sbr.rel target = $region61
        $region66: #{original_forward.1} parent=51 // loop_exit
          _
      $region52: #{original_forward.1} parent=36 // pred_fallthru
        _
    $region37: #{original_forward.1} parent=1 // pred_fallthru
      _
    // Predicated region
    $region38: #{original_forward.1} parent=1 // pred_check
      %p41 = pneg %p37
    $region39: #{original_forward.1} parent=1 // pred_check_branch
      %43 = sbr.rel (%p41) target = $region41
    $region40: #{original_forward.1} parent=1 // pred_region
      %s44 = sshllo.u32 0, 4
      loop: start=0, step=1, limit=1
      $region42: #{original_forward.1} parent=40 // loop_pre_header
        _
      $region43: #{original_forward.1} parent=40 // loop_header
        %s46 = sphi 0, %s50
        %p47 = scmp.ge.s32.totalorder %s46, 1
        %s51 = sphi %s8, %s8
        %s52 = sphi [#allocation2], [#allocation2]
      $region44: #{original_forward.1} parent=40 // loop_header_branch
        %49 = sbr.rel (%p47) target = $region48
      $region45: #{original_forward.1} parent=40 // loop_body
        %v53 = vld [vmem:[%s51] sm:%s44]
        %54 = vst [vmem:[%s52] sm:%s44] %v53
        %v55 = vld [vmem:[%s51 + $0x40] sm:%s44]
        %56 = vst [vmem:[%s52 + $0x4] sm:%s44] %v55
        %v57 = vld [vmem:[%s51 + $0x4] sm:%s44]
        %58 = vst [vmem:[%s52 + $0x8] sm:%s44] %v57
        %v59 = vld [vmem:[%s51 + $0x44] sm:%s44]
        %60 = vst [vmem:[%s52 + $0xc] sm:%s44] %v59
        %v61 = vld [vmem:[%s51 + $0x8] sm:%s44]
        %62 = vst [vmem:[%s52 + $0x10] sm:%s44] %v61
        %v63 = vld [vmem:[%s51 + $0x48] sm:%s44]
        %64 = vst [vmem:[%s52 + $0x14] sm:%s44] %v63
        %v65 = vld [vmem:[%s51 + $0xc] sm:%s44]
        %66 = vst [vmem:[%s52 + $0x18] sm:%s44] %v65
        %v67 = vld [vmem:[%s51 + $0x4c] sm:%s44]
        %68 = vst [vmem:[%s52 + $0x1c] sm:%s44] %v67
        %v69 = vld [vmem:[%s51 + $0x10] sm:%s44]
        %70 = vst [vmem:[%s52 + $0x20] sm:%s44] %v69
        %v71 = vld [vmem:[%s51 + $0x50] sm:%s44]
        %72 = vst [vmem:[%s52 + $0x24] sm:%s44] %v71
        %v73 = vld [vmem:[%s51 + $0x14] sm:%s44]
        %74 = vst [vmem:[%s52 + $0x28] sm:%s44] %v73
        %v75 = vld [vmem:[%s51 + $0x54] sm:%s44]
        %76 = vst [vmem:[%s52 + $0x2c] sm:%s44] %v75
        %v77 = vld [vmem:[%s51 + $0x18] sm:%s44]
        %78 = vst [vmem:[%s52 + $0x30] sm:%s44] %v77
        %v79 = vld [vmem:[%s51 + $0x58] sm:%s44]
        %80 = vst [vmem:[%s52 + $0x34] sm:%s44] %v79
        %v81 = vld [vmem:[%s51 + $0x1c] sm:%s44]
        %82 = vst [vmem:[%s52 + $0x38] sm:%s44] %v81
        %v83 = vld [vmem:[%s51 + $0x5c] sm:%s44]
        %84 = vst [vmem:[%s52 + $0x3c] sm:%s44] %v83
        %v85 = vld [vmem:[%s51 + $0x20] sm:%s44]
        %86 = vst [vmem:[%s52 + $0x40] sm:%s44] %v85
        %v87 = vld [vmem:[%s51 + $0x60] sm:%s44]
        %88 = vst [vmem:[%s52 + $0x44] sm:%s44] %v87
        %v89 = vld [vmem:[%s51 + $0x24] sm:%s44]
        %90 = vst [vmem:[%s52 + $0x48] sm:%s44] %v89
        %v91 = vld [vmem:[%s51 + $0x64] sm:%s44]
        %92 = vst [vmem:[%s52 + $0x4c] sm:%s44] %v91
        %v93 = vld [vmem:[%s51 + $0x28] sm:%s44]
        %94 = vst [vmem:[%s52 + $0x50] sm:%s44] %v93
        %v95 = vld [vmem:[%s51 + $0x68] sm:%s44]
        %96 = vst [vmem:[%s52 + $0x54] sm:%s44] %v95
        %v97 = vld [vmem:[%s51 + $0x2c] sm:%s44]
        %98 = vst [vmem:[%s52 + $0x58] sm:%s44] %v97
        %v99 = vld [vmem:[%s51 + $0x6c] sm:%s44]
        %100 = vst [vmem:[%s52 + $0x5c] sm:%s44] %v99
        %v101 = vld [vmem:[%s51 + $0x30] sm:%s44]
        %102 = vst [vmem:[%s52 + $0x60] sm:%s44] %v101
        %v103 = vld [vmem:[%s51 + $0x70] sm:%s44]
        %104 = vst [vmem:[%s52 + $0x64] sm:%s44] %v103
        %v105 = vld [vmem:[%s51 + $0x34] sm:%s44]
        %106 = vst [vmem:[%s52 + $0x68] sm:%s44] %v105
        %v107 = vld [vmem:[%s51 + $0x74] sm:%s44]
        %108 = vst [vmem:[%s52 + $0x6c] sm:%s44] %v107
        %v109 = vld [vmem:[%s51 + $0x38] sm:%s44]
        %110 = vst [vmem:[%s52 + $0x70] sm:%s44] %v109
        %v111 = vld [vmem:[%s51 + $0x78] sm:%s44]
        %112 = vst [vmem:[%s52 + $0x74] sm:%s44] %v111
        %v113 = vld [vmem:[%s51 + $0x3c] sm:%s44]
        %114 = vst [vmem:[%s52 + $0x78] sm:%s44] %v113
        %v115 = vld [vmem:[%s51 + $0x7c] sm:%s44]
        %116 = vst [vmem:[%s52 + $0x7c] sm:%s44] %v115
        %v117 = vld [vmem:[%s51 + $0x80] sm:%s44]
        %118 = vst [vmem:[%s52 + $0x80] sm:%s44] %v117
        %v119 = vld [vmem:[%s51 + $0xc0] sm:%s44]
        %120 = vst [vmem:[%s52 + $0x84] sm:%s44] %v119
        %v121 = vld [vmem:[%s51 + $0x84] sm:%s44]
        %122 = vst [vmem:[%s52 + $0x88] sm:%s44] %v121
        %v123 = vld [vmem:[%s51 + $0xc4] sm:%s44]
        %124 = vst [vmem:[%s52 + $0x8c] sm:%s44] %v123
        %v125 = vld [vmem:[%s51 + $0x88] sm:%s44]
        %126 = vst [vmem:[%s52 + $0x90] sm:%s44] %v125
        %v127 = vld [vmem:[%s51 + $0xc8] sm:%s44]
        %128 = vst [vmem:[%s52 + $0x94] sm:%s44] %v127
        %v129 = vld [vmem:[%s51 + $0x8c] sm:%s44]
        %130 = vst [vmem:[%s52 + $0x98] sm:%s44] %v129
        %v131 = vld [vmem:[%s51 + $0xcc] sm:%s44]
        %132 = vst [vmem:[%s52 + $0x9c] sm:%s44] %v131
        %v133 = vld [vmem:[%s51 + $0x90] sm:%s44]
        %134 = vst [vmem:[%s52 + $0xa0] sm:%s44] %v133
        %v135 = vld [vmem:[%s51 + $0xd0] sm:%s44]
        %136 = vst [vmem:[%s52 + $0xa4] sm:%s44] %v135
        %v137 = vld [vmem:[%s51 + $0x94] sm:%s44]
        %138 = vst [vmem:[%s52 + $0xa8] sm:%s44] %v137
        %v139 = vld [vmem:[%s51 + $0xd4] sm:%s44]
        %140 = vst [vmem:[%s52 + $0xac] sm:%s44] %v139
        %v141 = vld [vmem:[%s51 + $0x98] sm:%s44]
        %142 = vst [vmem:[%s52 + $0xb0] sm:%s44] %v141
        %v143 = vld [vmem:[%s51 + $0xd8] sm:%s44]
        %144 = vst [vmem:[%s52 + $0xb4] sm:%s44] %v143
        %v145 = vld [vmem:[%s51 + $0x9c] sm:%s44]
        %146 = vst [vmem:[%s52 + $0xb8] sm:%s44] %v145
        %v147 = vld [vmem:[%s51 + $0xdc] sm:%s44]
        %148 = vst [vmem:[%s52 + $0xbc] sm:%s44] %v147
        %v149 = vld [vmem:[%s51 + $0xa0] sm:%s44]
        %150 = vst [vmem:[%s52 + $0xc0] sm:%s44] %v149
        %v151 = vld [vmem:[%s51 + $0xe0] sm:%s44]
        %152 = vst [vmem:[%s52 + $0xc4] sm:%s44] %v151
        %v153 = vld [vmem:[%s51 + $0xa4] sm:%s44]
        %154 = vst [vmem:[%s52 + $0xc8] sm:%s44] %v153
        %v155 = vld [vmem:[%s51 + $0xe4] sm:%s44]
        %156 = vst [vmem:[%s52 + $0xcc] sm:%s44] %v155
        %v157 = vld [vmem:[%s51 + $0xa8] sm:%s44]
        %158 = vst [vmem:[%s52 + $0xd0] sm:%s44] %v157
        %v159 = vld [vmem:[%s51 + $0xe8] sm:%s44]
        %160 = vst [vmem:[%s52 + $0xd4] sm:%s44] %v159
        %v161 = vld [vmem:[%s51 + $0xac] sm:%s44]
        %162 = vst [vmem:[%s52 + $0xd8] sm:%s44] %v161
        %v163 = vld [vmem:[%s51 + $0xec] sm:%s44]
        %164 = vst [vmem:[%s52 + $0xdc] sm:%s44] %v163
        %v165 = vld [vmem:[%s51 + $0xb0] sm:%s44]
        %166 = vst [vmem:[%s52 + $0xe0] sm:%s44] %v165
        %v167 = vld [vmem:[%s51 + $0xf0] sm:%s44]
        %168 = vst [vmem:[%s52 + $0xe4] sm:%s44] %v167
        %v169 = vld [vmem:[%s51 + $0xb4] sm:%s44]
        %170 = vst [vmem:[%s52 + $0xe8] sm:%s44] %v169
        %v171 = vld [vmem:[%s51 + $0xf4] sm:%s44]
        %172 = vst [vmem:[%s52 + $0xec] sm:%s44] %v171
        %v173 = vld [vmem:[%s51 + $0xb8] sm:%s44]
        %174 = vst [vmem:[%s52 + $0xf0] sm:%s44] %v173
        %v175 = vld [vmem:[%s51 + $0xf8] sm:%s44]
        %176 = vst [vmem:[%s52 + $0xf4] sm:%s44] %v175
        %v177 = vld [vmem:[%s51 + $0xbc] sm:%s44]
        %178 = vst [vmem:[%s52 + $0xf8] sm:%s44] %v177
        %v179 = vld [vmem:[%s51 + $0xfc] sm:%s44]
        %180 = vst [vmem:[%s52 + $0xfc] sm:%s44] %v179
      $region46: #{original_forward.1} parent=40 // loop_footer
        %s50 = sadd.s32 1, %s46
      $region47: #{original_forward.1} parent=40 // loop_footer_branch
        %45 = sbr.rel target = $region43
      $region48: #{original_forward.1} parent=40 // loop_exit
        _
    $region41: #{original_forward.1} parent=1 // pred_fallthru
      _
    // Predicated region
    $region67: #{original_forward.1} parent=1 // pred_check
      _
    $region68: #{original_forward.1} parent=1 // pred_check_branch
      %338 = sbr.rel (0) target = $region70
    $region69: #{original_forward.1} parent=1 // pred_region
      %339 = vsyncadd [#allocation4], 4096
    $region70: #{original_forward.1} parent=1 // pred_fallthru
      _
    %s340 = scalar_lea.sflag [#allocation4], 1
    %p342 = scmp.lt.u32.totalorder 1024, 8
    %p343 = pneg %p342
    // Predicated region
    $region71: #{original_forward.1} parent=1 // pred_check
      _
    $region72: #{original_forward.1} parent=1 // pred_check_branch
      %345 = sbr.rel (%p342) target = $region74
    $region73: #{original_forward.1} parent=1 // pred_region
      %s360 = sand.u32 1024, 7
      %p361 = scmp.eq.s32.totalorder %s360, 0
      // Predicated region
      $region86: #{original_forward.1} parent=73 // pred_check
        %p362 = pneg %p361
      $region87: #{original_forward.1} parent=73 // pred_check_branch
        %364 = sbr.rel (%p362) target = $region89
      $region88: #{original_forward.1} parent=73 // pred_region
        loop: start=0, step=1, limit=1
        $region90: #{original_forward.1} parent=88 // loop_pre_header
          _
        $region91: #{original_forward.1} parent=88 // loop_header
          %s366 = sphi 0, %s370
          %p367 = scmp.ge.s32.totalorder %s366, 1
          %s371 = sphi %s9, %s9
          %s372 = sphi [#allocation3], [#allocation3]
        $region92: #{original_forward.1} parent=88 // loop_header_branch
          %369 = sbr.rel (%p367) target = $region96
        $region93: #{original_forward.1} parent=88 // loop_body
          %v373 = vld [vmem:[%s371] sm:$0xff]
          %374 = vst [vmem:[%s372] sm:$0xff] %v373
          %v375 = vld [vmem:[%s371 + $0x8] sm:$0xff]
          %376 = vst [vmem:[%s372 + $0x8] sm:$0xff] %v375
          %v377 = vld [vmem:[%s371 + $0x10] sm:$0xff]
          %378 = vst [vmem:[%s372 + $0x10] sm:$0xff] %v377
          %v379 = vld [vmem:[%s371 + $0x18] sm:$0xff]
          %380 = vst [vmem:[%s372 + $0x18] sm:$0xff] %v379
          %v381 = vld [vmem:[%s371 + $0x20] sm:$0xff]
          %382 = vst [vmem:[%s372 + $0x20] sm:$0xff] %v381
          %v383 = vld [vmem:[%s371 + $0x28] sm:$0xff]
          %384 = vst [vmem:[%s372 + $0x28] sm:$0xff] %v383
          %v385 = vld [vmem:[%s371 + $0x30] sm:$0xff]
          %386 = vst [vmem:[%s372 + $0x30] sm:$0xff] %v385
          %v387 = vld [vmem:[%s371 + $0x38] sm:$0xff]
          %388 = vst [vmem:[%s372 + $0x38] sm:$0xff] %v387
          %v389 = vld [vmem:[%s371 + $0x40] sm:$0xff]
          %390 = vst [vmem:[%s372 + $0x40] sm:$0xff] %v389
          %v391 = vld [vmem:[%s371 + $0x48] sm:$0xff]
          %392 = vst [vmem:[%s372 + $0x48] sm:$0xff] %v391
          %v393 = vld [vmem:[%s371 + $0x50] sm:$0xff]
          %394 = vst [vmem:[%s372 + $0x50] sm:$0xff] %v393
          %v395 = vld [vmem:[%s371 + $0x58] sm:$0xff]
          %396 = vst [vmem:[%s372 + $0x58] sm:$0xff] %v395
          %v397 = vld [vmem:[%s371 + $0x60] sm:$0xff]
          %398 = vst [vmem:[%s372 + $0x60] sm:$0xff] %v397
          %v399 = vld [vmem:[%s371 + $0x68] sm:$0xff]
          %400 = vst [vmem:[%s372 + $0x68] sm:$0xff] %v399
          %v401 = vld [vmem:[%s371 + $0x70] sm:$0xff]
          %402 = vst [vmem:[%s372 + $0x70] sm:$0xff] %v401
          %v403 = vld [vmem:[%s371 + $0x78] sm:$0xff]
          %404 = vst [vmem:[%s372 + $0x78] sm:$0xff] %v403
          %v405 = vld [vmem:[%s371 + $0x80] sm:$0xff]
          %406 = vst [vmem:[%s372 + $0x80] sm:$0xff] %v405
          %v407 = vld [vmem:[%s371 + $0x88] sm:$0xff]
          %408 = vst [vmem:[%s372 + $0x88] sm:$0xff] %v407
          %v409 = vld [vmem:[%s371 + $0x90] sm:$0xff]
          %410 = vst [vmem:[%s372 + $0x90] sm:$0xff] %v409
          %v411 = vld [vmem:[%s371 + $0x98] sm:$0xff]
          %412 = vst [vmem:[%s372 + $0x98] sm:$0xff] %v411
          %v413 = vld [vmem:[%s371 + $0xa0] sm:$0xff]
          %414 = vst [vmem:[%s372 + $0xa0] sm:$0xff] %v413
          %v415 = vld [vmem:[%s371 + $0xa8] sm:$0xff]
          %416 = vst [vmem:[%s372 + $0xa8] sm:$0xff] %v415
          %v417 = vld [vmem:[%s371 + $0xb0] sm:$0xff]
          %418 = vst [vmem:[%s372 + $0xb0] sm:$0xff] %v417
          %v419 = vld [vmem:[%s371 + $0xb8] sm:$0xff]
          %420 = vst [vmem:[%s372 + $0xb8] sm:$0xff] %v419
          %v421 = vld [vmem:[%s371 + $0xc0] sm:$0xff]
          %422 = vst [vmem:[%s372 + $0xc0] sm:$0xff] %v421
          %v423 = vld [vmem:[%s371 + $0xc8] sm:$0xff]
          %424 = vst [vmem:[%s372 + $0xc8] sm:$0xff] %v423
          %v425 = vld [vmem:[%s371 + $0xd0] sm:$0xff]
          %426 = vst [vmem:[%s372 + $0xd0] sm:$0xff] %v425
          %v427 = vld [vmem:[%s371 + $0xd8] sm:$0xff]
          %428 = vst [vmem:[%s372 + $0xd8] sm:$0xff] %v427
          %v429 = vld [vmem:[%s371 + $0xe0] sm:$0xff]
          %430 = vst [vmem:[%s372 + $0xe0] sm:$0xff] %v429
          %v431 = vld [vmem:[%s371 + $0xe8] sm:$0xff]
          %432 = vst [vmem:[%s372 + $0xe8] sm:$0xff] %v431
          %v433 = vld [vmem:[%s371 + $0xf0] sm:$0xff]
          %434 = vst [vmem:[%s372 + $0xf0] sm:$0xff] %v433
          %v435 = vld [vmem:[%s371 + $0xf8] sm:$0xff]
          %436 = vst [vmem:[%s372 + $0xf8] sm:$0xff] %v435
          %v437 = vld [vmem:[%s371 + $0x100] sm:$0xff]
          %438 = vst [vmem:[%s372 + $0x100] sm:$0xff] %v437
          %v439 = vld [vmem:[%s371 + $0x108] sm:$0xff]
          %440 = vst [vmem:[%s372 + $0x108] sm:$0xff] %v439
          %v441 = vld [vmem:[%s371 + $0x110] sm:$0xff]
          %442 = vst [vmem:[%s372 + $0x110] sm:$0xff] %v441
          %v443 = vld [vmem:[%s371 + $0x118] sm:$0xff]
          %444 = vst [vmem:[%s372 + $0x118] sm:$0xff] %v443
          %v445 = vld [vmem:[%s371 + $0x120] sm:$0xff]
          %446 = vst [vmem:[%s372 + $0x120] sm:$0xff] %v445
          %v447 = vld [vmem:[%s371 + $0x128] sm:$0xff]
          %448 = vst [vmem:[%s372 + $0x128] sm:$0xff] %v447
          %v449 = vld [vmem:[%s371 + $0x130] sm:$0xff]
          %450 = vst [vmem:[%s372 + $0x130] sm:$0xff] %v449
          %v451 = vld [vmem:[%s371 + $0x138] sm:$0xff]
          %452 = vst [vmem:[%s372 + $0x138] sm:$0xff] %v451
          %v453 = vld [vmem:[%s371 + $0x140] sm:$0xff]
          %454 = vst [vmem:[%s372 + $0x140] sm:$0xff] %v453
          %v455 = vld [vmem:[%s371 + $0x148] sm:$0xff]
          %456 = vst [vmem:[%s372 + $0x148] sm:$0xff] %v455
          %v457 = vld [vmem:[%s371 + $0x150] sm:$0xff]
          %458 = vst [vmem:[%s372 + $0x150] sm:$0xff] %v457
          %v459 = vld [vmem:[%s371 + $0x158] sm:$0xff]
          %460 = vst [vmem:[%s372 + $0x158] sm:$0xff] %v459
          %v461 = vld [vmem:[%s371 + $0x160] sm:$0xff]
          %462 = vst [vmem:[%s372 + $0x160] sm:$0xff] %v461
          %v463 = vld [vmem:[%s371 + $0x168] sm:$0xff]
          %464 = vst [vmem:[%s372 + $0x168] sm:$0xff] %v463
          %v465 = vld [vmem:[%s371 + $0x170] sm:$0xff]
          %466 = vst [vmem:[%s372 + $0x170] sm:$0xff] %v465
          %v467 = vld [vmem:[%s371 + $0x178] sm:$0xff]
          %468 = vst [vmem:[%s372 + $0x178] sm:$0xff] %v467
          %v469 = vld [vmem:[%s371 + $0x180] sm:$0xff]
          %470 = vst [vmem:[%s372 + $0x180] sm:$0xff] %v469
          %v471 = vld [vmem:[%s371 + $0x188] sm:$0xff]
          %472 = vst [vmem:[%s372 + $0x188] sm:$0xff] %v471
          %v473 = vld [vmem:[%s371 + $0x190] sm:$0xff]
          %474 = vst [vmem:[%s372 + $0x190] sm:$0xff] %v473
          %v475 = vld [vmem:[%s371 + $0x198] sm:$0xff]
          %476 = vst [vmem:[%s372 + $0x198] sm:$0xff] %v475
          %v477 = vld [vmem:[%s371 + $0x1a0] sm:$0xff]
          %478 = vst [vmem:[%s372 + $0x1a0] sm:$0xff] %v477
          %v479 = vld [vmem:[%s371 + $0x1a8] sm:$0xff]
          %480 = vst [vmem:[%s372 + $0x1a8] sm:$0xff] %v479
          %v481 = vld [vmem:[%s371 + $0x1b0] sm:$0xff]
          %482 = vst [vmem:[%s372 + $0x1b0] sm:$0xff] %v481
          %v483 = vld [vmem:[%s371 + $0x1b8] sm:$0xff]
          %484 = vst [vmem:[%s372 + $0x1b8] sm:$0xff] %v483
          %v485 = vld [vmem:[%s371 + $0x1c0] sm:$0xff]
          %486 = vst [vmem:[%s372 + $0x1c0] sm:$0xff] %v485
          %v487 = vld [vmem:[%s371 + $0x1c8] sm:$0xff]
          %488 = vst [vmem:[%s372 + $0x1c8] sm:$0xff] %v487
          %v489 = vld [vmem:[%s371 + $0x1d0] sm:$0xff]
          %490 = vst [vmem:[%s372 + $0x1d0] sm:$0xff] %v489
          %v491 = vld [vmem:[%s371 + $0x1d8] sm:$0xff]
          %492 = vst [vmem:[%s372 + $0x1d8] sm:$0xff] %v491
          %v493 = vld [vmem:[%s371 + $0x1e0] sm:$0xff]
          %494 = vst [vmem:[%s372 + $0x1e0] sm:$0xff] %v493
          %v495 = vld [vmem:[%s371 + $0x1e8] sm:$0xff]
          %496 = vst [vmem:[%s372 + $0x1e8] sm:$0xff] %v495
          %v497 = vld [vmem:[%s371 + $0x1f0] sm:$0xff]
          %498 = vst [vmem:[%s372 + $0x1f0] sm:$0xff] %v497
          %v499 = vld [vmem:[%s371 + $0x1f8] sm:$0xff]
          %500 = vst [vmem:[%s372 + $0x1f8] sm:$0xff] %v499
          %v501 = vld [vmem:[%s371 + $0x200] sm:$0xff]
          %502 = vst [vmem:[%s372 + $0x200] sm:$0xff] %v501
          %v503 = vld [vmem:[%s371 + $0x208] sm:$0xff]
          %504 = vst [vmem:[%s372 + $0x208] sm:$0xff] %v503
          %v505 = vld [vmem:[%s371 + $0x210] sm:$0xff]
          %506 = vst [vmem:[%s372 + $0x210] sm:$0xff] %v505
          %v507 = vld [vmem:[%s371 + $0x218] sm:$0xff]
          %508 = vst [vmem:[%s372 + $0x218] sm:$0xff] %v507
          %v509 = vld [vmem:[%s371 + $0x220] sm:$0xff]
          %510 = vst [vmem:[%s372 + $0x220] sm:$0xff] %v509
          %v511 = vld [vmem:[%s371 + $0x228] sm:$0xff]
          %512 = vst [vmem:[%s372 + $0x228] sm:$0xff] %v511
          %v513 = vld [vmem:[%s371 + $0x230] sm:$0xff]
          %514 = vst [vmem:[%s372 + $0x230] sm:$0xff] %v513
          %v515 = vld [vmem:[%s371 + $0x238] sm:$0xff]
          %516 = vst [vmem:[%s372 + $0x238] sm:$0xff] %v515
          %v517 = vld [vmem:[%s371 + $0x240] sm:$0xff]
          %518 = vst [vmem:[%s372 + $0x240] sm:$0xff] %v517
          %v519 = vld [vmem:[%s371 + $0x248] sm:$0xff]
          %520 = vst [vmem:[%s372 + $0x248] sm:$0xff] %v519
          %v521 = vld [vmem:[%s371 + $0x250] sm:$0xff]
          %522 = vst [vmem:[%s372 + $0x250] sm:$0xff] %v521
          %v523 = vld [vmem:[%s371 + $0x258] sm:$0xff]
          %524 = vst [vmem:[%s372 + $0x258] sm:$0xff] %v523
          %v525 = vld [vmem:[%s371 + $0x260] sm:$0xff]
          %526 = vst [vmem:[%s372 + $0x260] sm:$0xff] %v525
          %v527 = vld [vmem:[%s371 + $0x268] sm:$0xff]
          %528 = vst [vmem:[%s372 + $0x268] sm:$0xff] %v527
          %v529 = vld [vmem:[%s371 + $0x270] sm:$0xff]
          %530 = vst [vmem:[%s372 + $0x270] sm:$0xff] %v529
          %v531 = vld [vmem:[%s371 + $0x278] sm:$0xff]
          %532 = vst [vmem:[%s372 + $0x278] sm:$0xff] %v531
          %v533 = vld [vmem:[%s371 + $0x280] sm:$0xff]
          %534 = vst [vmem:[%s372 + $0x280] sm:$0xff] %v533
          %v535 = vld [vmem:[%s371 + $0x288] sm:$0xff]
          %536 = vst [vmem:[%s372 + $0x288] sm:$0xff] %v535
          %v537 = vld [vmem:[%s371 + $0x290] sm:$0xff]
          %538 = vst [vmem:[%s372 + $0x290] sm:$0xff] %v537
          %v539 = vld [vmem:[%s371 + $0x298] sm:$0xff]
          %540 = vst [vmem:[%s372 + $0x298] sm:$0xff] %v539
          %v541 = vld [vmem:[%s371 + $0x2a0] sm:$0xff]
          %542 = vst [vmem:[%s372 + $0x2a0] sm:$0xff] %v541
          %v543 = vld [vmem:[%s371 + $0x2a8] sm:$0xff]
          %544 = vst [vmem:[%s372 + $0x2a8] sm:$0xff] %v543
          %v545 = vld [vmem:[%s371 + $0x2b0] sm:$0xff]
          %546 = vst [vmem:[%s372 + $0x2b0] sm:$0xff] %v545
          %v547 = vld [vmem:[%s371 + $0x2b8] sm:$0xff]
          %548 = vst [vmem:[%s372 + $0x2b8] sm:$0xff] %v547
          %v549 = vld [vmem:[%s371 + $0x2c0] sm:$0xff]
          %550 = vst [vmem:[%s372 + $0x2c0] sm:$0xff] %v549
          %v551 = vld [vmem:[%s371 + $0x2c8] sm:$0xff]
          %552 = vst [vmem:[%s372 + $0x2c8] sm:$0xff] %v551
          %v553 = vld [vmem:[%s371 + $0x2d0] sm:$0xff]
          %554 = vst [vmem:[%s372 + $0x2d0] sm:$0xff] %v553
          %v555 = vld [vmem:[%s371 + $0x2d8] sm:$0xff]
          %556 = vst [vmem:[%s372 + $0x2d8] sm:$0xff] %v555
          %v557 = vld [vmem:[%s371 + $0x2e0] sm:$0xff]
          %558 = vst [vmem:[%s372 + $0x2e0] sm:$0xff] %v557
          %v559 = vld [vmem:[%s371 + $0x2e8] sm:$0xff]
          %560 = vst [vmem:[%s372 + $0x2e8] sm:$0xff] %v559
          %v561 = vld [vmem:[%s371 + $0x2f0] sm:$0xff]
          %562 = vst [vmem:[%s372 + $0x2f0] sm:$0xff] %v561
          %v563 = vld [vmem:[%s371 + $0x2f8] sm:$0xff]
          %564 = vst [vmem:[%s372 + $0x2f8] sm:$0xff] %v563
          %v565 = vld [vmem:[%s371 + $0x300] sm:$0xff]
          %566 = vst [vmem:[%s372 + $0x300] sm:$0xff] %v565
          %v567 = vld [vmem:[%s371 + $0x308] sm:$0xff]
          %568 = vst [vmem:[%s372 + $0x308] sm:$0xff] %v567
          %v569 = vld [vmem:[%s371 + $0x310] sm:$0xff]
          %570 = vst [vmem:[%s372 + $0x310] sm:$0xff] %v569
          %v571 = vld [vmem:[%s371 + $0x318] sm:$0xff]
          %572 = vst [vmem:[%s372 + $0x318] sm:$0xff] %v571
          %v573 = vld [vmem:[%s371 + $0x320] sm:$0xff]
          %574 = vst [vmem:[%s372 + $0x320] sm:$0xff] %v573
          %v575 = vld [vmem:[%s371 + $0x328] sm:$0xff]
          %576 = vst [vmem:[%s372 + $0x328] sm:$0xff] %v575
          %v577 = vld [vmem:[%s371 + $0x330] sm:$0xff]
          %578 = vst [vmem:[%s372 + $0x330] sm:$0xff] %v577
          %v579 = vld [vmem:[%s371 + $0x338] sm:$0xff]
          %580 = vst [vmem:[%s372 + $0x338] sm:$0xff] %v579
          %v581 = vld [vmem:[%s371 + $0x340] sm:$0xff]
          %582 = vst [vmem:[%s372 + $0x340] sm:$0xff] %v581
          %v583 = vld [vmem:[%s371 + $0x348] sm:$0xff]
          %584 = vst [vmem:[%s372 + $0x348] sm:$0xff] %v583
          %v585 = vld [vmem:[%s371 + $0x350] sm:$0xff]
          %586 = vst [vmem:[%s372 + $0x350] sm:$0xff] %v585
          %v587 = vld [vmem:[%s371 + $0x358] sm:$0xff]
          %588 = vst [vmem:[%s372 + $0x358] sm:$0xff] %v587
          %v589 = vld [vmem:[%s371 + $0x360] sm:$0xff]
          %590 = vst [vmem:[%s372 + $0x360] sm:$0xff] %v589
          %v591 = vld [vmem:[%s371 + $0x368] sm:$0xff]
          %592 = vst [vmem:[%s372 + $0x368] sm:$0xff] %v591
          %v593 = vld [vmem:[%s371 + $0x370] sm:$0xff]
          %594 = vst [vmem:[%s372 + $0x370] sm:$0xff] %v593
          %v595 = vld [vmem:[%s371 + $0x378] sm:$0xff]
          %596 = vst [vmem:[%s372 + $0x378] sm:$0xff] %v595
          %v597 = vld [vmem:[%s371 + $0x380] sm:$0xff]
          %598 = vst [vmem:[%s372 + $0x380] sm:$0xff] %v597
          %v599 = vld [vmem:[%s371 + $0x388] sm:$0xff]
          %600 = vst [vmem:[%s372 + $0x388] sm:$0xff] %v599
          %v601 = vld [vmem:[%s371 + $0x390] sm:$0xff]
          %602 = vst [vmem:[%s372 + $0x390] sm:$0xff] %v601
          %v603 = vld [vmem:[%s371 + $0x398] sm:$0xff]
          %604 = vst [vmem:[%s372 + $0x398] sm:$0xff] %v603
          %v605 = vld [vmem:[%s371 + $0x3a0] sm:$0xff]
          %606 = vst [vmem:[%s372 + $0x3a0] sm:$0xff] %v605
          %v607 = vld [vmem:[%s371 + $0x3a8] sm:$0xff]
          %608 = vst [vmem:[%s372 + $0x3a8] sm:$0xff] %v607
          %v609 = vld [vmem:[%s371 + $0x3b0] sm:$0xff]
          %610 = vst [vmem:[%s372 + $0x3b0] sm:$0xff] %v609
          %v611 = vld [vmem:[%s371 + $0x3b8] sm:$0xff]
          %612 = vst [vmem:[%s372 + $0x3b8] sm:$0xff] %v611
          %v613 = vld [vmem:[%s371 + $0x3c0] sm:$0xff]
          %614 = vst [vmem:[%s372 + $0x3c0] sm:$0xff] %v613
          %v615 = vld [vmem:[%s371 + $0x3c8] sm:$0xff]
          %616 = vst [vmem:[%s372 + $0x3c8] sm:$0xff] %v615
          %v617 = vld [vmem:[%s371 + $0x3d0] sm:$0xff]
          %618 = vst [vmem:[%s372 + $0x3d0] sm:$0xff] %v617
          %v619 = vld [vmem:[%s371 + $0x3d8] sm:$0xff]
          %620 = vst [vmem:[%s372 + $0x3d8] sm:$0xff] %v619
          %v621 = vld [vmem:[%s371 + $0x3e0] sm:$0xff]
          %622 = vst [vmem:[%s372 + $0x3e0] sm:$0xff] %v621
          %v623 = vld [vmem:[%s371 + $0x3e8] sm:$0xff]
          %624 = vst [vmem:[%s372 + $0x3e8] sm:$0xff] %v623
          %v625 = vld [vmem:[%s371 + $0x3f0] sm:$0xff]
          %626 = vst [vmem:[%s372 + $0x3f0] sm:$0xff] %v625
          %v627 = vld [vmem:[%s371 + $0x3f8] sm:$0xff]
          %628 = vst [vmem:[%s372 + $0x3f8] sm:$0xff] %v627
        $region94: #{original_forward.1} parent=88 // loop_footer
          %s370 = sadd.s32 1, %s366
        $region95: #{original_forward.1} parent=88 // loop_footer_branch
          %365 = sbr.rel target = $region91
        $region96: #{original_forward.1} parent=88 // loop_exit
          _
      $region89: #{original_forward.1} parent=73 // pred_fallthru
        _
      %p629 = pneg %p361
      // Predicated region
      $region97: #{original_forward.1} parent=73 // pred_check
        _
      $region98: #{original_forward.1} parent=73 // pred_check_branch
        %631 = sbr.rel (%p361) target = $region100
      $region99: #{original_forward.1} parent=73 // pred_region
        %s632 = sand.u32 1024, 7
      $region100: #{original_forward.1} parent=73 // pred_fallthru
        _
    $region74: #{original_forward.1} parent=1 // pred_fallthru
      _
    // Predicated region
    $region75: #{original_forward.1} parent=1 // pred_check
      %p346 = pneg %p342
    $region76: #{original_forward.1} parent=1 // pred_check_branch
      %348 = sbr.rel (%p346) target = $region78
    $region77: #{original_forward.1} parent=1 // pred_region
      %s349 = sshllo.u32 0, 1024
      loop: start=0, step=1, limit=1
      $region79: #{original_forward.1} parent=77 // loop_pre_header
        _
      $region80: #{original_forward.1} parent=77 // loop_header
        %s351 = sphi 0, %s355
        %p352 = scmp.ge.s32.totalorder %s351, 1
        %s356 = sphi %s9, %s9
        %s357 = sphi [#allocation3], [#allocation3]
      $region81: #{original_forward.1} parent=77 // loop_header_branch
        %354 = sbr.rel (%p352) target = $region85
      $region82: #{original_forward.1} parent=77 // loop_body
        %v358 = vld [vmem:[%s356] sm:%s349]
        %359 = vst [vmem:[%s357] sm:%s349] %v358
      $region83: #{original_forward.1} parent=77 // loop_footer
        %s355 = sadd.s32 1, %s351
      $region84: #{original_forward.1} parent=77 // loop_footer_branch
        %350 = sbr.rel target = $region80
      $region85: #{original_forward.1} parent=77 // loop_exit
        _
    $region78: #{original_forward.1} parent=1 // pred_fallthru
      _
    // Predicated region
    $region101: #{original_forward.1} parent=1 // pred_check
      _
    $region102: #{original_forward.1} parent=1 // pred_check_branch
      %635 = sbr.rel (0) target = $region104
    $region103: #{original_forward.1} parent=1 // pred_region
      %636 = vsyncadd %s340, 16384
    $region104: #{original_forward.1} parent=1 // pred_fallthru
      _
    %v637 = vld [vmem:[%s0] sm:$0xff]
    %v638 = vld [vmem:[%s0 + $0x8] sm:$0xff]
    %v639 = vld [vmem:[%s0 + $0x10] sm:$0xff]
    %v640 = vld [vmem:[%s0 + $0x18] sm:$0xff]
    %v641 = vld [vmem:[%s0 + $0x20] sm:$0xff]
    %v642 = vld [vmem:[%s0 + $0x28] sm:$0xff]
    %v643 = vld [vmem:[%s0 + $0x30] sm:$0xff]
    %v644 = vld [vmem:[%s0 + $0x38] sm:$0xff]
    %v645 = vld [vmem:[%s0 + $0x40] sm:$0x3]
    %v646 = vld [vmem:[%s1] sm:$0xff]
    %v647 = vld [vmem:[%s1 + $0x8] sm:$0xff]
    %v648 = vld [vmem:[%s1 + $0x10] sm:$0xff]
    %v649 = vld [vmem:[%s1 + $0x18] sm:$0xff]
    %v650 = vld [vmem:[%s1 + $0x20] sm:$0xff]
    %v651 = vld [vmem:[%s1 + $0x28] sm:$0xff]
    %v652 = vld [vmem:[%s1 + $0x30] sm:$0xff]
    %v653 = vld [vmem:[%s1 + $0x38] sm:$0xff]
    %vm654 = vcmask 523264
    %v656 = vsel %vm654, %v637, 0
    %v659 = vsel %vm654, %v638, 0
    %v662 = vsel %vm654, %v639, 0
    %v665 = vsel %vm654, %v640, 0
    %v668 = vsel %vm654, %v641, 0
    %v671 = vsel %vm654, %v642, 0
    %v674 = vsel %vm654, %v643, 0
    %v677 = vsel %vm654, %v644, 0
    %v680 = vsel %vm654, %v645, 0
    %682 = vmatprep.subr.mxu0 0.0
    %683 = vmatpush1.msra.mxu0 %v646
    %684 = vmatprep.subr.mxu0 0.0
    %685 = vmatpush1.msra.mxu0 %v647
    %686 = vmatprep.subr.mxu0 0.0
    %687 = vmatpush1.msra.mxu0 %v648
    %688 = vmatprep.subr.mxu0 0.0
    %689 = vmatpush1.msra.mxu0 %v649
    %690 = vmatprep.subr.mxu0 0.0
    %691 = vmatpush1.msra.mxu0 %v650
    %692 = vmatprep.subr.mxu0 0.0
    %693 = vmatpush1.msra.mxu0 %v651
    %694 = vmatprep.subr.mxu0 0.0
    %695 = vmatpush1.msra.mxu0 %v652
    %696 = vmatprep.subr.mxu0 0.0
    %697 = vmatpush1.msra.mxu0 %v653
    %698 = vmatprep.subr.mxu0 0.0
    %699 = vmatpush1.msra.mxu0 0.0
    %700 = vmatprep.subr.mxu0 0.0
    %701 = vmatpush1.msra.mxu0 0.0
    %702 = vmatprep.subr.mxu0 0.0
    %703 = vmatpush1.msra.mxu0 0.0
    %704 = vmatprep.subr.mxu0 0.0
    %705 = vmatpush1.msra.mxu0 0.0
    %706 = vmatprep.subr.mxu0 0.0
    %707 = vmatpush1.msra.mxu0 0.0
    %708 = vmatprep.subr.mxu0 0.0
    %709 = vmatpush1.msra.mxu0 0.0
    %710 = vmatprep.subr.mxu0 0.0
    %711 = vmatpush1.msra.mxu0 0.0
    %712 = vmatprep.subr.mxu0 0.0
    %713 = vmatpush1.msra.mxu0 0.0
    %714 = vmatprep.subr.mxu0 0.0
    %715 = vmatpush1.msra.mxu0 0.0
    %716 = vmatprep.subr.mxu0 0.0
    %717 = vmatpush1.msra.mxu0 0.0
    %718 = vmatprep.subr.mxu0 0.0
    %719 = vmatpush1.msra.mxu0 0.0
    %720 = vmatprep.subr.mxu0 0.0
    %721 = vmatpush1.msra.mxu0 0.0
    %722 = vmatprep.subr.mxu0 0.0
    %723 = vmatpush1.msra.mxu0 0.0
    %724 = vmatprep.subr.mxu0 0.0
    %725 = vmatpush1.msra.mxu0 0.0
    %726 = vmatprep.subr.mxu0 0.0
    %727 = vmatpush1.msra.mxu0 0.0
    %728 = vmatprep.subr.mxu0 0.0
    %729 = vmatpush1.msra.mxu0 0.0
    %730 = vmatprep.subr.mxu0 0.0
    %731 = vmatpush1.msra.mxu0 0.0
    %732 = vmatprep.subr.mxu0 0.0
    %733 = vmatpush1.msra.mxu0 0.0
    %734 = vmatprep.subr.mxu0 0.0
    %735 = vmatpush1.msra.mxu0 0.0
    %736 = vmatprep.subr.mxu0 0.0
    %737 = vmatpush1.msra.mxu0 0.0
    %738 = vmatprep.subr.mxu0 0.0
    %739 = vmatpush1.msra.mxu0 0.0
    %740 = vmatprep.subr.mxu0 0.0
    %741 = vmatpush1.msra.mxu0 0.0
    %742 = vmatprep.subr.mxu0 0.0
    %743 = vmatpush1.msra.mxu0 0.0
    %744 = vmatprep.subr.mxu0 0.0
    %745 = vmatpush1.msra.mxu0 0.0
    %746 = vmatprep.mubr.f32.mxu0 0.0
    %747 = vmatmul.mubr.f32.gmra.mrb[0].mxu0 %v656
    %v748 = vpop.f32.mrb[0].mxu0
    %v749 = vadd.f32 0.0, %v748
    %v750 = vpop.f32.mrb[0].mxu0
    %751 = vmatprep.mubr.f32.mxu0 0.0
    %752 = vmatmul.mubr.f32.gmra.mrb[0].mxu0 %v659
    %v753 = vpop.f32.mrb[0].mxu0
    %v754 = vadd.f32 0.0, %v753
    %v755 = vpop.f32.mrb[0].mxu0
    %756 = vmatprep.mubr.f32.mxu0 0.0
    %757 = vmatmul.mubr.f32.gmra.mrb[0].mxu0 %v662
    %v758 = vpop.f32.mrb[0].mxu0
    %v759 = vadd.f32 0.0, %v758
    %v760 = vpop.f32.mrb[0].mxu0
    %761 = vmatprep.mubr.f32.mxu0 0.0
    %762 = vmatmul.mubr.f32.gmra.mrb[0].mxu0 %v665
    %v763 = vpop.f32.mrb[0].mxu0
    %v764 = vadd.f32 0.0, %v763
    %v765 = vpop.f32.mrb[0].mxu0
    %766 = vmatprep.mubr.f32.mxu0 0.0
    %767 = vmatmul.mubr.f32.gmra.mrb[0].mxu0 %v668
    %v768 = vpop.f32.mrb[0].mxu0
    %v769 = vadd.f32 0.0, %v768
    %v770 = vpop.f32.mrb[0].mxu0
    %771 = vmatprep.mubr.f32.mxu0 0.0
    %772 = vmatmul.mubr.f32.gmra.mrb[0].mxu0 %v671
    %v773 = vpop.f32.mrb[0].mxu0
    %v774 = vadd.f32 0.0, %v773
    %v775 = vpop.f32.mrb[0].mxu0
    %776 = vmatprep.mubr.f32.mxu0 0.0
    %777 = vmatmul.mubr.f32.gmra.mrb[0].mxu0 %v674
    %v778 = vpop.f32.mrb[0].mxu0
    %v779 = vadd.f32 0.0, %v778
    %v780 = vpop.f32.mrb[0].mxu0
    %781 = vmatprep.mubr.f32.mxu0 0.0
    %782 = vmatmul.mubr.f32.gmra.mrb[0].mxu0 %v677
    %v783 = vpop.f32.mrb[0].mxu0
    %v784 = vadd.f32 0.0, %v783
    %v785 = vpop.f32.mrb[0].mxu0
    %786 = vmatprep.mubr.f32.mxu0 0.0
    %787 = vmatmul.mubr.f32.gmra.mrb[0].mxu0 %v680
    %v788 = vpop.f32.mrb[0].mxu0
    %v789 = vadd.f32 0.0, %v788
    %v790 = vpop.f32.mrb[0].mxu0
    %791 = vdwg.mxu0
    %v792 = vmul.f32 %v749, %v749
    %v793 = vmul.f32 %v754, %v754
    %v794 = vmul.f32 %v759, %v759
    %v795 = vmul.f32 %v764, %v764
    %v796 = vmul.f32 %v769, %v769
    %v797 = vmul.f32 %v774, %v774
    %v798 = vmul.f32 %v779, %v779
    %v799 = vmul.f32 %v784, %v784
    %v800 = vmul.f32 %v789, %v789
    %v801 = vld [vmem:[%s2] sm:$0xff]
    %v802 = vld [vmem:[%s2 + $0x8] sm:$0xff]
    %v803 = vld [vmem:[%s2 + $0x10] sm:$0xff]
    %v804 = vld [vmem:[%s2 + $0x18] sm:$0xff]
    %v805 = vld [vmem:[%s2 + $0x20] sm:$0xff]
    %v806 = vld [vmem:[%s2 + $0x28] sm:$0xff]
    %v807 = vld [vmem:[%s2 + $0x30] sm:$0xff]
    %v808 = vld [vmem:[%s2 + $0x38] sm:$0xff]
    %v809 = vld [vmem:[%s2 + $0x40] sm:$0xff]
    %v810 = vld [vmem:[%s2 + $0x48] sm:$0xff]
    %v811 = vld [vmem:[%s2 + $0x50] sm:$0xff]
    %v812 = vld [vmem:[%s2 + $0x58] sm:$0xff]
    %v813 = vld [vmem:[%s2 + $0x60] sm:$0xff]
    %v814 = vld [vmem:[%s2 + $0x68] sm:$0xff]
    %v815 = vld [vmem:[%s2 + $0x70] sm:$0xff]
    %v816 = vld [vmem:[%s2 + $0x78] sm:$0xff]
    %817 = vmatprep.subr.mxu0 0.0
    %818 = vmatpush1.msra.mxu0 %v801
    %819 = vmatprep.subr.mxu0 0.0
    %820 = vmatpush1.msra.mxu0 %v802
    %821 = vmatprep.subr.mxu0 0.0
    %822 = vmatpush1.msra.mxu0 %v803
    %823 = vmatprep.subr.mxu0 0.0
    %824 = vmatpush1.msra.mxu0 %v804
    %825 = vmatprep.subr.mxu0 0.0
    %826 = vmatpush1.msra.mxu0 %v805
    %827 = vmatprep.subr.mxu0 0.0
    %828 = vmatpush1.msra.mxu0 %v806
    %829 = vmatprep.subr.mxu0 0.0
    %830 = vmatpush1.msra.mxu0 %v807
    %831 = vmatprep.subr.mxu0 0.0
    %832 = vmatpush1.msra.mxu0 %v808
    %833 = vmatprep.subr.mxu0 0.0
    %834 = vmatpush1.msra.mxu0 %v809
    %835 = vmatprep.subr.mxu0 0.0
    %836 = vmatpush1.msra.mxu0 %v810
    %837 = vmatprep.subr.mxu0 0.0
    %838 = vmatpush1.msra.mxu0 %v811
    %839 = vmatprep.subr.mxu0 0.0
    %840 = vmatpush1.msra.mxu0 %v812
    %841 = vmatprep.subr.mxu0 0.0
    %842 = vmatpush1.msra.mxu0 %v813
    %843 = vmatprep.subr.mxu0 0.0
    %844 = vmatpush1.msra.mxu0 %v814
    %845 = vmatprep.subr.mxu0 0.0
    %846 = vmatpush1.msra.mxu0 %v815
    %847 = vmatprep.subr.mxu0 0.0
    %848 = vmatpush1.msra.mxu0 %v816
    %849 = vmatprep.subr.mxu0 0.0
    %850 = vmatpush1.msra.mxu0 0.0
    %851 = vmatprep.subr.mxu0 0.0
    %852 = vmatpush1.msra.mxu0 0.0
    %853 = vmatprep.subr.mxu0 0.0
    %854 = vmatpush1.msra.mxu0 0.0
    %855 = vmatprep.subr.mxu0 0.0
    %856 = vmatpush1.msra.mxu0 0.0
    %857 = vmatprep.subr.mxu0 0.0
    %858 = vmatpush1.msra.mxu0 0.0
    %859 = vmatprep.subr.mxu0 0.0
    %860 = vmatpush1.msra.mxu0 0.0
    %861 = vmatprep.subr.mxu0 0.0
    %862 = vmatpush1.msra.mxu0 0.0
    %863 = vmatprep.subr.mxu0 0.0
    %864 = vmatpush1.msra.mxu0 0.0
    %865 = vmatprep.subr.mxu0 0.0
    %866 = vmatpush1.msra.mxu0 0.0
    %867 = vmatprep.subr.mxu0 0.0
    %868 = vmatpush1.msra.mxu0 0.0
    %869 = vmatprep.subr.mxu0 0.0
    %870 = vmatpush1.msra.mxu0 0.0
    %871 = vmatprep.subr.mxu0 0.0
    %872 = vmatpush1.msra.mxu0 0.0
    %873 = vmatprep.subr.mxu0 0.0
    %874 = vmatpush1.msra.mxu0 0.0
    %875 = vmatprep.subr.mxu0 0.0
    %876 = vmatpush1.msra.mxu0 0.0
    %877 = vmatprep.subr.mxu0 0.0
    %878 = vmatpush1.msra.mxu0 0.0
    %879 = vmatprep.subr.mxu0 0.0
    %880 = vmatpush1.msra.mxu0 0.0
    %881 = vmatprep.mubr.f32.mxu0 0.0
    %882 = vmatmul.mubr.f32.gmra.mrb[0].mxu0 %v792
    %v883 = vpop.f32.mrb[0].mxu0
    %v884 = vadd.f32 1e-10, %v883
    %v885 = vpop.f32.mrb[0].mxu0
    %886 = vmatprep.mubr.f32.mxu0 0.0
    %887 = vmatmul.mubr.f32.gmra.mrb[0].mxu0 %v793
    %v888 = vpop.f32.mrb[0].mxu0
    %v889 = vadd.f32 1e-10, %v888
    %v890 = vpop.f32.mrb[0].mxu0
    %891 = vmatprep.mubr.f32.mxu0 0.0
    %892 = vmatmul.mubr.f32.gmra.mrb[0].mxu0 %v794
    %v893 = vpop.f32.mrb[0].mxu0
    %v894 = vadd.f32 1e-10, %v893
    %v895 = vpop.f32.mrb[0].mxu0
    %896 = vmatprep.mubr.f32.mxu0 0.0
    %897 = vmatmul.mubr.f32.gmra.mrb[0].mxu0 %v795
    %v898 = vpop.f32.mrb[0].mxu0
    %v899 = vadd.f32 1e-10, %v898
    %v900 = vpop.f32.mrb[0].mxu0
    %901 = vmatprep.mubr.f32.mxu0 0.0
    %902 = vmatmul.mubr.f32.gmra.mrb[0].mxu0 %v796
    %v903 = vpop.f32.mrb[0].mxu0
    %v904 = vadd.f32 1e-10, %v903
    %v905 = vpop.f32.mrb[0].mxu0
    %906 = vmatprep.mubr.f32.mxu0 0.0
    %907 = vmatmul.mubr.f32.gmra.mrb[0].mxu0 %v797
    %v908 = vpop.f32.mrb[0].mxu0
    %v909 = vadd.f32 1e-10, %v908
    %v910 = vpop.f32.mrb[0].mxu0
    %911 = vmatprep.mubr.f32.mxu0 0.0
    %912 = vmatmul.mubr.f32.gmra.mrb[0].mxu0 %v798
    %v913 = vpop.f32.mrb[0].mxu0
    %v914 = vadd.f32 1e-10, %v913
    %v915 = vpop.f32.mrb[0].mxu0
    %916 = vmatprep.mubr.f32.mxu0 0.0
    %917 = vmatmul.mubr.f32.gmra.mrb[0].mxu0 %v799
    %v918 = vpop.f32.mrb[0].mxu0
    %v919 = vadd.f32 1e-10, %v918
    %v920 = vpop.f32.mrb[0].mxu0
    %921 = vmatprep.mubr.f32.mxu0 0.0
    %922 = vmatmul.mubr.f32.gmra.mrb[0].mxu0 %v800
    %v923 = vpop.f32.mrb[0].mxu0
    %v924 = vadd.f32 1e-10, %v923
    %v925 = vpop.f32.mrb[0].mxu0
    %926 = vdwg.mxu0
    %v927 = vlog2.pop %v884
    %v928 = vmul.f32 %v927, 0.6931472
    %v929 = vlog2.pop %v889
    %v930 = vmul.f32 %v929, 0.6931472
    %v931 = vlog2.pop %v894
    %v932 = vmul.f32 %v931, 0.6931472
    %v933 = vlog2.pop %v899
    %v934 = vmul.f32 %v933, 0.6931472
    %v935 = vlog2.pop %v904
    %v936 = vmul.f32 %v935, 0.6931472
    %v937 = vlog2.pop %v909
    %v938 = vmul.f32 %v937, 0.6931472
    %v939 = vlog2.pop %v914
    %v940 = vmul.f32 %v939, 0.6931472
    %v941 = vlog2.pop %v919
    %v942 = vmul.f32 %v941, 0.6931472
    %v943 = vlog2.pop %v924
    %v944 = vmul.f32 %v943, 0.6931472
    %vm945 = vcmask 261120
    %946 = vst.msk [vmem:[%s10] sm:$0xff] %vm945, %v928
    %947 = vst.msk [vmem:[%s10 + $0x8] sm:$0xff] %vm945, %v930
    %948 = vst.msk [vmem:[%s10 + $0x10] sm:$0xff] %vm945, %v932
    %949 = vst.msk [vmem:[%s10 + $0x18] sm:$0xff] %vm945, %v934
    %950 = vst.msk [vmem:[%s10 + $0x20] sm:$0xff] %vm945, %v936
    %951 = vst.msk [vmem:[%s10 + $0x28] sm:$0xff] %vm945, %v938
    %952 = vst.msk [vmem:[%s10 + $0x30] sm:$0xff] %vm945, %v940
    %953 = vst.msk [vmem:[%s10 + $0x38] sm:$0xff] %vm945, %v942
    %vm954 = vcmask 254976
    %955 = vst.msk [vmem:[%s10 + $0x40] sm:$0x3] %vm954, %v944
    %v956 = vlaneseq
    %v957 = vshrl.u32 %v956, 7
    %v958 = vadd.s32 %v957, 8
    %v959 = vadd.s32 %v957, 16
    %v960 = vadd.s32 %v957, 24
    %v961 = vadd.s32 %v957, 32
    %v962 = vadd.s32 %v957, 40
    %v963 = vadd.s32 %v957, 48
    %v964 = vadd.s32 %v957, 56
    %v965 = vadd.s32 %v957, 64
    %vm966 = vcmp.eq.s32.totalorder %v957, 0
    %vm967 = vcmp.eq.s32.totalorder %v958, 0
    %vm968 = vcmp.eq.s32.totalorder %v959, 0
    %vm969 = vcmp.eq.s32.totalorder %v960, 0
    %vm970 = vcmp.eq.s32.totalorder %v961, 0
    %vm971 = vcmp.eq.s32.totalorder %v962, 0
    %vm972 = vcmp.eq.s32.totalorder %v963, 0
    %vm973 = vcmp.eq.s32.totalorder %v964, 0
    %vm974 = vcmp.eq.s32.totalorder %v965, 0
    %vm975 = vcmp.eq.s32.totalorder %v957, 32
    %vm976 = vcmp.eq.s32.totalorder %v958, 32
    %vm977 = vcmp.eq.s32.totalorder %v959, 32
    %vm978 = vcmp.eq.s32.totalorder %v960, 32
    %vm979 = vcmp.eq.s32.totalorder %v961, 32
    %vm980 = vcmp.eq.s32.totalorder %v962, 32
    %vm981 = vcmp.eq.s32.totalorder %v963, 32
    %vm982 = vcmp.eq.s32.totalorder %v964, 32
    %vm983 = vcmp.eq.s32.totalorder %v965, 32
    %vm984 = vcmp.eq.s32.totalorder %v957, 33
    %vm985 = vcmp.eq.s32.totalorder %v958, 33
    %vm986 = vcmp.eq.s32.totalorder %v959, 33
    %vm987 = vcmp.eq.s32.totalorder %v960, 33
    %vm988 = vcmp.eq.s32.totalorder %v961, 33
    %vm989 = vcmp.eq.s32.totalorder %v962, 33
    %vm990 = vcmp.eq.s32.totalorder %v963, 33
    %vm991 = vcmp.eq.s32.totalorder %v964, 33
    %vm992 = vcmp.eq.s32.totalorder %v965, 33
    %vm993 = vmor %vm966, %vm984
    %vm994 = vmor %vm967, %vm985
    %vm995 = vmor %vm968, %vm986
    %vm996 = vmor %vm969, %vm987
    %vm997 = vmor %vm970, %vm988
    %vm998 = vmor %vm971, %vm989
    %vm999 = vmor %vm972, %vm990
    %vm1000 = vmor %vm973, %vm991
    %vm1001 = vmor %vm974, %vm992
    %vm1002 = vcmp.eq.s32.totalorder %v957, 65
    %vm1003 = vcmp.eq.s32.totalorder %v958, 65
    %vm1004 = vcmp.eq.s32.totalorder %v959, 65
    %vm1005 = vcmp.eq.s32.totalorder %v960, 65
    %vm1006 = vcmp.eq.s32.totalorder %v961, 65
    %vm1007 = vcmp.eq.s32.totalorder %v962, 65
    %vm1008 = vcmp.eq.s32.totalorder %v963, 65
    %vm1009 = vcmp.eq.s32.totalorder %v964, 65
    %vm1010 = vcmp.eq.s32.totalorder %v965, 65
    %vm1011 = vmor %vm975, %vm1002
    %vm1012 = vmor %vm976, %vm1003
    %vm1013 = vmor %vm977, %vm1004
    %vm1014 = vmor %vm978, %vm1005
    %vm1015 = vmor %vm979, %vm1006
    %vm1016 = vmor %vm980, %vm1007
    %vm1017 = vmor %vm981, %vm1008
    %vm1018 = vmor %vm982, %vm1009
    %vm1019 = vmor %vm983, %vm1010
    %vm1029 = vcmask 1040384
    %v1030 = vrot.slane %v928, 7
    %v1031 = vrot.slane %v930, 7
    %v1032 = vsel %vm1029, %v1030, %v1031
    %v1033 = vrot.slane %v932, 7
    %v1034 = vsel %vm1029, %v1031, %v1033
    %v1035 = vrot.slane %v934, 7
    %v1036 = vsel %vm1029, %v1033, %v1035
    %v1037 = vrot.slane %v936, 7
    %v1038 = vsel %vm1029, %v1035, %v1037
    %v1039 = vrot.slane %v938, 7
    %v1040 = vsel %vm1029, %v1037, %v1039
    %v1041 = vrot.slane %v940, 7
    %v1042 = vsel %vm1029, %v1039, %v1041
    %v1043 = vrot.slane %v942, 7
    %v1044 = vsel %vm1029, %v1041, %v1043
    %v1045 = vrot.slane %v944, 7
    %v1046 = vsel %vm1029, %v1043, %v1045
    %v1056 = vsel %vm1029, 0.0, %v1030
    %v1057 = vsel %vm993, 1, 0
    %v1058 = vsel %vm994, 1, 0
    %v1059 = vsel %vm995, 1, 0
    %v1060 = vsel %vm996, 1, 0
    %v1061 = vsel %vm997, 1, 0
    %v1062 = vsel %vm998, 1, 0
    %v1063 = vsel %vm999, 1, 0
    %v1064 = vsel %vm1000, 1, 0
    %v1065 = vsel %vm1001, 1, 0
    %vm1066 = vcmp.eq.s32.totalorder %v1057, 1
    %vm1067 = vcmp.eq.s32.totalorder %v1058, 1
    %vm1068 = vcmp.eq.s32.totalorder %v1059, 1
    %vm1069 = vcmp.eq.s32.totalorder %v1060, 1
    %vm1070 = vcmp.eq.s32.totalorder %v1061, 1
    %vm1071 = vcmp.eq.s32.totalorder %v1062, 1
    %vm1072 = vcmp.eq.s32.totalorder %v1063, 1
    %vm1073 = vcmp.eq.s32.totalorder %v1064, 1
    %vm1074 = vcmp.eq.s32.totalorder %v1065, 1
    %v1075 = vsel %vm1066, 0.0, %v1056
    %v1076 = vsel %vm1067, 0.0, %v1032
    %v1077 = vsel %vm1068, 0.0, %v1034
    %v1078 = vsel %vm1069, 0.0, %v1036
    %v1079 = vsel %vm1070, 0.0, %v1038
    %v1080 = vsel %vm1071, 0.0, %v1040
    %v1081 = vsel %vm1072, 0.0, %v1042
    %v1082 = vsel %vm1073, 0.0, %v1044
    %v1083 = vsel %vm1074, 0.0, %v1046
    %vm1084 = vcmask 1046528
    %v1085 = vrot.slane %v928, 1
    %v1086 = vrot.slane %v930, 1
    %v1087 = vsel %vm1084, %v1085, %v1086
    %v1088 = vrot.slane %v932, 1
    %v1089 = vsel %vm1084, %v1086, %v1088
    %v1090 = vrot.slane %v934, 1
    %v1091 = vsel %vm1084, %v1088, %v1090
    %v1092 = vrot.slane %v936, 1
    %v1093 = vsel %vm1084, %v1090, %v1092
    %v1094 = vrot.slane %v938, 1
    %v1095 = vsel %vm1084, %v1092, %v1094
    %v1096 = vrot.slane %v940, 1
    %v1097 = vsel %vm1084, %v1094, %v1096
    %v1098 = vrot.slane %v942, 1
    %v1099 = vsel %vm1084, %v1096, %v1098
    %v1100 = vrot.slane %v944, 1
    %v1101 = vsel %vm1084, %v1098, %v1100
    %v1111 = vsel %vm1029, %v1100, 0.0
    %v1112 = vsel %vm1011, 1, 0
    %v1113 = vsel %vm1012, 1, 0
    %v1114 = vsel %vm1013, 1, 0
    %v1115 = vsel %vm1014, 1, 0
    %v1116 = vsel %vm1015, 1, 0
    %v1117 = vsel %vm1016, 1, 0
    %v1118 = vsel %vm1017, 1, 0
    %v1119 = vsel %vm1018, 1, 0
    %v1120 = vsel %vm1019, 1, 0
    %vm1121 = vcmp.eq.s32.totalorder %v1112, 1
    %vm1122 = vcmp.eq.s32.totalorder %v1113, 1
    %vm1123 = vcmp.eq.s32.totalorder %v1114, 1
    %vm1124 = vcmp.eq.s32.totalorder %v1115, 1
    %vm1125 = vcmp.eq.s32.totalorder %v1116, 1
    %vm1126 = vcmp.eq.s32.totalorder %v1117, 1
    %vm1127 = vcmp.eq.s32.totalorder %v1118, 1
    %vm1128 = vcmp.eq.s32.totalorder %v1119, 1
    %vm1129 = vcmp.eq.s32.totalorder %v1120, 1
    %v1130 = vsel %vm1121, 0.0, %v1087
    %v1131 = vsel %vm1122, 0.0, %v1089
    %v1132 = vsel %vm1123, 0.0, %v1091
    %v1133 = vsel %vm1124, 0.0, %v1093
    %v1134 = vsel %vm1125, 0.0, %v1095
    %v1135 = vsel %vm1126, 0.0, %v1097
    %v1136 = vsel %vm1127, 0.0, %v1099
    %v1137 = vsel %vm1128, 0.0, %v1101
    %v1138 = vsel %vm1129, 0.0, %v1111
    %1139 = vrot.lane.b32.xlu0 %v928, 32
    %v1140 = vpop.permute.xlu0 %1139
    %1141 = vrot.lane.b32.xlu0 %v930, 32
    %v1142 = vpop.permute.xlu0 %1141
    %1143 = vrot.lane.b32.xlu0 %v932, 32
    %v1144 = vpop.permute.xlu0 %1143
    %1145 = vrot.lane.b32.xlu0 %v934, 32
    %v1146 = vpop.permute.xlu0 %1145
    %1147 = vrot.lane.b32.xlu0 %v936, 32
    %v1148 = vpop.permute.xlu0 %1147
    %1149 = vrot.lane.b32.xlu0 %v938, 32
    %v1150 = vpop.permute.xlu0 %1149
    %1151 = vrot.lane.b32.xlu0 %v940, 32
    %v1152 = vpop.permute.xlu0 %1151
    %1153 = vrot.lane.b32.xlu0 %v942, 32
    %v1154 = vpop.permute.xlu0 %1153
    %1155 = vrot.lane.b32.xlu0 %v944, 32
    %v1156 = vpop.permute.xlu0 %1155
    %1175 = vrot.lane.b32.xlu0 %v1130, 64
    %v1176 = vpop.permute.xlu0 %1175
    %1177 = vrot.lane.b32.xlu0 %v1131, 64
    %v1178 = vpop.permute.xlu0 %1177
    %1179 = vrot.lane.b32.xlu0 %v1132, 64
    %v1180 = vpop.permute.xlu0 %1179
    %1181 = vrot.lane.b32.xlu0 %v1133, 64
    %v1182 = vpop.permute.xlu0 %1181
    %1183 = vrot.lane.b32.xlu0 %v1134, 64
    %v1184 = vpop.permute.xlu0 %1183
    %1185 = vrot.lane.b32.xlu0 %v1135, 64
    %v1186 = vpop.permute.xlu0 %1185
    %1187 = vrot.lane.b32.xlu0 %v1136, 64
    %v1188 = vpop.permute.xlu0 %1187
    %1189 = vrot.lane.b32.xlu0 %v1137, 64
    %v1190 = vpop.permute.xlu0 %1189
    %1191 = vrot.lane.b32.xlu0 %v1138, 64
    %v1192 = vpop.permute.xlu0 %1191
    %v1202 = vsel %vm945, %v1075, %v1140
    %v1203 = vsel %vm945, %v1076, %v1142
    %v1204 = vsel %vm945, %v1077, %v1144
    %v1205 = vsel %vm945, %v1078, %v1146
    %v1206 = vsel %vm945, %v1079, %v1148
    %v1207 = vsel %vm945, %v1080, %v1150
    %v1208 = vsel %vm945, %v1081, %v1152
    %v1209 = vsel %vm945, %v1082, %v1154
    %v1210 = vsel %vm945, %v1083, %v1156
    %v1211 = vsel %vm654, %v1202, %v1176
    %v1212 = vsel %vm654, %v1203, %v1178
    %v1213 = vsel %vm654, %v1204, %v1180
    %v1214 = vsel %vm654, %v1205, %v1182
    %v1215 = vsel %vm654, %v1206, %v1184
    %v1216 = vsel %vm654, %v1207, %v1186
    %v1217 = vsel %vm654, %v1208, %v1188
    %v1218 = vsel %vm654, %v1209, %v1190
    %v1219 = vsel %vm654, %v1210, %v1192
    %v1220 = vpack.c.bf16 %v1212, %v1211
    %v1221 = vpack.c.bf16 %v1214, %v1213
    %v1222 = vpack.c.bf16 %v1216, %v1215
    %v1223 = vpack.c.bf16 %v1218, %v1217
    %v1224 = vpack.c.bf16 %v1219, %v1219
    %v1225 = vld [vmem:[%s3] sm:$0xff]
    %v1226 = vld [vmem:[%s3 + $0x8] sm:$0xff]
    %v1227 = vld [vmem:[%s3 + $0x10] sm:$0xff]
    %v1228 = vld [vmem:[%s3 + $0x18] sm:$0xff]
    %v1229 = vld [vmem:[%s3 + $0x20] sm:$0xff]
    %v1230 = vld [vmem:[%s3 + $0x28] sm:$0xff]
    %v1231 = vld [vmem:[%s3 + $0x30] sm:$0xff]
    %v1232 = vld [vmem:[%s3 + $0x38] sm:$0xff]
    %v1233 = vld [vmem:[%s3 + $0x40] sm:$0xff]
    %v1234 = vld [vmem:[%s3 + $0x48] sm:$0xff]
    %v1235 = vld [vmem:[%s3 + $0x50] sm:$0xff]
    %v1236 = vld [vmem:[%s3 + $0x58] sm:$0xff]
    %v1237 = vld [vmem:[%s3 + $0x60] sm:$0xff]
    %v1238 = vld [vmem:[%s3 + $0x68] sm:$0xff]
    %v1239 = vld [vmem:[%s3 + $0x70] sm:$0xff]
    %v1240 = vld [vmem:[%s3 + $0x78] sm:$0xff]
    %v1241 = vld [vmem:[%s3 + $0x80] sm:$0xff]
    %v1242 = vld [vmem:[%s3 + $0x88] sm:$0xff]
    %v1243 = vld [vmem:[%s3 + $0x90] sm:$0xff]
    %v1244 = vld [vmem:[%s3 + $0x98] sm:$0xff]
    %v1245 = vld [vmem:[%s3 + $0xa0] sm:$0xff]
    %v1246 = vld [vmem:[%s3 + $0xa8] sm:$0xff]
    %v1247 = vld [vmem:[%s3 + $0xb0] sm:$0xff]
    %v1248 = vld [vmem:[%s3 + $0xb8] sm:$0xff]
    %v1249 = vld [vmem:[%s3 + $0xc0] sm:$0xff]
    %v1250 = vld [vmem:[%s3 + $0xc8] sm:$0xff]
    %v1251 = vld [vmem:[%s3 + $0xd0] sm:$0xff]
    %v1252 = vld [vmem:[%s3 + $0xd8] sm:$0xff]
    %v1253 = vld [vmem:[%s3 + $0xe0] sm:$0xff]
    %v1254 = vld [vmem:[%s3 + $0xe8] sm:$0xff]
    %v1255 = vld [vmem:[%s3 + $0xf0] sm:$0xff]
    %v1256 = vld [vmem:[%s3 + $0xf8] sm:$0xff]
    %v1257 = vld [vmem:[%s3 + $0x100] sm:$0xff]
    %v1258 = vld [vmem:[%s3 + $0x108] sm:$0xff]
    %v1259 = vld [vmem:[%s3 + $0x110] sm:$0xff]
    %v1260 = vld [vmem:[%s3 + $0x118] sm:$0xff]
    %v1261 = vld [vmem:[%s3 + $0x120] sm:$0xff]
    %v1262 = vld [vmem:[%s3 + $0x128] sm:$0xff]
    %v1263 = vld [vmem:[%s3 + $0x130] sm:$0xff]
    %v1264 = vld [vmem:[%s3 + $0x138] sm:$0xff]
    %v1265 = vld [vmem:[%s3 + $0x140] sm:$0xff]
    %v1266 = vld [vmem:[%s3 + $0x148] sm:$0xff]
    %v1267 = vld [vmem:[%s3 + $0x150] sm:$0xff]
    %v1268 = vld [vmem:[%s3 + $0x158] sm:$0xff]
    %v1269 = vld [vmem:[%s3 + $0x160] sm:$0xff]
    %v1270 = vld [vmem:[%s3 + $0x168] sm:$0xff]
    %v1271 = vld [vmem:[%s3 + $0x170] sm:$0xff]
    %v1272 = vld [vmem:[%s3 + $0x178] sm:$0xff]
    %v1273 = vld [vmem:[%s4] sm:$0xff]
    %v1275 = vlaneseq
    %v1276 = vshrl.u32 %v1275, 7
    %v1277 = vsub.s32 0, %v1276
    %v1278 = vrot.slane %v1273, %v1277
    %v1279 = vlaneseq
    %v1280 = vshrl.u32 %v1279, 7
    %v1281 = vsub.s32 1, %v1280
    %v1282 = vrot.slane %v1273, %v1281
    %v1283 = vlaneseq
    %v1284 = vshrl.u32 %v1283, 7
    %v1285 = vsub.s32 2, %v1284
    %v1286 = vrot.slane %v1273, %v1285
    %v1287 = vlaneseq
    %v1288 = vshrl.u32 %v1287, 7
    %v1289 = vsub.s32 3, %v1288
    %v1290 = vrot.slane %v1273, %v1289
    %v1291 = vlaneseq
    %v1292 = vshrl.u32 %v1291, 7
    %v1293 = vsub.s32 4, %v1292
    %v1294 = vrot.slane %v1273, %v1293
    %v1295 = vlaneseq
    %v1296 = vshrl.u32 %v1295, 7
    %v1297 = vsub.s32 5, %v1296
    %v1298 = vrot.slane %v1273, %v1297
    %v1299 = vlaneseq
    %v1300 = vshrl.u32 %v1299, 7
    %v1301 = vsub.s32 6, %v1300
    %v1302 = vrot.slane %v1273, %v1301
    %v1303 = vlaneseq
    %v1304 = vshrl.u32 %v1303, 7
    %v1305 = vsub.s32 7, %v1304
    %v1306 = vrot.slane %v1273, %v1305
    %v1363 = vunpack.c.l.b16 %v1225
    %v1364 = vunpack.c.h.b16 %v1225
    %v1365 = vunpack.c.l.b16 %v1226
    %v1366 = vunpack.c.h.b16 %v1226
    %v1367 = vunpack.c.l.b16 %v1227
    %v1368 = vunpack.c.h.b16 %v1227
    %v1369 = vunpack.c.l.b16 %v1228
    %v1370 = vunpack.c.h.b16 %v1228
    %v1371 = vunpack.c.l.b16 %v1229
    %v1372 = vunpack.c.h.b16 %v1229
    %v1373 = vunpack.c.l.b16 %v1230
    %v1374 = vunpack.c.h.b16 %v1230
    %v1375 = vunpack.c.l.b16 %v1231
    %v1376 = vunpack.c.h.b16 %v1231
    %v1377 = vunpack.c.l.b16 %v1232
    %v1378 = vunpack.c.h.b16 %v1232
    %v1379 = vunpack.c.l.b16 %v1233
    %v1380 = vunpack.c.h.b16 %v1233
    %v1381 = vunpack.c.l.b16 %v1234
    %v1382 = vunpack.c.h.b16 %v1234
    %v1383 = vunpack.c.l.b16 %v1235
    %v1384 = vunpack.c.h.b16 %v1235
    %v1385 = vunpack.c.l.b16 %v1236
    %v1386 = vunpack.c.h.b16 %v1236
    %v1387 = vunpack.c.l.b16 %v1237
    %v1388 = vunpack.c.h.b16 %v1237
    %v1389 = vunpack.c.l.b16 %v1238
    %v1390 = vunpack.c.h.b16 %v1238
    %v1391 = vunpack.c.l.b16 %v1239
    %v1392 = vunpack.c.h.b16 %v1239
    %v1393 = vunpack.c.l.b16 %v1240
    %v1394 = vunpack.c.h.b16 %v1240
    %v1395 = vunpack.c.l.b16 %v1241
    %v1396 = vunpack.c.h.b16 %v1241
    %v1397 = vunpack.c.l.b16 %v1242
    %v1398 = vunpack.c.h.b16 %v1242
    %v1399 = vunpack.c.l.b16 %v1243
    %v1400 = vunpack.c.h.b16 %v1243
    %v1401 = vunpack.c.l.b16 %v1244
    %v1402 = vunpack.c.h.b16 %v1244
    %v1403 = vunpack.c.l.b16 %v1245
    %v1404 = vunpack.c.h.b16 %v1245
    %v1405 = vunpack.c.l.b16 %v1246
    %v1406 = vunpack.c.h.b16 %v1246
    %v1407 = vunpack.c.l.b16 %v1247
    %v1408 = vunpack.c.h.b16 %v1247
    %v1409 = vunpack.c.l.b16 %v1248
    %v1410 = vunpack.c.h.b16 %v1248
    %v1411 = vunpack.c.l.b16 %v1249
    %v1412 = vunpack.c.h.b16 %v1249
    %v1413 = vunpack.c.l.b16 %v1250
    %v1414 = vunpack.c.h.b16 %v1250
    %v1415 = vunpack.c.l.b16 %v1251
    %v1416 = vunpack.c.h.b16 %v1251
    %v1417 = vunpack.c.l.b16 %v1252
    %v1418 = vunpack.c.h.b16 %v1252
    %v1419 = vunpack.c.l.b16 %v1253
    %v1420 = vunpack.c.h.b16 %v1253
    %v1421 = vunpack.c.l.b16 %v1254
    %v1422 = vunpack.c.h.b16 %v1254
    %v1423 = vunpack.c.l.b16 %v1255
    %v1424 = vunpack.c.h.b16 %v1255
    %v1425 = vunpack.c.l.b16 %v1256
    %v1426 = vunpack.c.h.b16 %v1256
    %v1427 = vunpack.c.l.b16 %v1257
    %v1428 = vunpack.c.h.b16 %v1257
    %v1429 = vunpack.c.l.b16 %v1258
    %v1430 = vunpack.c.h.b16 %v1258
    %v1431 = vunpack.c.l.b16 %v1259
    %v1432 = vunpack.c.h.b16 %v1259
    %v1433 = vunpack.c.l.b16 %v1260
    %v1434 = vunpack.c.h.b16 %v1260
    %v1435 = vunpack.c.l.b16 %v1261
    %v1436 = vunpack.c.h.b16 %v1261
    %v1437 = vunpack.c.l.b16 %v1262
    %v1438 = vunpack.c.h.b16 %v1262
    %v1439 = vunpack.c.l.b16 %v1263
    %v1440 = vunpack.c.h.b16 %v1263
    %v1441 = vunpack.c.l.b16 %v1264
    %v1442 = vunpack.c.h.b16 %v1264
    %v1443 = vunpack.c.l.b16 %v1265
    %v1444 = vunpack.c.h.b16 %v1265
    %v1445 = vunpack.c.l.b16 %v1266
    %v1446 = vunpack.c.h.b16 %v1266
    %v1447 = vunpack.c.l.b16 %v1267
    %v1448 = vunpack.c.h.b16 %v1267
    %v1449 = vunpack.c.l.b16 %v1268
    %v1450 = vunpack.c.h.b16 %v1268
    %v1451 = vunpack.c.l.b16 %v1269
    %v1452 = vunpack.c.h.b16 %v1269
    %v1453 = vunpack.c.l.b16 %v1270
    %v1454 = vunpack.c.h.b16 %v1270
    %v1455 = vunpack.c.l.b16 %v1271
    %v1456 = vunpack.c.h.b16 %v1271
    %v1457 = vunpack.c.l.b16 %v1272
    %v1458 = vunpack.c.h.b16 %v1272
    %v1459 = vpack.c.b16 %v1371, %v1363
    %v1460 = vpack.c.b16 %v1372, %v1364
    %v1461 = vpack.c.b16 %v1373, %v1365
    %v1462 = vpack.c.b16 %v1374, %v1366
    %v1463 = vpack.c.b16 %v1375, %v1367
    %v1464 = vpack.c.b16 %v1376, %v1368
    %v1465 = vpack.c.b16 %v1377, %v1369
    %v1466 = vpack.c.b16 %v1378, %v1370
    %v1467 = vpack.c.b16 %v1387, %v1379
    %v1468 = vpack.c.b16 %v1388, %v1380
    %v1469 = vpack.c.b16 %v1389, %v1381
    %v1470 = vpack.c.b16 %v1390, %v1382
    %v1471 = vpack.c.b16 %v1391, %v1383
    %v1472 = vpack.c.b16 %v1392, %v1384
    %v1473 = vpack.c.b16 %v1393, %v1385
    %v1474 = vpack.c.b16 %v1394, %v1386
    %v1475 = vpack.c.b16 %v1403, %v1395
    %v1476 = vpack.c.b16 %v1404, %v1396
    %v1477 = vpack.c.b16 %v1405, %v1397
    %v1478 = vpack.c.b16 %v1406, %v1398
    %v1479 = vpack.c.b16 %v1407, %v1399
    %v1480 = vpack.c.b16 %v1408, %v1400
    %v1481 = vpack.c.b16 %v1409, %v1401
    %v1482 = vpack.c.b16 %v1410, %v1402
    %v1483 = vpack.c.b16 %v1419, %v1411
    %v1484 = vpack.c.b16 %v1420, %v1412
    %v1485 = vpack.c.b16 %v1421, %v1413
    %v1486 = vpack.c.b16 %v1422, %v1414
    %v1487 = vpack.c.b16 %v1423, %v1415
    %v1488 = vpack.c.b16 %v1424, %v1416
    %v1489 = vpack.c.b16 %v1425, %v1417
    %v1490 = vpack.c.b16 %v1426, %v1418
    %v1491 = vpack.c.b16 %v1435, %v1427
    %v1492 = vpack.c.b16 %v1436, %v1428
    %v1493 = vpack.c.b16 %v1437, %v1429
    %v1494 = vpack.c.b16 %v1438, %v1430
    %v1495 = vpack.c.b16 %v1439, %v1431
    %v1496 = vpack.c.b16 %v1440, %v1432
    %v1497 = vpack.c.b16 %v1441, %v1433
    %v1498 = vpack.c.b16 %v1442, %v1434
    %v1499 = vpack.c.b16 %v1451, %v1443
    %v1500 = vpack.c.b16 %v1452, %v1444
    %v1501 = vpack.c.b16 %v1453, %v1445
    %v1502 = vpack.c.b16 %v1454, %v1446
    %v1503 = vpack.c.b16 %v1455, %v1447
    %v1504 = vpack.c.b16 %v1456, %v1448
    %v1505 = vpack.c.b16 %v1457, %v1449
    %v1506 = vpack.c.b16 %v1458, %v1450
    %vm1555 = vcmask 785408
    %v1557 = vsel %vm1555, %v1220, 0
    %v1560 = vsel %vm1555, %v1221, 0
    %v1563 = vsel %vm1555, %v1222, 0
    %v1566 = vsel %vm1555, %v1223, 0
    %v1569 = vsel %vm1555, %v1224, 0
    %1571 = vmatprep.subr.bf16.mxu0 %v1460
    %1572 = vmatpush1.bf16.msra.mxu0 %v1459
    %1573 = vmatprep.subr.bf16.mxu0 %v1468
    %1574 = vmatpush1.bf16.msra.mxu0 %v1467
    %1575 = vmatprep.subr.bf16.mxu0 %v1476
    %1576 = vmatpush1.bf16.msra.mxu0 %v1475
    %1577 = vmatprep.subr.bf16.mxu0 %v1484
    %1578 = vmatpush1.bf16.msra.mxu0 %v1483
    %1579 = vmatprep.subr.bf16.mxu0 %v1492
    %1580 = vmatpush1.bf16.msra.mxu0 %v1491
    %1581 = vmatprep.subr.bf16.mxu0 %v1500
    %1582 = vmatpush1.bf16.msra.mxu0 %v1499
    %1583 = vmatprep.subr.bf16.mxu0 0
    %1584 = vmatpush1.bf16.msra.mxu0 0
    %1585 = vmatprep.subr.bf16.mxu0 0
    %1586 = vmatpush1.bf16.msra.mxu0 0
    %1587 = vmatprep.subr.bf16.mxu0 0
    %1588 = vmatpush1.bf16.msra.mxu0 0
    %1589 = vmatprep.subr.bf16.mxu0 0
    %1590 = vmatpush1.bf16.msra.mxu0 0
    %1591 = vmatprep.subr.bf16.mxu0 0
    %1592 = vmatpush1.bf16.msra.mxu0 0
    %1593 = vmatprep.subr.bf16.mxu0 0
    %1594 = vmatpush1.bf16.msra.mxu0 0
    %1595 = vmatprep.subr.bf16.mxu0 0
    %1596 = vmatpush1.bf16.msra.mxu0 0
    %1597 = vmatprep.subr.bf16.mxu0 0
    %1598 = vmatpush1.bf16.msra.mxu0 0
    %1599 = vmatprep.subr.bf16.mxu0 0
    %1600 = vmatpush1.bf16.msra.mxu0 0
    %1601 = vmatprep.subr.bf16.mxu0 0
    %1602 = vmatpush1.bf16.msra.mxu0 0
    %1603 = vmatprep.mubr.bf16.mxu0 0
    %1604 = vmatmul.mubr.bf16.gmra.mrb[0].mxu0 %v1557
    %v1605 = vpop.f32.mrb[0].mxu0
    %v1606 = vadd.f32 %v1278, %v1605
    %v1607 = vpop.f32.mrb[0].mxu0
    %v1608 = vadd.f32 %v1282, %v1607
    %v1609 = vpop.f32.mrb[0].mxu0
    %v1610 = vadd.f32 %v1278, %v1609
    %v1611 = vpop.f32.mrb[0].mxu0
    %v1612 = vadd.f32 %v1282, %v1611
    %1613 = vmatprep.mubr.bf16.mxu0 0
    %1614 = vmatmul.mubr.bf16.gmra.mrb[0].mxu0 %v1560
    %v1615 = vpop.f32.mrb[0].mxu0
    %v1616 = vadd.f32 %v1278, %v1615
    %v1617 = vpop.f32.mrb[0].mxu0
    %v1618 = vadd.f32 %v1282, %v1617
    %v1619 = vpop.f32.mrb[0].mxu0
    %v1620 = vadd.f32 %v1278, %v1619
    %v1621 = vpop.f32.mrb[0].mxu0
    %v1622 = vadd.f32 %v1282, %v1621
    %1623 = vmatprep.mubr.bf16.mxu0 0
    %1624 = vmatmul.mubr.bf16.gmra.mrb[0].mxu0 %v1563
    %v1625 = vpop.f32.mrb[0].mxu0
    %v1626 = vadd.f32 %v1278, %v1625
    %v1627 = vpop.f32.mrb[0].mxu0
    %v1628 = vadd.f32 %v1282, %v1627
    %v1629 = vpop.f32.mrb[0].mxu0
    %v1630 = vadd.f32 %v1278, %v1629
    %v1631 = vpop.f32.mrb[0].mxu0
    %v1632 = vadd.f32 %v1282, %v1631
    %1633 = vmatprep.mubr.bf16.mxu0 0
    %1634 = vmatmul.mubr.bf16.gmra.mrb[0].mxu0 %v1566
    %v1635 = vpop.f32.mrb[0].mxu0
    %v1636 = vadd.f32 %v1278, %v1635
    %v1637 = vpop.f32.mrb[0].mxu0
    %v1638 = vadd.f32 %v1282, %v1637
    %v1639 = vpop.f32.mrb[0].mxu0
    %v1640 = vadd.f32 %v1278, %v1639
    %v1641 = vpop.f32.mrb[0].mxu0
    %v1642 = vadd.f32 %v1282, %v1641
    %1643 = vmatprep.mubr.bf16.mxu0 0
    %1644 = vmatmul.mubr.bf16.gmra.mrb[0].mxu0 %v1569
    %v1645 = vpop.f32.mrb[0].mxu0
    %v1646 = vadd.f32 %v1278, %v1645
    %v1647 = vpop.f32.mrb[0].mxu0
    %v1648 = vadd.f32 %v1282, %v1647
    %v1649 = vpop.f32.mrb[0].mxu0
    %v1650 = vpop.f32.mrb[0].mxu0
    %1651 = vdwg.mxu0
    %1652 = vmatprep.subr.bf16.mxu0 %v1462
    %1653 = vmatpush1.bf16.msra.mxu0 %v1461
    %1654 = vmatprep.subr.bf16.mxu0 %v1470
    %1655 = vmatpush1.bf16.msra.mxu0 %v1469
    %1656 = vmatprep.subr.bf16.mxu0 %v1478
    %1657 = vmatpush1.bf16.msra.mxu0 %v1477
    %1658 = vmatprep.subr.bf16.mxu0 %v1486
    %1659 = vmatpush1.bf16.msra.mxu0 %v1485
    %1660 = vmatprep.subr.bf16.mxu0 %v1494
    %1661 = vmatpush1.bf16.msra.mxu0 %v1493
    %1662 = vmatprep.subr.bf16.mxu0 %v1502
    %1663 = vmatpush1.bf16.msra.mxu0 %v1501
    %1664 = vmatprep.subr.bf16.mxu0 0
    %1665 = vmatpush1.bf16.msra.mxu0 0
    %1666 = vmatprep.subr.bf16.mxu0 0
    %1667 = vmatpush1.bf16.msra.mxu0 0
    %1668 = vmatprep.subr.bf16.mxu0 0
    %1669 = vmatpush1.bf16.msra.mxu0 0
    %1670 = vmatprep.subr.bf16.mxu0 0
    %1671 = vmatpush1.bf16.msra.mxu0 0
    %1672 = vmatprep.subr.bf16.mxu0 0
    %1673 = vmatpush1.bf16.msra.mxu0 0
    %1674 = vmatprep.subr.bf16.mxu0 0
    %1675 = vmatpush1.bf16.msra.mxu0 0
    %1676 = vmatprep.subr.bf16.mxu0 0
    %1677 = vmatpush1.bf16.msra.mxu0 0
    %1678 = vmatprep.subr.bf16.mxu0 0
    %1679 = vmatpush1.bf16.msra.mxu0 0
    %1680 = vmatprep.subr.bf16.mxu0 0
    %1681 = vmatpush1.bf16.msra.mxu0 0
    %1682 = vmatprep.subr.bf16.mxu0 0
    %1683 = vmatpush1.bf16.msra.mxu0 0
    %1684 = vmatprep.mubr.bf16.mxu0 0
    %1685 = vmatmul.mubr.bf16.gmra.mrb[0].mxu0 %v1557
    %v1686 = vpop.f32.mrb[0].mxu0
    %v1687 = vadd.f32 %v1286, %v1686
    %v1688 = vpop.f32.mrb[0].mxu0
    %v1689 = vadd.f32 %v1290, %v1688
    %v1690 = vpop.f32.mrb[0].mxu0
    %v1691 = vadd.f32 %v1286, %v1690
    %v1692 = vpop.f32.mrb[0].mxu0
    %v1693 = vadd.f32 %v1290, %v1692
    %1694 = vmatprep.mubr.bf16.mxu0 0
    %1695 = vmatmul.mubr.bf16.gmra.mrb[0].mxu0 %v1560
    %v1696 = vpop.f32.mrb[0].mxu0
    %v1697 = vadd.f32 %v1286, %v1696
    %v1698 = vpop.f32.mrb[0].mxu0
    %v1699 = vadd.f32 %v1290, %v1698
    %v1700 = vpop.f32.mrb[0].mxu0
    %v1701 = vadd.f32 %v1286, %v1700
    %v1702 = vpop.f32.mrb[0].mxu0
    %v1703 = vadd.f32 %v1290, %v1702
    %1704 = vmatprep.mubr.bf16.mxu0 0
    %1705 = vmatmul.mubr.bf16.gmra.mrb[0].mxu0 %v1563
    %v1706 = vpop.f32.mrb[0].mxu0
    %v1707 = vadd.f32 %v1286, %v1706
    %v1708 = vpop.f32.mrb[0].mxu0
    %v1709 = vadd.f32 %v1290, %v1708
    %v1710 = vpop.f32.mrb[0].mxu0
    %v1711 = vadd.f32 %v1286, %v1710
    %v1712 = vpop.f32.mrb[0].mxu0
    %v1713 = vadd.f32 %v1290, %v1712
    %1714 = vmatprep.mubr.bf16.mxu0 0
    %1715 = vmatmul.mubr.bf16.gmra.mrb[0].mxu0 %v1566
    %v1716 = vpop.f32.mrb[0].mxu0
    %v1717 = vadd.f32 %v1286, %v1716
    %v1718 = vpop.f32.mrb[0].mxu0
    %v1719 = vadd.f32 %v1290, %v1718
    %v1720 = vpop.f32.mrb[0].mxu0
    %v1721 = vadd.f32 %v1286, %v1720
    %v1722 = vpop.f32.mrb[0].mxu0
    %v1723 = vadd.f32 %v1290, %v1722
    %1724 = vmatprep.mubr.bf16.mxu0 0
    %1725 = vmatmul.mubr.bf16.gmra.mrb[0].mxu0 %v1569
    %v1726 = vpop.f32.mrb[0].mxu0
    %v1727 = vadd.f32 %v1286, %v1726
    %v1728 = vpop.f32.mrb[0].mxu0
    %v1729 = vadd.f32 %v1290, %v1728
    %v1730 = vpop.f32.mrb[0].mxu0
    %v1731 = vpop.f32.mrb[0].mxu0
    %1732 = vdwg.mxu0
    %1733 = vmatprep.subr.bf16.mxu0 %v1464
    %1734 = vmatpush1.bf16.msra.mxu0 %v1463
    %1735 = vmatprep.subr.bf16.mxu0 %v1472
    %1736 = vmatpush1.bf16.msra.mxu0 %v1471
    %1737 = vmatprep.subr.bf16.mxu0 %v1480
    %1738 = vmatpush1.bf16.msra.mxu0 %v1479
    %1739 = vmatprep.subr.bf16.mxu0 %v1488
    %1740 = vmatpush1.bf16.msra.mxu0 %v1487
    %1741 = vmatprep.subr.bf16.mxu0 %v1496
    %1742 = vmatpush1.bf16.msra.mxu0 %v1495
    %1743 = vmatprep.subr.bf16.mxu0 %v1504
    %1744 = vmatpush1.bf16.msra.mxu0 %v1503
    %1745 = vmatprep.subr.bf16.mxu0 0
    %1746 = vmatpush1.bf16.msra.mxu0 0
    %1747 = vmatprep.subr.bf16.mxu0 0
    %1748 = vmatpush1.bf16.msra.mxu0 0
    %1749 = vmatprep.subr.bf16.mxu0 0
    %1750 = vmatpush1.bf16.msra.mxu0 0
    %1751 = vmatprep.subr.bf16.mxu0 0
    %1752 = vmatpush1.bf16.msra.mxu0 0
    %1753 = vmatprep.subr.bf16.mxu0 0
    %1754 = vmatpush1.bf16.msra.mxu0 0
    %1755 = vmatprep.subr.bf16.mxu0 0
    %1756 = vmatpush1.bf16.msra.mxu0 0
    %1757 = vmatprep.subr.bf16.mxu0 0
    %1758 = vmatpush1.bf16.msra.mxu0 0
    %1759 = vmatprep.subr.bf16.mxu0 0
    %1760 = vmatpush1.bf16.msra.mxu0 0
    %1761 = vmatprep.subr.bf16.mxu0 0
    %1762 = vmatpush1.bf16.msra.mxu0 0
    %1763 = vmatprep.subr.bf16.mxu0 0
    %1764 = vmatpush1.bf16.msra.mxu0 0
    %1765 = vmatprep.mubr.bf16.mxu0 0
    %1766 = vmatmul.mubr.bf16.gmra.mrb[0].mxu0 %v1557
    %v1767 = vpop.f32.mrb[0].mxu0
    %v1768 = vadd.f32 %v1294, %v1767
    %v1769 = vpop.f32.mrb[0].mxu0
    %v1770 = vadd.f32 %v1298, %v1769
    %v1771 = vpop.f32.mrb[0].mxu0
    %v1772 = vadd.f32 %v1294, %v1771
    %v1773 = vpop.f32.mrb[0].mxu0
    %v1774 = vadd.f32 %v1298, %v1773
    %1775 = vmatprep.mubr.bf16.mxu0 0
    %1776 = vmatmul.mubr.bf16.gmra.mrb[0].mxu0 %v1560
    %v1777 = vpop.f32.mrb[0].mxu0
    %v1778 = vadd.f32 %v1294, %v1777
    %v1779 = vpop.f32.mrb[0].mxu0
    %v1780 = vadd.f32 %v1298, %v1779
    %v1781 = vpop.f32.mrb[0].mxu0
    %v1782 = vadd.f32 %v1294, %v1781
    %v1783 = vpop.f32.mrb[0].mxu0
    %v1784 = vadd.f32 %v1298, %v1783
    %1785 = vmatprep.mubr.bf16.mxu0 0
    %1786 = vmatmul.mubr.bf16.gmra.mrb[0].mxu0 %v1563
    %v1787 = vpop.f32.mrb[0].mxu0
    %v1788 = vadd.f32 %v1294, %v1787
    %v1789 = vpop.f32.mrb[0].mxu0
    %v1790 = vadd.f32 %v1298, %v1789
    %v1791 = vpop.f32.mrb[0].mxu0
    %v1792 = vadd.f32 %v1294, %v1791
    %v1793 = vpop.f32.mrb[0].mxu0
    %v1794 = vadd.f32 %v1298, %v1793
    %1795 = vmatprep.mubr.bf16.mxu0 0
    %1796 = vmatmul.mubr.bf16.gmra.mrb[0].mxu0 %v1566
    %v1797 = vpop.f32.mrb[0].mxu0
    %v1798 = vadd.f32 %v1294, %v1797
    %v1799 = vpop.f32.mrb[0].mxu0
    %v1800 = vadd.f32 %v1298, %v1799
    %v1801 = vpop.f32.mrb[0].mxu0
    %v1802 = vadd.f32 %v1294, %v1801
    %v1803 = vpop.f32.mrb[0].mxu0
    %v1804 = vadd.f32 %v1298, %v1803
    %1805 = vmatprep.mubr.bf16.mxu0 0
    %1806 = vmatmul.mubr.bf16.gmra.mrb[0].mxu0 %v1569
    %v1807 = vpop.f32.mrb[0].mxu0
    %v1808 = vadd.f32 %v1294, %v1807
    %v1809 = vpop.f32.mrb[0].mxu0
    %v1810 = vadd.f32 %v1298, %v1809
    %v1811 = vpop.f32.mrb[0].mxu0
    %v1812 = vpop.f32.mrb[0].mxu0
    %1813 = vdwg.mxu0
    %1814 = vmatprep.subr.bf16.mxu0 %v1466
    %1815 = vmatpush1.bf16.msra.mxu0 %v1465
    %1816 = vmatprep.subr.bf16.mxu0 %v1474
    %1817 = vmatpush1.bf16.msra.mxu0 %v1473
    %1818 = vmatprep.subr.bf16.mxu0 %v1482
    %1819 = vmatpush1.bf16.msra.mxu0 %v1481
    %1820 = vmatprep.subr.bf16.mxu0 %v1490
    %1821 = vmatpush1.bf16.msra.mxu0 %v1489
    %1822 = vmatprep.subr.bf16.mxu0 %v1498
    %1823 = vmatpush1.bf16.msra.mxu0 %v1497
    %1824 = vmatprep.subr.bf16.mxu0 %v1506
    %1825 = vmatpush1.bf16.msra.mxu0 %v1505
    %1826 = vmatprep.subr.bf16.mxu0 0
    %1827 = vmatpush1.bf16.msra.mxu0 0
    %1828 = vmatprep.subr.bf16.mxu0 0
    %1829 = vmatpush1.bf16.msra.mxu0 0
    %1830 = vmatprep.subr.bf16.mxu0 0
    %1831 = vmatpush1.bf16.msra.mxu0 0
    %1832 = vmatprep.subr.bf16.mxu0 0
    %1833 = vmatpush1.bf16.msra.mxu0 0
    %1834 = vmatprep.subr.bf16.mxu0 0
    %1835 = vmatpush1.bf16.msra.mxu0 0
    %1836 = vmatprep.subr.bf16.mxu0 0
    %1837 = vmatpush1.bf16.msra.mxu0 0
    %1838 = vmatprep.subr.bf16.mxu0 0
    %1839 = vmatpush1.bf16.msra.mxu0 0
    %1840 = vmatprep.subr.bf16.mxu0 0
    %1841 = vmatpush1.bf16.msra.mxu0 0
    %1842 = vmatprep.subr.bf16.mxu0 0
    %1843 = vmatpush1.bf16.msra.mxu0 0
    %1844 = vmatprep.subr.bf16.mxu0 0
    %1845 = vmatpush1.bf16.msra.mxu0 0
    %1846 = vmatprep.mubr.bf16.mxu0 0
    %1847 = vmatmul.mubr.bf16.gmra.mrb[0].mxu0 %v1557
    %v1848 = vpop.f32.mrb[0].mxu0
    %v1849 = vadd.f32 %v1302, %v1848
    %v1850 = vpop.f32.mrb[0].mxu0
    %v1851 = vadd.f32 %v1306, %v1850
    %v1852 = vpop.f32.mrb[0].mxu0
    %v1853 = vadd.f32 %v1302, %v1852
    %v1854 = vpop.f32.mrb[0].mxu0
    %v1855 = vadd.f32 %v1306, %v1854
    %1856 = vmatprep.mubr.bf16.mxu0 0
    %1857 = vmatmul.mubr.bf16.gmra.mrb[0].mxu0 %v1560
    %v1858 = vpop.f32.mrb[0].mxu0
    %v1859 = vadd.f32 %v1302, %v1858
    %v1860 = vpop.f32.mrb[0].mxu0
    %v1861 = vadd.f32 %v1306, %v1860
    %v1862 = vpop.f32.mrb[0].mxu0
    %v1863 = vadd.f32 %v1302, %v1862
    %v1864 = vpop.f32.mrb[0].mxu0
    %v1865 = vadd.f32 %v1306, %v1864
    %1866 = vmatprep.mubr.bf16.mxu0 0
    %1867 = vmatmul.mubr.bf16.gmra.mrb[0].mxu0 %v1563
    %v1868 = vpop.f32.mrb[0].mxu0
    %v1869 = vadd.f32 %v1302, %v1868
    %v1870 = vpop.f32.mrb[0].mxu0
    %v1871 = vadd.f32 %v1306, %v1870
    %v1872 = vpop.f32.mrb[0].mxu0
    %v1873 = vadd.f32 %v1302, %v1872
    %v1874 = vpop.f32.mrb[0].mxu0
    %v1875 = vadd.f32 %v1306, %v1874
    %1876 = vmatprep.mubr.bf16.mxu0 0
    %1877 = vmatmul.mubr.bf16.gmra.mrb[0].mxu0 %v1566
    %v1878 = vpop.f32.mrb[0].mxu0
    %v1879 = vadd.f32 %v1302, %v1878
    %v1880 = vpop.f32.mrb[0].mxu0
    %v1881 = vadd.f32 %v1306, %v1880
    %v1882 = vpop.f32.mrb[0].mxu0
    %v1883 = vadd.f32 %v1302, %v1882
    %v1884 = vpop.f32.mrb[0].mxu0
    %v1885 = vadd.f32 %v1306, %v1884
    %1886 = vmatprep.mubr.bf16.mxu0 0
    %1887 = vmatmul.mubr.bf16.gmra.mrb[0].mxu0 %v1569
    %v1888 = vpop.f32.mrb[0].mxu0
    %v1889 = vadd.f32 %v1302, %v1888
    %v1890 = vpop.f32.mrb[0].mxu0
    %v1891 = vadd.f32 %v1306, %v1890
    %v1892 = vpop.f32.mrb[0].mxu0
    %v1893 = vpop.f32.mrb[0].mxu0
    %1894 = vdwg.mxu0
    %v1895 = vmax.f32 %v1606, 0.0
    %v1896 = vmax.f32 %v1608, 0.0
    %v1897 = vmax.f32 %v1687, 0.0
    %v1898 = vmax.f32 %v1689, 0.0
    %v1899 = vmax.f32 %v1768, 0.0
    %v1900 = vmax.f32 %v1770, 0.0
    %v1901 = vmax.f32 %v1849, 0.0
    %v1902 = vmax.f32 %v1851, 0.0
    %v1903 = vmax.f32 %v1610, 0.0
    %v1904 = vmax.f32 %v1612, 0.0
    %v1905 = vmax.f32 %v1691, 0.0
    %v1906 = vmax.f32 %v1693, 0.0
    %v1907 = vmax.f32 %v1772, 0.0
    %v1908 = vmax.f32 %v1774, 0.0
    %v1909 = vmax.f32 %v1853, 0.0
    %v1910 = vmax.f32 %v1855, 0.0
    %v1911 = vmax.f32 %v1616, 0.0
    %v1912 = vmax.f32 %v1618, 0.0
    %v1913 = vmax.f32 %v1697, 0.0
    %v1914 = vmax.f32 %v1699, 0.0
    %v1915 = vmax.f32 %v1778, 0.0
    %v1916 = vmax.f32 %v1780, 0.0
    %v1917 = vmax.f32 %v1859, 0.0
    %v1918 = vmax.f32 %v1861, 0.0
    %v1919 = vmax.f32 %v1620, 0.0
    %v1920 = vmax.f32 %v1622, 0.0
    %v1921 = vmax.f32 %v1701, 0.0
    %v1922 = vmax.f32 %v1703, 0.0
    %v1923 = vmax.f32 %v1782, 0.0
    %v1924 = vmax.f32 %v1784, 0.0
    %v1925 = vmax.f32 %v1863, 0.0
    %v1926 = vmax.f32 %v1865, 0.0
    %v1927 = vmax.f32 %v1626, 0.0
    %v1928 = vmax.f32 %v1628, 0.0
    %v1929 = vmax.f32 %v1707, 0.0
    %v1930 = vmax.f32 %v1709, 0.0
    %v1931 = vmax.f32 %v1788, 0.0
    %v1932 = vmax.f32 %v1790, 0.0
    %v1933 = vmax.f32 %v1869, 0.0
    %v1934 = vmax.f32 %v1871, 0.0
    %v1935 = vmax.f32 %v1630, 0.0
    %v1936 = vmax.f32 %v1632, 0.0
    %v1937 = vmax.f32 %v1711, 0.0
    %v1938 = vmax.f32 %v1713, 0.0
    %v1939 = vmax.f32 %v1792, 0.0
    %v1940 = vmax.f32 %v1794, 0.0
    %v1941 = vmax.f32 %v1873, 0.0
    %v1942 = vmax.f32 %v1875, 0.0
    %v1943 = vmax.f32 %v1636, 0.0
    %v1944 = vmax.f32 %v1638, 0.0
    %v1945 = vmax.f32 %v1717, 0.0
    %v1946 = vmax.f32 %v1719, 0.0
    %v1947 = vmax.f32 %v1798, 0.0
    %v1948 = vmax.f32 %v1800, 0.0
    %v1949 = vmax.f32 %v1879, 0.0
    %v1950 = vmax.f32 %v1881, 0.0
    %v1951 = vmax.f32 %v1640, 0.0
    %v1952 = vmax.f32 %v1642, 0.0
    %v1953 = vmax.f32 %v1721, 0.0
    %v1954 = vmax.f32 %v1723, 0.0
    %v1955 = vmax.f32 %v1802, 0.0
    %v1956 = vmax.f32 %v1804, 0.0
    %v1957 = vmax.f32 %v1883, 0.0
    %v1958 = vmax.f32 %v1885, 0.0
    %v1959 = vmax.f32 %v1646, 0.0
    %v1960 = vmax.f32 %v1648, 0.0
    %v1961 = vmax.f32 %v1727, 0.0
    %v1962 = vmax.f32 %v1729, 0.0
    %v1963 = vmax.f32 %v1808, 0.0
    %v1964 = vmax.f32 %v1810, 0.0
    %v1965 = vmax.f32 %v1889, 0.0
    %v1966 = vmax.f32 %v1891, 0.0
    %1967 = vst [vmem:[%s11] sm:$0xff] %v1895
    %1968 = vst [vmem:[%s11 + $0x8] sm:$0xff] %v1896
    %1969 = vst [vmem:[%s11 + $0x10] sm:$0xff] %v1897
    %1970 = vst [vmem:[%s11 + $0x18] sm:$0xff] %v1898
    %1971 = vst [vmem:[%s11 + $0x20] sm:$0xff] %v1899
    %1972 = vst [vmem:[%s11 + $0x28] sm:$0xff] %v1900
    %1973 = vst [vmem:[%s11 + $0x30] sm:$0xff] %v1901
    %1974 = vst [vmem:[%s11 + $0x38] sm:$0xff] %v1902
    %1975 = vst [vmem:[%s11 + $0x40] sm:$0xff] %v1903
    %1976 = vst [vmem:[%s11 + $0x48] sm:$0xff] %v1904
    %1977 = vst [vmem:[%s11 + $0x50] sm:$0xff] %v1905
    %1978 = vst [vmem:[%s11 + $0x58] sm:$0xff] %v1906
    %1979 = vst [vmem:[%s11 + $0x60] sm:$0xff] %v1907
    %1980 = vst [vmem:[%s11 + $0x68] sm:$0xff] %v1908
    %1981 = vst [vmem:[%s11 + $0x70] sm:$0xff] %v1909
    %1982 = vst [vmem:[%s11 + $0x78] sm:$0xff] %v1910
    %1983 = vst [vmem:[%s11 + $0x80] sm:$0xff] %v1911
    %1984 = vst [vmem:[%s11 + $0x88] sm:$0xff] %v1912
    %1985 = vst [vmem:[%s11 + $0x90] sm:$0xff] %v1913
    %1986 = vst [vmem:[%s11 + $0x98] sm:$0xff] %v1914
    %1987 = vst [vmem:[%s11 + $0xa0] sm:$0xff] %v1915
    %1988 = vst [vmem:[%s11 + $0xa8] sm:$0xff] %v1916
    %1989 = vst [vmem:[%s11 + $0xb0] sm:$0xff] %v1917
    %1990 = vst [vmem:[%s11 + $0xb8] sm:$0xff] %v1918
    %1991 = vst [vmem:[%s11 + $0xc0] sm:$0xff] %v1919
    %1992 = vst [vmem:[%s11 + $0xc8] sm:$0xff] %v1920
    %1993 = vst [vmem:[%s11 + $0xd0] sm:$0xff] %v1921
    %1994 = vst [vmem:[%s11 + $0xd8] sm:$0xff] %v1922
    %1995 = vst [vmem:[%s11 + $0xe0] sm:$0xff] %v1923
    %1996 = vst [vmem:[%s11 + $0xe8] sm:$0xff] %v1924
    %1997 = vst [vmem:[%s11 + $0xf0] sm:$0xff] %v1925
    %1998 = vst [vmem:[%s11 + $0xf8] sm:$0xff] %v1926
    %1999 = vst [vmem:[%s11 + $0x100] sm:$0xff] %v1927
    %2000 = vst [vmem:[%s11 + $0x108] sm:$0xff] %v1928
    %2001 = vst [vmem:[%s11 + $0x110] sm:$0xff] %v1929
    %2002 = vst [vmem:[%s11 + $0x118] sm:$0xff] %v1930
    %2003 = vst [vmem:[%s11 + $0x120] sm:$0xff] %v1931
    %2004 = vst [vmem:[%s11 + $0x128] sm:$0xff] %v1932
    %2005 = vst [vmem:[%s11 + $0x130] sm:$0xff] %v1933
    %2006 = vst [vmem:[%s11 + $0x138] sm:$0xff] %v1934
    %2007 = vst [vmem:[%s11 + $0x140] sm:$0xff] %v1935
    %2008 = vst [vmem:[%s11 + $0x148] sm:$0xff] %v1936
    %2009 = vst [vmem:[%s11 + $0x150] sm:$0xff] %v1937
    %2010 = vst [vmem:[%s11 + $0x158] sm:$0xff] %v1938
    %2011 = vst [vmem:[%s11 + $0x160] sm:$0xff] %v1939
    %2012 = vst [vmem:[%s11 + $0x168] sm:$0xff] %v1940
    %2013 = vst [vmem:[%s11 + $0x170] sm:$0xff] %v1941
    %2014 = vst [vmem:[%s11 + $0x178] sm:$0xff] %v1942
    %2015 = vst [vmem:[%s11 + $0x180] sm:$0xff] %v1943
    %2016 = vst [vmem:[%s11 + $0x188] sm:$0xff] %v1944
    %2017 = vst [vmem:[%s11 + $0x190] sm:$0xff] %v1945
    %2018 = vst [vmem:[%s11 + $0x198] sm:$0xff] %v1946
    %2019 = vst [vmem:[%s11 + $0x1a0] sm:$0xff] %v1947
    %2020 = vst [vmem:[%s11 + $0x1a8] sm:$0xff] %v1948
    %2021 = vst [vmem:[%s11 + $0x1b0] sm:$0xff] %v1949
    %2022 = vst [vmem:[%s11 + $0x1b8] sm:$0xff] %v1950
    %2023 = vst [vmem:[%s11 + $0x1c0] sm:$0xff] %v1951
    %2024 = vst [vmem:[%s11 + $0x1c8] sm:$0xff] %v1952
    %2025 = vst [vmem:[%s11 + $0x1d0] sm:$0xff] %v1953
    %2026 = vst [vmem:[%s11 + $0x1d8] sm:$0xff] %v1954
    %2027 = vst [vmem:[%s11 + $0x1e0] sm:$0xff] %v1955
    %2028 = vst [vmem:[%s11 + $0x1e8] sm:$0xff] %v1956
    %2029 = vst [vmem:[%s11 + $0x1f0] sm:$0xff] %v1957
    %2030 = vst [vmem:[%s11 + $0x1f8] sm:$0xff] %v1958
    %2031 = vst [vmem:[%s11 + $0x200] sm:$0x3] %v1959
    %2032 = vst [vmem:[%s11 + $0x208] sm:$0x3] %v1960
    %2033 = vst [vmem:[%s11 + $0x210] sm:$0x3] %v1961
    %2034 = vst [vmem:[%s11 + $0x218] sm:$0x3] %v1962
    %2035 = vst [vmem:[%s11 + $0x220] sm:$0x3] %v1963
    %2036 = vst [vmem:[%s11 + $0x228] sm:$0x3] %v1964
    %2037 = vst [vmem:[%s11 + $0x230] sm:$0x3] %v1965
    %2038 = vst [vmem:[%s11 + $0x238] sm:$0x3] %v1966
    %v2039 = vpack.c.bf16 %v1903, %v1895
    %v2040 = vpack.c.bf16 %v1904, %v1896
    %v2041 = vpack.c.bf16 %v1905, %v1897
    %v2042 = vpack.c.bf16 %v1906, %v1898
    %v2043 = vpack.c.bf16 %v1907, %v1899
    %v2044 = vpack.c.bf16 %v1908, %v1900
    %v2045 = vpack.c.bf16 %v1909, %v1901
    %v2046 = vpack.c.bf16 %v1910, %v1902
    %v2047 = vpack.c.bf16 %v1919, %v1911
    %v2048 = vpack.c.bf16 %v1920, %v1912
    %v2049 = vpack.c.bf16 %v1921, %v1913
    %v2050 = vpack.c.bf16 %v1922, %v1914
    %v2051 = vpack.c.bf16 %v1923, %v1915
    %v2052 = vpack.c.bf16 %v1924, %v1916
    %v2053 = vpack.c.bf16 %v1925, %v1917
    %v2054 = vpack.c.bf16 %v1926, %v1918
    %v2055 = vpack.c.bf16 %v1935, %v1927
    %v2056 = vpack.c.bf16 %v1936, %v1928
    %v2057 = vpack.c.bf16 %v1937, %v1929
    %v2058 = vpack.c.bf16 %v1938, %v1930
    %v2059 = vpack.c.bf16 %v1939, %v1931
    %v2060 = vpack.c.bf16 %v1940, %v1932
    %v2061 = vpack.c.bf16 %v1941, %v1933
    %v2062 = vpack.c.bf16 %v1942, %v1934
    %v2063 = vpack.c.bf16 %v1951, %v1943
    %v2064 = vpack.c.bf16 %v1952, %v1944
    %v2065 = vpack.c.bf16 %v1953, %v1945
    %v2066 = vpack.c.bf16 %v1954, %v1946
    %v2067 = vpack.c.bf16 %v1955, %v1947
    %v2068 = vpack.c.bf16 %v1956, %v1948
    %v2069 = vpack.c.bf16 %v1957, %v1949
    %v2070 = vpack.c.bf16 %v1958, %v1950
    %v2071 = vpack.c.bf16 %v1959, %v1959
    %v2072 = vpack.c.bf16 %v1960, %v1960
    %v2073 = vpack.c.bf16 %v1961, %v1961
    %v2074 = vpack.c.bf16 %v1962, %v1962
    %v2075 = vpack.c.bf16 %v1963, %v1963
    %v2076 = vpack.c.bf16 %v1964, %v1964
    %v2077 = vpack.c.bf16 %v1965, %v1965
    %v2078 = vpack.c.bf16 %v1966, %v1966
    %v2079 = vld [vmem:[%s5] sm:$0xf]
    %v2080 = vld [vmem:[%s5 + $0x4] sm:$0xf]
    %v2081 = vld [vmem:[%s5 + $0x8] sm:$0xf]
    %v2082 = vld [vmem:[%s5 + $0xc] sm:$0xf]
    %v2083 = vld [vmem:[%s5 + $0x10] sm:$0xf]
    %v2084 = vld [vmem:[%s5 + $0x14] sm:$0xf]
    %v2085 = vld [vmem:[%s5 + $0x18] sm:$0xf]
    %v2086 = vld [vmem:[%s5 + $0x1c] sm:$0xf]
    %v2087 = vld [vmem:[%s5 + $0x20] sm:$0xf]
    %v2088 = vld [vmem:[%s5 + $0x24] sm:$0xf]
    %v2089 = vld [vmem:[%s5 + $0x28] sm:$0xf]
    %v2090 = vld [vmem:[%s5 + $0x2c] sm:$0xf]
    %v2091 = vld [vmem:[%s5 + $0x30] sm:$0xf]
    %v2092 = vld [vmem:[%s5 + $0x34] sm:$0xf]
    %v2093 = vld [vmem:[%s5 + $0x38] sm:$0xf]
    %v2094 = vld [vmem:[%s5 + $0x3c] sm:$0xf]
    %v2095 = vld [vmem:[%s5 + $0x40] sm:$0xf]
    %v2096 = vld [vmem:[%s5 + $0x44] sm:$0xf]
    %v2097 = vld [vmem:[%s5 + $0x48] sm:$0xf]
    %v2098 = vld [vmem:[%s5 + $0x4c] sm:$0xf]
    %v2099 = vld [vmem:[%s5 + $0x50] sm:$0xf]
    %v2100 = vld [vmem:[%s5 + $0x54] sm:$0xf]
    %v2101 = vld [vmem:[%s5 + $0x58] sm:$0xf]
    %v2102 = vld [vmem:[%s5 + $0x5c] sm:$0xf]
    %v2103 = vld [vmem:[%s5 + $0x60] sm:$0xf]
    %v2104 = vld [vmem:[%s5 + $0x64] sm:$0xf]
    %v2105 = vld [vmem:[%s5 + $0x68] sm:$0xf]
    %v2106 = vld [vmem:[%s5 + $0x6c] sm:$0xf]
    %v2107 = vld [vmem:[%s5 + $0x70] sm:$0xf]
    %v2108 = vld [vmem:[%s5 + $0x74] sm:$0xf]
    %v2109 = vld [vmem:[%s5 + $0x78] sm:$0xf]
    %v2110 = vld [vmem:[%s5 + $0x7c] sm:$0xf]
    %v2111 = vld [vmem:[%s5 + $0x80] sm:$0xf]
    %v2112 = vld [vmem:[%s5 + $0x84] sm:$0xf]
    %v2113 = vld [vmem:[%s5 + $0x88] sm:$0xf]
    %v2114 = vld [vmem:[%s5 + $0x8c] sm:$0xf]
    %v2115 = vld [vmem:[%s5 + $0x90] sm:$0xf]
    %v2116 = vld [vmem:[%s5 + $0x94] sm:$0xf]
    %v2117 = vld [vmem:[%s5 + $0x98] sm:$0xf]
    %v2118 = vld [vmem:[%s5 + $0x9c] sm:$0xf]
    %v2119 = vld [vmem:[%s5 + $0xa0] sm:$0xf]
    %v2120 = vld [vmem:[%s5 + $0xa4] sm:$0xf]
    %v2121 = vld [vmem:[%s5 + $0xa8] sm:$0xf]
    %v2122 = vld [vmem:[%s5 + $0xac] sm:$0xf]
    %v2123 = vld [vmem:[%s5 + $0xb0] sm:$0xf]
    %v2124 = vld [vmem:[%s5 + $0xb4] sm:$0xf]
    %v2125 = vld [vmem:[%s5 + $0xb8] sm:$0xf]
    %v2126 = vld [vmem:[%s5 + $0xbc] sm:$0xf]
    %v2127 = vld [vmem:[%s5 + $0xc0] sm:$0xf]
    %v2128 = vld [vmem:[%s5 + $0xc4] sm:$0xf]
    %v2129 = vld [vmem:[%s5 + $0xc8] sm:$0xf]
    %v2130 = vld [vmem:[%s5 + $0xcc] sm:$0xf]
    %v2131 = vld [vmem:[%s5 + $0xd0] sm:$0xf]
    %v2132 = vld [vmem:[%s5 + $0xd4] sm:$0xf]
    %v2133 = vld [vmem:[%s5 + $0xd8] sm:$0xf]
    %v2134 = vld [vmem:[%s5 + $0xdc] sm:$0xf]
    %v2135 = vld [vmem:[%s5 + $0xe0] sm:$0xf]
    %v2136 = vld [vmem:[%s5 + $0xe4] sm:$0xf]
    %v2137 = vld [vmem:[%s5 + $0xe8] sm:$0xf]
    %v2138 = vld [vmem:[%s5 + $0xec] sm:$0xf]
    %v2139 = vld [vmem:[%s5 + $0xf0] sm:$0xf]
    %v2140 = vld [vmem:[%s5 + $0xf4] sm:$0xf]
    %v2141 = vld [vmem:[%s5 + $0xf8] sm:$0xf]
    %v2142 = vld [vmem:[%s5 + $0xfc] sm:$0xf]
    %v2143 = vld [vmem:[%s5 + $0x100] sm:$0xf]
    %v2144 = vld [vmem:[%s5 + $0x104] sm:$0xf]
    %v2145 = vld [vmem:[%s5 + $0x108] sm:$0xf]
    %v2146 = vld [vmem:[%s5 + $0x10c] sm:$0xf]
    %v2147 = vld [vmem:[%s5 + $0x110] sm:$0xf]
    %v2148 = vld [vmem:[%s5 + $0x114] sm:$0xf]
    %v2149 = vld [vmem:[%s5 + $0x118] sm:$0xf]
    %v2150 = vld [vmem:[%s5 + $0x11c] sm:$0xf]
    %v2151 = vld [vmem:[%s5 + $0x120] sm:$0xf]
    %v2152 = vld [vmem:[%s5 + $0x124] sm:$0xf]
    %v2153 = vld [vmem:[%s5 + $0x128] sm:$0xf]
    %v2154 = vld [vmem:[%s5 + $0x12c] sm:$0xf]
    %v2155 = vld [vmem:[%s5 + $0x130] sm:$0xf]
    %v2156 = vld [vmem:[%s5 + $0x134] sm:$0xf]
    %v2157 = vld [vmem:[%s5 + $0x138] sm:$0xf]
    %v2158 = vld [vmem:[%s5 + $0x13c] sm:$0xf]
    %v2159 = vld [vmem:[%s5 + $0x140] sm:$0xf]
    %v2160 = vld [vmem:[%s5 + $0x144] sm:$0xf]
    %v2161 = vld [vmem:[%s5 + $0x148] sm:$0xf]
    %v2162 = vld [vmem:[%s5 + $0x14c] sm:$0xf]
    %v2163 = vld [vmem:[%s5 + $0x150] sm:$0xf]
    %v2164 = vld [vmem:[%s5 + $0x154] sm:$0xf]
    %v2165 = vld [vmem:[%s5 + $0x158] sm:$0xf]
    %v2166 = vld [vmem:[%s5 + $0x15c] sm:$0xf]
    %v2167 = vld [vmem:[%s5 + $0x160] sm:$0xf]
    %v2168 = vld [vmem:[%s5 + $0x164] sm:$0xf]
    %v2169 = vld [vmem:[%s5 + $0x168] sm:$0xf]
    %v2170 = vld [vmem:[%s5 + $0x16c] sm:$0xf]
    %v2171 = vld [vmem:[%s5 + $0x170] sm:$0xf]
    %v2172 = vld [vmem:[%s5 + $0x174] sm:$0xf]
    %v2173 = vld [vmem:[%s5 + $0x178] sm:$0xf]
    %v2174 = vld [vmem:[%s5 + $0x17c] sm:$0xf]
    %v2175 = vld [vmem:[%s5 + $0x180] sm:$0xf]
    %v2176 = vld [vmem:[%s5 + $0x184] sm:$0xf]
    %v2177 = vld [vmem:[%s5 + $0x188] sm:$0xf]
    %v2178 = vld [vmem:[%s5 + $0x18c] sm:$0xf]
    %v2179 = vld [vmem:[%s5 + $0x190] sm:$0xf]
    %v2180 = vld [vmem:[%s5 + $0x194] sm:$0xf]
    %v2181 = vld [vmem:[%s5 + $0x198] sm:$0xf]
    %v2182 = vld [vmem:[%s5 + $0x19c] sm:$0xf]
    %v2183 = vld [vmem:[%s5 + $0x1a0] sm:$0xf]
    %v2184 = vld [vmem:[%s5 + $0x1a4] sm:$0xf]
    %v2185 = vld [vmem:[%s5 + $0x1a8] sm:$0xf]
    %v2186 = vld [vmem:[%s5 + $0x1ac] sm:$0xf]
    %v2187 = vld [vmem:[%s5 + $0x1b0] sm:$0xf]
    %v2188 = vld [vmem:[%s5 + $0x1b4] sm:$0xf]
    %v2189 = vld [vmem:[%s5 + $0x1b8] sm:$0xf]
    %v2190 = vld [vmem:[%s5 + $0x1bc] sm:$0xf]
    %v2191 = vld [vmem:[%s5 + $0x1c0] sm:$0xf]
    %v2192 = vld [vmem:[%s5 + $0x1c4] sm:$0xf]
    %v2193 = vld [vmem:[%s5 + $0x1c8] sm:$0xf]
    %v2194 = vld [vmem:[%s5 + $0x1cc] sm:$0xf]
    %v2195 = vld [vmem:[%s5 + $0x1d0] sm:$0xf]
    %v2196 = vld [vmem:[%s5 + $0x1d4] sm:$0xf]
    %v2197 = vld [vmem:[%s5 + $0x1d8] sm:$0xf]
    %v2198 = vld [vmem:[%s5 + $0x1dc] sm:$0xf]
    %v2199 = vld [vmem:[%s5 + $0x1e0] sm:$0xf]
    %v2200 = vld [vmem:[%s5 + $0x1e4] sm:$0xf]
    %v2201 = vld [vmem:[%s5 + $0x1e8] sm:$0xf]
    %v2202 = vld [vmem:[%s5 + $0x1ec] sm:$0xf]
    %v2203 = vld [vmem:[%s5 + $0x1f0] sm:$0xf]
    %v2204 = vld [vmem:[%s5 + $0x1f4] sm:$0xf]
    %v2205 = vld [vmem:[%s5 + $0x1f8] sm:$0xf]
    %v2206 = vld [vmem:[%s5 + $0x1fc] sm:$0xf]
    %v2335 = vunpack.c.l.b16 %v2079
    %v2336 = vunpack.c.l.b16 %v2080
    %v2337 = vunpack.c.l.b16 %v2081
    %v2338 = vunpack.c.l.b16 %v2082
    %v2339 = vunpack.c.l.b16 %v2083
    %v2340 = vunpack.c.l.b16 %v2084
    %v2341 = vunpack.c.l.b16 %v2085
    %v2342 = vunpack.c.l.b16 %v2086
    %v2343 = vunpack.c.l.b16 %v2087
    %v2344 = vunpack.c.l.b16 %v2088
    %v2345 = vunpack.c.l.b16 %v2089
    %v2346 = vunpack.c.l.b16 %v2090
    %v2347 = vunpack.c.l.b16 %v2091
    %v2348 = vunpack.c.l.b16 %v2092
    %v2349 = vunpack.c.l.b16 %v2093
    %v2350 = vunpack.c.l.b16 %v2094
    %v2351 = vunpack.c.l.b16 %v2095
    %v2352 = vunpack.c.l.b16 %v2096
    %v2353 = vunpack.c.l.b16 %v2097
    %v2354 = vunpack.c.l.b16 %v2098
    %v2355 = vunpack.c.l.b16 %v2099
    %v2356 = vunpack.c.l.b16 %v2100
    %v2357 = vunpack.c.l.b16 %v2101
    %v2358 = vunpack.c.l.b16 %v2102
    %v2359 = vunpack.c.l.b16 %v2103
    %v2360 = vunpack.c.l.b16 %v2104
    %v2361 = vunpack.c.l.b16 %v2105
    %v2362 = vunpack.c.l.b16 %v2106
    %v2363 = vunpack.c.l.b16 %v2107
    %v2364 = vunpack.c.l.b16 %v2108
    %v2365 = vunpack.c.l.b16 %v2109
    %v2366 = vunpack.c.l.b16 %v2110
    %v2367 = vunpack.c.l.b16 %v2111
    %v2368 = vunpack.c.l.b16 %v2112
    %v2369 = vunpack.c.l.b16 %v2113
    %v2370 = vunpack.c.l.b16 %v2114
    %v2371 = vunpack.c.l.b16 %v2115
    %v2372 = vunpack.c.l.b16 %v2116
    %v2373 = vunpack.c.l.b16 %v2117
    %v2374 = vunpack.c.l.b16 %v2118
    %v2375 = vunpack.c.l.b16 %v2119
    %v2376 = vunpack.c.l.b16 %v2120
    %v2377 = vunpack.c.l.b16 %v2121
    %v2378 = vunpack.c.l.b16 %v2122
    %v2379 = vunpack.c.l.b16 %v2123
    %v2380 = vunpack.c.l.b16 %v2124
    %v2381 = vunpack.c.l.b16 %v2125
    %v2382 = vunpack.c.l.b16 %v2126
    %v2383 = vunpack.c.l.b16 %v2127
    %v2384 = vunpack.c.l.b16 %v2128
    %v2385 = vunpack.c.l.b16 %v2129
    %v2386 = vunpack.c.l.b16 %v2130
    %v2387 = vunpack.c.l.b16 %v2131
    %v2388 = vunpack.c.l.b16 %v2132
    %v2389 = vunpack.c.l.b16 %v2133
    %v2390 = vunpack.c.l.b16 %v2134
    %v2391 = vunpack.c.l.b16 %v2135
    %v2392 = vunpack.c.l.b16 %v2136
    %v2393 = vunpack.c.l.b16 %v2137
    %v2394 = vunpack.c.l.b16 %v2138
    %v2395 = vunpack.c.l.b16 %v2139
    %v2396 = vunpack.c.l.b16 %v2140
    %v2397 = vunpack.c.l.b16 %v2141
    %v2398 = vunpack.c.l.b16 %v2142
    %v2399 = vunpack.c.l.b16 %v2143
    %v2400 = vunpack.c.l.b16 %v2144
    %v2401 = vunpack.c.l.b16 %v2145
    %v2402 = vunpack.c.l.b16 %v2146
    %v2403 = vunpack.c.l.b16 %v2147
    %v2404 = vunpack.c.l.b16 %v2148
    %v2405 = vunpack.c.l.b16 %v2149
    %v2406 = vunpack.c.l.b16 %v2150
    %v2407 = vunpack.c.l.b16 %v2151
    %v2408 = vunpack.c.l.b16 %v2152
    %v2409 = vunpack.c.l.b16 %v2153
    %v2410 = vunpack.c.l.b16 %v2154
    %v2411 = vunpack.c.l.b16 %v2155
    %v2412 = vunpack.c.l.b16 %v2156
    %v2413 = vunpack.c.l.b16 %v2157
    %v2414 = vunpack.c.l.b16 %v2158
    %v2415 = vunpack.c.l.b16 %v2159
    %v2416 = vunpack.c.l.b16 %v2160
    %v2417 = vunpack.c.l.b16 %v2161
    %v2418 = vunpack.c.l.b16 %v2162
    %v2419 = vunpack.c.l.b16 %v2163
    %v2420 = vunpack.c.l.b16 %v2164
    %v2421 = vunpack.c.l.b16 %v2165
    %v2422 = vunpack.c.l.b16 %v2166
    %v2423 = vunpack.c.l.b16 %v2167
    %v2424 = vunpack.c.l.b16 %v2168
    %v2425 = vunpack.c.l.b16 %v2169
    %v2426 = vunpack.c.l.b16 %v2170
    %v2427 = vunpack.c.l.b16 %v2171
    %v2428 = vunpack.c.l.b16 %v2172
    %v2429 = vunpack.c.l.b16 %v2173
    %v2430 = vunpack.c.l.b16 %v2174
    %v2431 = vunpack.c.l.b16 %v2175
    %v2432 = vunpack.c.l.b16 %v2176
    %v2433 = vunpack.c.l.b16 %v2177
    %v2434 = vunpack.c.l.b16 %v2178
    %v2435 = vunpack.c.l.b16 %v2179
    %v2436 = vunpack.c.l.b16 %v2180
    %v2437 = vunpack.c.l.b16 %v2181
    %v2438 = vunpack.c.l.b16 %v2182
    %v2439 = vunpack.c.l.b16 %v2183
    %v2440 = vunpack.c.l.b16 %v2184
    %v2441 = vunpack.c.l.b16 %v2185
    %v2442 = vunpack.c.l.b16 %v2186
    %v2443 = vunpack.c.l.b16 %v2187
    %v2444 = vunpack.c.l.b16 %v2188
    %v2445 = vunpack.c.l.b16 %v2189
    %v2446 = vunpack.c.l.b16 %v2190
    %v2447 = vunpack.c.l.b16 %v2191
    %v2448 = vunpack.c.l.b16 %v2192
    %v2449 = vunpack.c.l.b16 %v2193
    %v2450 = vunpack.c.l.b16 %v2194
    %v2451 = vunpack.c.l.b16 %v2195
    %v2452 = vunpack.c.l.b16 %v2196
    %v2453 = vunpack.c.l.b16 %v2197
    %v2454 = vunpack.c.l.b16 %v2198
    %v2455 = vunpack.c.l.b16 %v2199
    %v2456 = vunpack.c.l.b16 %v2200
    %v2457 = vunpack.c.l.b16 %v2201
    %v2458 = vunpack.c.l.b16 %v2202
    %v2459 = vunpack.c.l.b16 %v2203
    %v2460 = vunpack.c.l.b16 %v2204
    %v2461 = vunpack.c.l.b16 %v2205
    %v2462 = vunpack.c.l.b16 %v2206
    %v2463 = vpack.c.b16 %v2336, %v2335
    %v2464 = vpack.c.b16 %v2338, %v2337
    %v2465 = vpack.c.b16 %v2340, %v2339
    %v2466 = vpack.c.b16 %v2342, %v2341
    %v2467 = vpack.c.b16 %v2344, %v2343
    %v2468 = vpack.c.b16 %v2346, %v2345
    %v2469 = vpack.c.b16 %v2348, %v2347
    %v2470 = vpack.c.b16 %v2350, %v2349
    %v2471 = vpack.c.b16 %v2352, %v2351
    %v2472 = vpack.c.b16 %v2354, %v2353
    %v2473 = vpack.c.b16 %v2356, %v2355
    %v2474 = vpack.c.b16 %v2358, %v2357
    %v2475 = vpack.c.b16 %v2360, %v2359
    %v2476 = vpack.c.b16 %v2362, %v2361
    %v2477 = vpack.c.b16 %v2364, %v2363
    %v2478 = vpack.c.b16 %v2366, %v2365
    %v2479 = vpack.c.b16 %v2368, %v2367
    %v2480 = vpack.c.b16 %v2370, %v2369
    %v2481 = vpack.c.b16 %v2372, %v2371
    %v2482 = vpack.c.b16 %v2374, %v2373
    %v2483 = vpack.c.b16 %v2376, %v2375
    %v2484 = vpack.c.b16 %v2378, %v2377
    %v2485 = vpack.c.b16 %v2380, %v2379
    %v2486 = vpack.c.b16 %v2382, %v2381
    %v2487 = vpack.c.b16 %v2384, %v2383
    %v2488 = vpack.c.b16 %v2386, %v2385
    %v2489 = vpack.c.b16 %v2388, %v2387
    %v2490 = vpack.c.b16 %v2390, %v2389
    %v2491 = vpack.c.b16 %v2392, %v2391
    %v2492 = vpack.c.b16 %v2394, %v2393
    %v2493 = vpack.c.b16 %v2396, %v2395
    %v2494 = vpack.c.b16 %v2398, %v2397
    %v2495 = vpack.c.b16 %v2400, %v2399
    %v2496 = vpack.c.b16 %v2402, %v2401
    %v2497 = vpack.c.b16 %v2404, %v2403
    %v2498 = vpack.c.b16 %v2406, %v2405
    %v2499 = vpack.c.b16 %v2408, %v2407
    %v2500 = vpack.c.b16 %v2410, %v2409
    %v2501 = vpack.c.b16 %v2412, %v2411
    %v2502 = vpack.c.b16 %v2414, %v2413
    %v2503 = vpack.c.b16 %v2416, %v2415
    %v2504 = vpack.c.b16 %v2418, %v2417
    %v2505 = vpack.c.b16 %v2420, %v2419
    %v2506 = vpack.c.b16 %v2422, %v2421
    %v2507 = vpack.c.b16 %v2424, %v2423
    %v2508 = vpack.c.b16 %v2426, %v2425
    %v2509 = vpack.c.b16 %v2428, %v2427
    %v2510 = vpack.c.b16 %v2430, %v2429
    %v2511 = vpack.c.b16 %v2432, %v2431
    %v2512 = vpack.c.b16 %v2434, %v2433
    %v2513 = vpack.c.b16 %v2436, %v2435
    %v2514 = vpack.c.b16 %v2438, %v2437
    %v2515 = vpack.c.b16 %v2440, %v2439
    %v2516 = vpack.c.b16 %v2442, %v2441
    %v2517 = vpack.c.b16 %v2444, %v2443
    %v2518 = vpack.c.b16 %v2446, %v2445
    %v2519 = vpack.c.b16 %v2448, %v2447
    %v2520 = vpack.c.b16 %v2450, %v2449
    %v2521 = vpack.c.b16 %v2452, %v2451
    %v2522 = vpack.c.b16 %v2454, %v2453
    %v2523 = vpack.c.b16 %v2456, %v2455
    %v2524 = vpack.c.b16 %v2458, %v2457
    %v2525 = vpack.c.b16 %v2460, %v2459
    %v2526 = vpack.c.b16 %v2462, %v2461
    %2591 = vmatprep.subr.bf16.mxu0 0
    %2592 = vmatpush1.bf16.msra.mxu0 %v2463
    %2593 = vmatprep.subr.bf16.mxu0 0
    %2594 = vmatpush1.bf16.msra.mxu0 %v2464
    %2595 = vmatprep.subr.bf16.mxu0 0
    %2596 = vmatpush1.bf16.msra.mxu0 %v2465
    %2597 = vmatprep.subr.bf16.mxu0 0
    %2598 = vmatpush1.bf16.msra.mxu0 %v2466
    %2599 = vmatprep.subr.bf16.mxu0 0
    %2600 = vmatpush1.bf16.msra.mxu0 %v2467
    %2601 = vmatprep.subr.bf16.mxu0 0
    %2602 = vmatpush1.bf16.msra.mxu0 %v2468
    %2603 = vmatprep.subr.bf16.mxu0 0
    %2604 = vmatpush1.bf16.msra.mxu0 %v2469
    %2605 = vmatprep.subr.bf16.mxu0 0
    %2606 = vmatpush1.bf16.msra.mxu0 %v2470
    %2607 = vmatprep.subr.bf16.mxu0 0
    %2608 = vmatpush1.bf16.msra.mxu0 %v2471
    %2609 = vmatprep.subr.bf16.mxu0 0
    %2610 = vmatpush1.bf16.msra.mxu0 %v2472
    %2611 = vmatprep.subr.bf16.mxu0 0
    %2612 = vmatpush1.bf16.msra.mxu0 %v2473
    %2613 = vmatprep.subr.bf16.mxu0 0
    %2614 = vmatpush1.bf16.msra.mxu0 %v2474
    %2615 = vmatprep.subr.bf16.mxu0 0
    %2616 = vmatpush1.bf16.msra.mxu0 %v2475
    %2617 = vmatprep.subr.bf16.mxu0 0
    %2618 = vmatpush1.bf16.msra.mxu0 %v2476
    %2619 = vmatprep.subr.bf16.mxu0 0
    %2620 = vmatpush1.bf16.msra.mxu0 %v2477
    %2621 = vmatprep.subr.bf16.mxu0 0
    %2622 = vmatpush1.bf16.msra.mxu0 %v2478
    %2623 = vmatprep.mubr.bf16.mxu0 %v2040
    %2624 = vmatmul.mubr.bf16.gmra.mrb[0].mxu0 %v2039
    %v2625 = vpop.f32.mrb[0].mxu0
    %v2626 = vadd.f32 0.0, %v2625
    %v2627 = vpop.f32.mrb[0].mxu0
    %v2628 = vpop.f32.mrb[0].mxu0
    %v2629 = vadd.f32 0.0, %v2628
    %v2630 = vpop.f32.mrb[0].mxu0
    %2631 = vmatprep.mubr.bf16.mxu0 %v2048
    %2632 = vmatmul.mubr.bf16.gmra.mrb[0].mxu0 %v2047
    %v2633 = vpop.f32.mrb[0].mxu0
    %v2634 = vadd.f32 0.0, %v2633
    %v2635 = vpop.f32.mrb[0].mxu0
    %v2636 = vpop.f32.mrb[0].mxu0
    %v2637 = vadd.f32 0.0, %v2636
    %v2638 = vpop.f32.mrb[0].mxu0
    %2639 = vmatprep.mubr.bf16.mxu0 %v2056
    %2640 = vmatmul.mubr.bf16.gmra.mrb[0].mxu0 %v2055
    %v2641 = vpop.f32.mrb[0].mxu0
    %v2642 = vadd.f32 0.0, %v2641
    %v2643 = vpop.f32.mrb[0].mxu0
    %v2644 = vpop.f32.mrb[0].mxu0
    %v2645 = vadd.f32 0.0, %v2644
    %v2646 = vpop.f32.mrb[0].mxu0
    %2647 = vmatprep.mubr.bf16.mxu0 %v2064
    %2648 = vmatmul.mubr.bf16.gmra.mrb[0].mxu0 %v2063
    %v2649 = vpop.f32.mrb[0].mxu0
    %v2650 = vadd.f32 0.0, %v2649
    %v2651 = vpop.f32.mrb[0].mxu0
    %v2652 = vpop.f32.mrb[0].mxu0
    %v2653 = vadd.f32 0.0, %v2652
    %v2654 = vpop.f32.mrb[0].mxu0
    %2655 = vmatprep.mubr.bf16.mxu0 %v2072
    %2656 = vmatmul.mubr.bf16.gmra.mrb[0].mxu0 %v2071
    %v2657 = vpop.f32.mrb[0].mxu0
    %v2658 = vadd.f32 0.0, %v2657
    %v2659 = vpop.f32.mrb[0].mxu0
    %v2660 = vpop.f32.mrb[0].mxu0
    %v2661 = vpop.f32.mrb[0].mxu0
    %2662 = vdwg.mxu0
    %2663 = vmatprep.subr.bf16.mxu0 0
    %2664 = vmatpush1.bf16.msra.mxu0 %v2479
    %2665 = vmatprep.subr.bf16.mxu0 0
    %2666 = vmatpush1.bf16.msra.mxu0 %v2480
    %2667 = vmatprep.subr.bf16.mxu0 0
    %2668 = vmatpush1.bf16.msra.mxu0 %v2481
    %2669 = vmatprep.subr.bf16.mxu0 0
    %2670 = vmatpush1.bf16.msra.mxu0 %v2482
    %2671 = vmatprep.subr.bf16.mxu0 0
    %2672 = vmatpush1.bf16.msra.mxu0 %v2483
    %2673 = vmatprep.subr.bf16.mxu0 0
    %2674 = vmatpush1.bf16.msra.mxu0 %v2484
    %2675 = vmatprep.subr.bf16.mxu0 0
    %2676 = vmatpush1.bf16.msra.mxu0 %v2485
    %2677 = vmatprep.subr.bf16.mxu0 0
    %2678 = vmatpush1.bf16.msra.mxu0 %v2486
    %2679 = vmatprep.subr.bf16.mxu0 0
    %2680 = vmatpush1.bf16.msra.mxu0 %v2487
    %2681 = vmatprep.subr.bf16.mxu0 0
    %2682 = vmatpush1.bf16.msra.mxu0 %v2488
    %2683 = vmatprep.subr.bf16.mxu0 0
    %2684 = vmatpush1.bf16.msra.mxu0 %v2489
    %2685 = vmatprep.subr.bf16.mxu0 0
    %2686 = vmatpush1.bf16.msra.mxu0 %v2490
    %2687 = vmatprep.subr.bf16.mxu0 0
    %2688 = vmatpush1.bf16.msra.mxu0 %v2491
    %2689 = vmatprep.subr.bf16.mxu0 0
    %2690 = vmatpush1.bf16.msra.mxu0 %v2492
    %2691 = vmatprep.subr.bf16.mxu0 0
    %2692 = vmatpush1.bf16.msra.mxu0 %v2493
    %2693 = vmatprep.subr.bf16.mxu0 0
    %2694 = vmatpush1.bf16.msra.mxu0 %v2494
    %2695 = vmatprep.mubr.bf16.mxu0 %v2042
    %2696 = vmatmul.mubr.bf16.gmra.mrb[0].mxu0 %v2041
    %v2697 = vpop.f32.mrb[0].mxu0
    %v2698 = vadd.f32 %v2626, %v2697
    %v2699 = vpop.f32.mrb[0].mxu0
    %v2700 = vpop.f32.mrb[0].mxu0
    %v2701 = vadd.f32 %v2629, %v2700
    %v2702 = vpop.f32.mrb[0].mxu0
    %2703 = vmatprep.mubr.bf16.mxu0 %v2050
    %2704 = vmatmul.mubr.bf16.gmra.mrb[0].mxu0 %v2049
    %v2705 = vpop.f32.mrb[0].mxu0
    %v2706 = vadd.f32 %v2634, %v2705
    %v2707 = vpop.f32.mrb[0].mxu0
    %v2708 = vpop.f32.mrb[0].mxu0
    %v2709 = vadd.f32 %v2637, %v2708
    %v2710 = vpop.f32.mrb[0].mxu0
    %2711 = vmatprep.mubr.bf16.mxu0 %v2058
    %2712 = vmatmul.mubr.bf16.gmra.mrb[0].mxu0 %v2057
    %v2713 = vpop.f32.mrb[0].mxu0
    %v2714 = vadd.f32 %v2642, %v2713
    %v2715 = vpop.f32.mrb[0].mxu0
    %v2716 = vpop.f32.mrb[0].mxu0
    %v2717 = vadd.f32 %v2645, %v2716
    %v2718 = vpop.f32.mrb[0].mxu0
    %2719 = vmatprep.mubr.bf16.mxu0 %v2066
    %2720 = vmatmul.mubr.bf16.gmra.mrb[0].mxu0 %v2065
    %v2721 = vpop.f32.mrb[0].mxu0
    %v2722 = vadd.f32 %v2650, %v2721
    %v2723 = vpop.f32.mrb[0].mxu0
    %v2724 = vpop.f32.mrb[0].mxu0
    %v2725 = vadd.f32 %v2653, %v2724
    %v2726 = vpop.f32.mrb[0].mxu0
    %2727 = vmatprep.mubr.bf16.mxu0 %v2074
    %2728 = vmatmul.mubr.bf16.gmra.mrb[0].mxu0 %v2073
    %v2729 = vpop.f32.mrb[0].mxu0
    %v2730 = vadd.f32 %v2658, %v2729
    %v2731 = vpop.f32.mrb[0].mxu0
    %v2732 = vpop.f32.mrb[0].mxu0
    %v2733 = vpop.f32.mrb[0].mxu0
    %2734 = vdwg.mxu0
    %2735 = vmatprep.subr.bf16.mxu0 0
    %2736 = vmatpush1.bf16.msra.mxu0 %v2495
    %2737 = vmatprep.subr.bf16.mxu0 0
    %2738 = vmatpush1.bf16.msra.mxu0 %v2496
    %2739 = vmatprep.subr.bf16.mxu0 0
    %2740 = vmatpush1.bf16.msra.mxu0 %v2497
    %2741 = vmatprep.subr.bf16.mxu0 0
    %2742 = vmatpush1.bf16.msra.mxu0 %v2498
    %2743 = vmatprep.subr.bf16.mxu0 0
    %2744 = vmatpush1.bf16.msra.mxu0 %v2499
    %2745 = vmatprep.subr.bf16.mxu0 0
    %2746 = vmatpush1.bf16.msra.mxu0 %v2500
    %2747 = vmatprep.subr.bf16.mxu0 0
    %2748 = vmatpush1.bf16.msra.mxu0 %v2501
    %2749 = vmatprep.subr.bf16.mxu0 0
    %2750 = vmatpush1.bf16.msra.mxu0 %v2502
    %2751 = vmatprep.subr.bf16.mxu0 0
    %2752 = vmatpush1.bf16.msra.mxu0 %v2503
    %2753 = vmatprep.subr.bf16.mxu0 0
    %2754 = vmatpush1.bf16.msra.mxu0 %v2504
    %2755 = vmatprep.subr.bf16.mxu0 0
    %2756 = vmatpush1.bf16.msra.mxu0 %v2505
    %2757 = vmatprep.subr.bf16.mxu0 0
    %2758 = vmatpush1.bf16.msra.mxu0 %v2506
    %2759 = vmatprep.subr.bf16.mxu0 0
    %2760 = vmatpush1.bf16.msra.mxu0 %v2507
    %2761 = vmatprep.subr.bf16.mxu0 0
    %2762 = vmatpush1.bf16.msra.mxu0 %v2508
    %2763 = vmatprep.subr.bf16.mxu0 0
    %2764 = vmatpush1.bf16.msra.mxu0 %v2509
    %2765 = vmatprep.subr.bf16.mxu0 0
    %2766 = vmatpush1.bf16.msra.mxu0 %v2510
    %2767 = vmatprep.mubr.bf16.mxu0 %v2044
    %2768 = vmatmul.mubr.bf16.gmra.mrb[0].mxu0 %v2043
    %v2769 = vpop.f32.mrb[0].mxu0
    %v2770 = vadd.f32 %v2698, %v2769
    %v2771 = vpop.f32.mrb[0].mxu0
    %v2772 = vpop.f32.mrb[0].mxu0
    %v2773 = vadd.f32 %v2701, %v2772
    %v2774 = vpop.f32.mrb[0].mxu0
    %2775 = vmatprep.mubr.bf16.mxu0 %v2052
    %2776 = vmatmul.mubr.bf16.gmra.mrb[0].mxu0 %v2051
    %v2777 = vpop.f32.mrb[0].mxu0
    %v2778 = vadd.f32 %v2706, %v2777
    %v2779 = vpop.f32.mrb[0].mxu0
    %v2780 = vpop.f32.mrb[0].mxu0
    %v2781 = vadd.f32 %v2709, %v2780
    %v2782 = vpop.f32.mrb[0].mxu0
    %2783 = vmatprep.mubr.bf16.mxu0 %v2060
    %2784 = vmatmul.mubr.bf16.gmra.mrb[0].mxu0 %v2059
    %v2785 = vpop.f32.mrb[0].mxu0
    %v2786 = vadd.f32 %v2714, %v2785
    %v2787 = vpop.f32.mrb[0].mxu0
    %v2788 = vpop.f32.mrb[0].mxu0
    %v2789 = vadd.f32 %v2717, %v2788
    %v2790 = vpop.f32.mrb[0].mxu0
    %2791 = vmatprep.mubr.bf16.mxu0 %v2068
    %2792 = vmatmul.mubr.bf16.gmra.mrb[0].mxu0 %v2067
    %v2793 = vpop.f32.mrb[0].mxu0
    %v2794 = vadd.f32 %v2722, %v2793
    %v2795 = vpop.f32.mrb[0].mxu0
    %v2796 = vpop.f32.mrb[0].mxu0
    %v2797 = vadd.f32 %v2725, %v2796
    %v2798 = vpop.f32.mrb[0].mxu0
    %2799 = vmatprep.mubr.bf16.mxu0 %v2076
    %2800 = vmatmul.mubr.bf16.gmra.mrb[0].mxu0 %v2075
    %v2801 = vpop.f32.mrb[0].mxu0
    %v2802 = vadd.f32 %v2730, %v2801
    %v2803 = vpop.f32.mrb[0].mxu0
    %v2804 = vpop.f32.mrb[0].mxu0
    %v2805 = vpop.f32.mrb[0].mxu0
    %2806 = vdwg.mxu0
    %2807 = vmatprep.subr.bf16.mxu0 0
    %2808 = vmatpush1.bf16.msra.mxu0 %v2511
    %2809 = vmatprep.subr.bf16.mxu0 0
    %2810 = vmatpush1.bf16.msra.mxu0 %v2512
    %2811 = vmatprep.subr.bf16.mxu0 0
    %2812 = vmatpush1.bf16.msra.mxu0 %v2513
    %2813 = vmatprep.subr.bf16.mxu0 0
    %2814 = vmatpush1.bf16.msra.mxu0 %v2514
    %2815 = vmatprep.subr.bf16.mxu0 0
    %2816 = vmatpush1.bf16.msra.mxu0 %v2515
    %2817 = vmatprep.subr.bf16.mxu0 0
    %2818 = vmatpush1.bf16.msra.mxu0 %v2516
    %2819 = vmatprep.subr.bf16.mxu0 0
    %2820 = vmatpush1.bf16.msra.mxu0 %v2517
    %2821 = vmatprep.subr.bf16.mxu0 0
    %2822 = vmatpush1.bf16.msra.mxu0 %v2518
    %2823 = vmatprep.subr.bf16.mxu0 0
    %2824 = vmatpush1.bf16.msra.mxu0 %v2519
    %2825 = vmatprep.subr.bf16.mxu0 0
    %2826 = vmatpush1.bf16.msra.mxu0 %v2520
    %2827 = vmatprep.subr.bf16.mxu0 0
    %2828 = vmatpush1.bf16.msra.mxu0 %v2521
    %2829 = vmatprep.subr.bf16.mxu0 0
    %2830 = vmatpush1.bf16.msra.mxu0 %v2522
    %2831 = vmatprep.subr.bf16.mxu0 0
    %2832 = vmatpush1.bf16.msra.mxu0 %v2523
    %2833 = vmatprep.subr.bf16.mxu0 0
    %2834 = vmatpush1.bf16.msra.mxu0 %v2524
    %2835 = vmatprep.subr.bf16.mxu0 0
    %2836 = vmatpush1.bf16.msra.mxu0 %v2525
    %2837 = vmatprep.subr.bf16.mxu0 0
    %2838 = vmatpush1.bf16.msra.mxu0 %v2526
    %2839 = vmatprep.mubr.bf16.mxu0 %v2046
    %2840 = vmatmul.mubr.bf16.gmra.mrb[0].mxu0 %v2045
    %v2841 = vpop.f32.mrb[0].mxu0
    %v2842 = vadd.f32 %v2770, %v2841
    %v2843 = vpop.f32.mrb[0].mxu0
    %v2844 = vpop.f32.mrb[0].mxu0
    %v2845 = vadd.f32 %v2773, %v2844
    %v2846 = vpop.f32.mrb[0].mxu0
    %2847 = vmatprep.mubr.bf16.mxu0 %v2054
    %2848 = vmatmul.mubr.bf16.gmra.mrb[0].mxu0 %v2053
    %v2849 = vpop.f32.mrb[0].mxu0
    %v2850 = vadd.f32 %v2778, %v2849
    %v2851 = vpop.f32.mrb[0].mxu0
    %v2852 = vpop.f32.mrb[0].mxu0
    %v2853 = vadd.f32 %v2781, %v2852
    %v2854 = vpop.f32.mrb[0].mxu0
    %2855 = vmatprep.mubr.bf16.mxu0 %v2062
    %2856 = vmatmul.mubr.bf16.gmra.mrb[0].mxu0 %v2061
    %v2857 = vpop.f32.mrb[0].mxu0
    %v2858 = vadd.f32 %v2786, %v2857
    %v2859 = vpop.f32.mrb[0].mxu0
    %v2860 = vpop.f32.mrb[0].mxu0
    %v2861 = vadd.f32 %v2789, %v2860
    %v2862 = vpop.f32.mrb[0].mxu0
    %2863 = vmatprep.mubr.bf16.mxu0 %v2070
    %2864 = vmatmul.mubr.bf16.gmra.mrb[0].mxu0 %v2069
    %v2865 = vpop.f32.mrb[0].mxu0
    %v2866 = vadd.f32 %v2794, %v2865
    %v2867 = vpop.f32.mrb[0].mxu0
    %v2868 = vpop.f32.mrb[0].mxu0
    %v2869 = vadd.f32 %v2797, %v2868
    %v2870 = vpop.f32.mrb[0].mxu0
    %2871 = vmatprep.mubr.bf16.mxu0 %v2078
    %2872 = vmatmul.mubr.bf16.gmra.mrb[0].mxu0 %v2077
    %v2873 = vpop.f32.mrb[0].mxu0
    %v2874 = vadd.f32 %v2802, %v2873
    %v2875 = vpop.f32.mrb[0].mxu0
    %v2876 = vpop.f32.mrb[0].mxu0
    %v2877 = vpop.f32.mrb[0].mxu0
    %2878 = vdwg.mxu0
    %vm2879 = vcmp.ge.s32.totalorder %v957, 0
    %vm2880 = vcmp.ge.s32.totalorder %v958, 0
    %vm2881 = vcmp.ge.s32.totalorder %v959, 0
    %vm2882 = vcmp.ge.s32.totalorder %v960, 0
    %vm2883 = vcmp.ge.s32.totalorder %v961, 0
    %vm2884 = vcmp.ge.s32.totalorder %v962, 0
    %vm2885 = vcmp.ge.s32.totalorder %v963, 0
    %vm2886 = vcmp.ge.s32.totalorder %v964, 0
    %vm2887 = vcmp.ge.s32.totalorder %v965, 0
    %vm2888 = vcmp.lt.s32.totalorder %v957, 33
    %vm2889 = vcmp.lt.s32.totalorder %v958, 33
    %vm2890 = vcmp.lt.s32.totalorder %v959, 33
    %vm2891 = vcmp.lt.s32.totalorder %v960, 33
    %vm2892 = vcmp.lt.s32.totalorder %v961, 33
    %vm2893 = vcmp.lt.s32.totalorder %v962, 33
    %vm2894 = vcmp.lt.s32.totalorder %v963, 33
    %vm2895 = vcmp.lt.s32.totalorder %v964, 33
    %vm2896 = vcmp.lt.s32.totalorder %v965, 33
    %vm2897 = vmand %vm2879, %vm2888
    %vm2898 = vmand %vm2880, %vm2889
    %vm2899 = vmand %vm2881, %vm2890
    %vm2900 = vmand %vm2882, %vm2891
    %vm2901 = vmand %vm2883, %vm2892
    %vm2902 = vmand %vm2884, %vm2893
    %vm2903 = vmand %vm2885, %vm2894
    %vm2904 = vmand %vm2886, %vm2895
    %vm2905 = vmand %vm2887, %vm2896
    %v2906 = vsel %vm2897, 1, 0
    %v2907 = vsel %vm2898, 1, 0
    %v2908 = vsel %vm2899, 1, 0
    %v2909 = vsel %vm2900, 1, 0
    %v2910 = vsel %vm2901, 1, 0
    %v2911 = vsel %vm2902, 1, 0
    %v2912 = vsel %vm2903, 1, 0
    %v2913 = vsel %vm2904, 1, 0
    %v2914 = vsel %vm2905, 1, 0
    %vm2915 = vcmp.eq.s32.totalorder %v2906, 1
    %vm2916 = vcmp.eq.s32.totalorder %v2907, 1
    %vm2917 = vcmp.eq.s32.totalorder %v2908, 1
    %vm2918 = vcmp.eq.s32.totalorder %v2909, 1
    %vm2919 = vcmp.eq.s32.totalorder %v2910, 1
    %vm2920 = vcmp.eq.s32.totalorder %v2911, 1
    %vm2921 = vcmp.eq.s32.totalorder %v2912, 1
    %vm2922 = vcmp.eq.s32.totalorder %v2913, 1
    %vm2923 = vcmp.eq.s32.totalorder %v2914, 1
    %v2924 = vsel %vm2915, %v2842, -inf
    %v2925 = vsel %vm2916, %v2845, -inf
    %v2926 = vsel %vm2917, %v2850, -inf
    %v2927 = vsel %vm2918, %v2853, -inf
    %v2928 = vsel %vm2919, %v2858, -inf
    %v2929 = vsel %vm2920, %v2861, -inf
    %v2930 = vsel %vm2921, %v2866, -inf
    %v2931 = vsel %vm2922, %v2869, -inf
    %v2932 = vsel %vm2923, %v2874, -inf
    %v2933 = vsel %vm945, %v2924, -inf
    %v2934 = vsel %vm945, %v2925, -inf
    %v2935 = vsel %vm945, %v2926, -inf
    %v2936 = vsel %vm945, %v2927, -inf
    %v2937 = vsel %vm945, %v2928, -inf
    %v2938 = vmax.f32 %v2933, %v2937
    %v2939 = vsel %vm945, %v2929, -inf
    %v2940 = vmax.f32 %v2934, %v2939
    %v2941 = vsel %vm945, %v2930, -inf
    %v2942 = vmax.f32 %v2935, %v2941
    %v2943 = vsel %vm945, %v2931, -inf
    %v2944 = vmax.f32 %v2936, %v2943
    %v2945 = vsel %vm954, %v2932, -inf
    %v2946 = vmax.f32 %v2938, %v2945
    %v2947 = vmax.f32 %v2946, %v2940
    %v2948 = vmax.f32 %v2942, %v2944
    %v2949 = vmax.f32 %v2947, %v2948
    %v2950 = vrot.slane %v2949, 4
    %v2951 = vmax.f32 %v2949, %v2950
    %v2952 = vrot.slane %v2951, 2
    %v2953 = vmax.f32 %v2951, %v2952
    %v2954 = vrot.slane %v2953, 1
    %v2955 = vmax.f32 %v2953, %v2954
    %v2956 = vsel %vm2915, %v2842, 0.0
    %v2957 = vsel %vm2916, %v2845, 0.0
    %v2958 = vsel %vm2917, %v2850, 0.0
    %v2959 = vsel %vm2918, %v2853, 0.0
    %v2960 = vsel %vm2919, %v2858, 0.0
    %v2961 = vsel %vm2920, %v2861, 0.0
    %v2962 = vsel %vm2921, %v2866, 0.0
    %v2963 = vsel %vm2922, %v2869, 0.0
    %v2964 = vsel %vm2923, %v2874, 0.0
    %v2965 = vsel %vm945, %v2956, 0.0
    %v2966 = vsel %vm945, %v2957, 0.0
    %v2967 = vadd.f32 %v2965, %v2966
    %v2968 = vsel %vm945, %v2958, 0.0
    %v2969 = vadd.f32 %v2967, %v2968
    %v2970 = vsel %vm945, %v2959, 0.0
    %v2971 = vadd.f32 %v2969, %v2970
    %v2972 = vsel %vm945, %v2960, 0.0
    %v2973 = vadd.f32 %v2971, %v2972
    %v2974 = vsel %vm945, %v2961, 0.0
    %v2975 = vadd.f32 %v2973, %v2974
    %v2976 = vsel %vm945, %v2962, 0.0
    %v2977 = vadd.f32 %v2975, %v2976
    %v2978 = vsel %vm945, %v2963, 0.0
    %v2979 = vadd.f32 %v2977, %v2978
    %v2980 = vsel %vm954, %v2964, 0.0
    %v2981 = vadd.f32 %v2979, %v2980
    %v2982 = vrot.slane %v2981, 4
    %v2983 = vadd.f32 %v2981, %v2982
    %v2984 = vrot.slane %v2983, 2
    %v2985 = vadd.f32 %v2983, %v2984
    %v2986 = vrot.slane %v2985, 1
    %v2987 = vadd.f32 %v2985, %v2986
    %v2988 = vmul.f32 %v2987, 0.030303031
    %v2989 = vadd.f32 %v2955, %v2988
    %vm2990 = vcmp.ge.s32.totalorder %v957, 33
    %vm2991 = vcmp.ge.s32.totalorder %v958, 33
    %vm2992 = vcmp.ge.s32.totalorder %v959, 33
    %vm2993 = vcmp.ge.s32.totalorder %v960, 33
    %vm2994 = vcmp.ge.s32.totalorder %v961, 33
    %vm2995 = vcmp.ge.s32.totalorder %v962, 33
    %vm2996 = vcmp.ge.s32.totalorder %v963, 33
    %vm2997 = vcmp.ge.s32.totalorder %v964, 33
    %vm2998 = vcmp.ge.s32.totalorder %v965, 33
    %vm2999 = vcmp.lt.s32.totalorder %v957, 66
    %vm3000 = vcmp.lt.s32.totalorder %v958, 66
    %vm3001 = vcmp.lt.s32.totalorder %v959, 66
    %vm3002 = vcmp.lt.s32.totalorder %v960, 66
    %vm3003 = vcmp.lt.s32.totalorder %v961, 66
    %vm3004 = vcmp.lt.s32.totalorder %v962, 66
    %vm3005 = vcmp.lt.s32.totalorder %v963, 66
    %vm3006 = vcmp.lt.s32.totalorder %v964, 66
    %vm3007 = vcmp.lt.s32.totalorder %v965, 66
    %vm3008 = vmand %vm2990, %vm2999
    %vm3009 = vmand %vm2991, %vm3000
    %vm3010 = vmand %vm2992, %vm3001
    %vm3011 = vmand %vm2993, %vm3002
    %vm3012 = vmand %vm2994, %vm3003
    %vm3013 = vmand %vm2995, %vm3004
    %vm3014 = vmand %vm2996, %vm3005
    %vm3015 = vmand %vm2997, %vm3006
    %vm3016 = vmand %vm2998, %vm3007
    %v3017 = vsel %vm3008, 1, 0
    %v3018 = vsel %vm3009, 1, 0
    %v3019 = vsel %vm3010, 1, 0
    %v3020 = vsel %vm3011, 1, 0
    %v3021 = vsel %vm3012, 1, 0
    %v3022 = vsel %vm3013, 1, 0
    %v3023 = vsel %vm3014, 1, 0
    %v3024 = vsel %vm3015, 1, 0
    %v3025 = vsel %vm3016, 1, 0
    %vm3026 = vcmp.eq.s32.totalorder %v3017, 1
    %vm3027 = vcmp.eq.s32.totalorder %v3018, 1
    %vm3028 = vcmp.eq.s32.totalorder %v3019, 1
    %vm3029 = vcmp.eq.s32.totalorder %v3020, 1
    %vm3030 = vcmp.eq.s32.totalorder %v3021, 1
    %vm3031 = vcmp.eq.s32.totalorder %v3022, 1
    %vm3032 = vcmp.eq.s32.totalorder %v3023, 1
    %vm3033 = vcmp.eq.s32.totalorder %v3024, 1
    %vm3034 = vcmp.eq.s32.totalorder %v3025, 1
    %v3035 = vsel %vm3026, %v2842, -inf
    %v3036 = vsel %vm3027, %v2845, -inf
    %v3037 = vsel %vm3028, %v2850, -inf
    %v3038 = vsel %vm3029, %v2853, -inf
    %v3039 = vsel %vm3030, %v2858, -inf
    %v3040 = vsel %vm3031, %v2861, -inf
    %v3041 = vsel %vm3032, %v2866, -inf
    %v3042 = vsel %vm3033, %v2869, -inf
    %v3043 = vsel %vm3034, %v2874, -inf
    %v3044 = vsel %vm945, %v3035, -inf
    %v3045 = vsel %vm945, %v3036, -inf
    %v3046 = vsel %vm945, %v3037, -inf
    %v3047 = vsel %vm945, %v3038, -inf
    %v3048 = vsel %vm945, %v3039, -inf
    %v3049 = vmax.f32 %v3044, %v3048
    %v3050 = vsel %vm945, %v3040, -inf
    %v3051 = vmax.f32 %v3045, %v3050
    %v3052 = vsel %vm945, %v3041, -inf
    %v3053 = vmax.f32 %v3046, %v3052
    %v3054 = vsel %vm945, %v3042, -inf
    %v3055 = vmax.f32 %v3047, %v3054
    %v3056 = vsel %vm954, %v3043, -inf
    %v3057 = vmax.f32 %v3049, %v3056
    %v3058 = vmax.f32 %v3057, %v3051
    %v3059 = vmax.f32 %v3053, %v3055
    %v3060 = vmax.f32 %v3058, %v3059
    %v3061 = vrot.slane %v3060, 4
    %v3062 = vmax.f32 %v3060, %v3061
    %v3063 = vrot.slane %v3062, 2
    %v3064 = vmax.f32 %v3062, %v3063
    %v3065 = vrot.slane %v3064, 1
    %v3066 = vmax.f32 %v3064, %v3065
    %v3067 = vsel %vm3026, %v2842, 0.0
    %v3068 = vsel %vm3027, %v2845, 0.0
    %v3069 = vsel %vm3028, %v2850, 0.0
    %v3070 = vsel %vm3029, %v2853, 0.0
    %v3071 = vsel %vm3030, %v2858, 0.0
    %v3072 = vsel %vm3031, %v2861, 0.0
    %v3073 = vsel %vm3032, %v2866, 0.0
    %v3074 = vsel %vm3033, %v2869, 0.0
    %v3075 = vsel %vm3034, %v2874, 0.0
    %v3076 = vsel %vm945, %v3067, 0.0
    %v3077 = vsel %vm945, %v3068, 0.0
    %v3078 = vadd.f32 %v3076, %v3077
    %v3079 = vsel %vm945, %v3069, 0.0
    %v3080 = vadd.f32 %v3078, %v3079
    %v3081 = vsel %vm945, %v3070, 0.0
    %v3082 = vadd.f32 %v3080, %v3081
    %v3083 = vsel %vm945, %v3071, 0.0
    %v3084 = vadd.f32 %v3082, %v3083
    %v3085 = vsel %vm945, %v3072, 0.0
    %v3086 = vadd.f32 %v3084, %v3085
    %v3087 = vsel %vm945, %v3073, 0.0
    %v3088 = vadd.f32 %v3086, %v3087
    %v3089 = vsel %vm945, %v3074, 0.0
    %v3090 = vadd.f32 %v3088, %v3089
    %v3091 = vsel %vm954, %v3075, 0.0
    %v3092 = vadd.f32 %v3090, %v3091
    %v3093 = vrot.slane %v3092, 4
    %v3094 = vadd.f32 %v3092, %v3093
    %v3095 = vrot.slane %v3094, 2
    %v3096 = vadd.f32 %v3094, %v3095
    %v3097 = vrot.slane %v3096, 1
    %v3098 = vadd.f32 %v3096, %v3097
    %v3099 = vmul.f32 %v3098, 0.030303031
    %v3100 = vadd.f32 %v3066, %v3099
    %v3101 = vsel %vm1029, %v2989, %v3100
    %s3102 = smul.u32 4, 4
    %s3103 = smul.u32 %s3102, 16
    %s3104 = sshll.u32 %s3103, 4
    %3105 = dma.done [#allocation4], %s3104
    %v3106 = vpack.c.bf16 %v3101, %v3101
    %v3107 = vld [vmem:[#allocation2] sm:$0xff]
    %v3108 = vld [vmem:[#allocation2 + $0x8] sm:$0xff]
    %v3109 = vld [vmem:[#allocation2 + $0x10] sm:$0xff]
    %v3110 = vld [vmem:[#allocation2 + $0x18] sm:$0xff]
    %v3111 = vld [vmem:[#allocation2 + $0x20] sm:$0xff]
    %v3112 = vld [vmem:[#allocation2 + $0x28] sm:$0xff]
    %v3113 = vld [vmem:[#allocation2 + $0x30] sm:$0xff]
    %v3114 = vld [vmem:[#allocation2 + $0x38] sm:$0xff]
    %v3115 = vld [vmem:[#allocation2 + $0x40] sm:$0xff]
    %v3116 = vld [vmem:[#allocation2 + $0x48] sm:$0xff]
    %v3117 = vld [vmem:[#allocation2 + $0x50] sm:$0xff]
    %v3118 = vld [vmem:[#allocation2 + $0x58] sm:$0xff]
    %v3119 = vld [vmem:[#allocation2 + $0x60] sm:$0xff]
    %v3120 = vld [vmem:[#allocation2 + $0x68] sm:$0xff]
    %v3121 = vld [vmem:[#allocation2 + $0x70] sm:$0xff]
    %v3122 = vld [vmem:[#allocation2 + $0x78] sm:$0xff]
    %v3123 = vld [vmem:[#allocation2 + $0x80] sm:$0xff]
    %v3124 = vld [vmem:[#allocation2 + $0x88] sm:$0xff]
    %v3125 = vld [vmem:[#allocation2 + $0x90] sm:$0xff]
    %v3126 = vld [vmem:[#allocation2 + $0x98] sm:$0xff]
    %v3127 = vld [vmem:[#allocation2 + $0xa0] sm:$0xff]
    %v3128 = vld [vmem:[#allocation2 + $0xa8] sm:$0xff]
    %v3129 = vld [vmem:[#allocation2 + $0xb0] sm:$0xff]
    %v3130 = vld [vmem:[#allocation2 + $0xb8] sm:$0xff]
    %v3131 = vld [vmem:[#allocation2 + $0xc0] sm:$0xff]
    %v3132 = vld [vmem:[#allocation2 + $0xc8] sm:$0xff]
    %v3133 = vld [vmem:[#allocation2 + $0xd0] sm:$0xff]
    %v3134 = vld [vmem:[#allocation2 + $0xd8] sm:$0xff]
    %v3135 = vld [vmem:[#allocation2 + $0xe0] sm:$0xff]
    %v3136 = vld [vmem:[#allocation2 + $0xe8] sm:$0xff]
    %v3137 = vld [vmem:[#allocation2 + $0xf0] sm:$0xff]
    %v3138 = vld [vmem:[#allocation2 + $0xf8] sm:$0xff]
    %v3139 = vld [vmem:[%s6] sm:$0xff]
    %v3140 = vld [vmem:[%s6 + $0x8] sm:$0xff]
    %v3143 = vlaneseq
    %v3144 = vshrl.u32 %v3143, 7
    %v3145 = vsub.s32 0, %v3144
    %v3146 = vrot.slane %v3139, %v3145
    %v3147 = vlaneseq
    %v3148 = vshrl.u32 %v3147, 7
    %v3149 = vsub.s32 1, %v3148
    %v3150 = vrot.slane %v3139, %v3149
    %v3151 = vlaneseq
    %v3152 = vshrl.u32 %v3151, 7
    %v3153 = vsub.s32 2, %v3152
    %v3154 = vrot.slane %v3139, %v3153
    %v3155 = vlaneseq
    %v3156 = vshrl.u32 %v3155, 7
    %v3157 = vsub.s32 3, %v3156
    %v3158 = vrot.slane %v3139, %v3157
    %v3159 = vlaneseq
    %v3160 = vshrl.u32 %v3159, 7
    %v3161 = vsub.s32 4, %v3160
    %v3162 = vrot.slane %v3139, %v3161
    %v3163 = vlaneseq
    %v3164 = vshrl.u32 %v3163, 7
    %v3165 = vsub.s32 5, %v3164
    %v3166 = vrot.slane %v3139, %v3165
    %v3167 = vlaneseq
    %v3168 = vshrl.u32 %v3167, 7
    %v3169 = vsub.s32 6, %v3168
    %v3170 = vrot.slane %v3139, %v3169
    %v3171 = vlaneseq
    %v3172 = vshrl.u32 %v3171, 7
    %v3173 = vsub.s32 7, %v3172
    %v3174 = vrot.slane %v3139, %v3173
    %v3175 = vlaneseq
    %v3176 = vshrl.u32 %v3175, 7
    %v3177 = vsub.s32 0, %v3176
    %v3178 = vrot.slane %v3140, %v3177
    %v3179 = vlaneseq
    %v3180 = vshrl.u32 %v3179, 7
    %v3181 = vsub.s32 1, %v3180
    %v3182 = vrot.slane %v3140, %v3181
    %v3183 = vlaneseq
    %v3184 = vshrl.u32 %v3183, 7
    %v3185 = vsub.s32 2, %v3184
    %v3186 = vrot.slane %v3140, %v3185
    %v3187 = vlaneseq
    %v3188 = vshrl.u32 %v3187, 7
    %v3189 = vsub.s32 3, %v3188
    %v3190 = vrot.slane %v3140, %v3189
    %v3191 = vlaneseq
    %v3192 = vshrl.u32 %v3191, 7
    %v3193 = vsub.s32 4, %v3192
    %v3194 = vrot.slane %v3140, %v3193
    %v3195 = vlaneseq
    %v3196 = vshrl.u32 %v3195, 7
    %v3197 = vsub.s32 5, %v3196
    %v3198 = vrot.slane %v3140, %v3197
    %v3199 = vlaneseq
    %v3200 = vshrl.u32 %v3199, 7
    %v3201 = vsub.s32 6, %v3200
    %v3202 = vrot.slane %v3140, %v3201
    %v3203 = vlaneseq
    %v3204 = vshrl.u32 %v3203, 7
    %v3205 = vsub.s32 7, %v3204
    %v3206 = vrot.slane %v3140, %v3205
    %v3224 = vsel %vm945, %v3106, 0
    %3226 = vmatprep.subr.bf16.mxu0 %v3108
    %3227 = vmatpush1.bf16.msra.mxu0 %v3107
    %3228 = vmatprep.subr.bf16.mxu0 %v3124
    %3229 = vmatpush1.bf16.msra.mxu0 %v3123
    %3230 = vmatprep.subr.bf16.mxu0 0
    %3231 = vmatpush1.bf16.msra.mxu0 0
    %3232 = vmatprep.subr.bf16.mxu0 0
    %3233 = vmatpush1.bf16.msra.mxu0 0
    %3234 = vmatprep.subr.bf16.mxu0 0
    %3235 = vmatpush1.bf16.msra.mxu0 0
    %3236 = vmatprep.subr.bf16.mxu0 0
    %3237 = vmatpush1.bf16.msra.mxu0 0
    %3238 = vmatprep.subr.bf16.mxu0 0
    %3239 = vmatpush1.bf16.msra.mxu0 0
    %3240 = vmatprep.subr.bf16.mxu0 0
    %3241 = vmatpush1.bf16.msra.mxu0 0
    %3242 = vmatprep.subr.bf16.mxu0 0
    %3243 = vmatpush1.bf16.msra.mxu0 0
    %3244 = vmatprep.subr.bf16.mxu0 0
    %3245 = vmatpush1.bf16.msra.mxu0 0
    %3246 = vmatprep.subr.bf16.mxu0 0
    %3247 = vmatpush1.bf16.msra.mxu0 0
    %3248 = vmatprep.subr.bf16.mxu0 0
    %3249 = vmatpush1.bf16.msra.mxu0 0
    %3250 = vmatprep.subr.bf16.mxu0 0
    %3251 = vmatpush1.bf16.msra.mxu0 0
    %3252 = vmatprep.subr.bf16.mxu0 0
    %3253 = vmatpush1.bf16.msra.mxu0 0
    %3254 = vmatprep.subr.bf16.mxu0 0
    %3255 = vmatpush1.bf16.msra.mxu0 0
    %3256 = vmatprep.subr.bf16.mxu0 0
    %3257 = vmatpush1.bf16.msra.mxu0 0
    %3258 = vmatprep.mubr.bf16.mxu0 0
    %3259 = vmatmul.mubr.bf16.gmra.mrb[0].mxu0 %v3224
    %v3260 = vpop.f32.mrb[0].mxu0
    %v3261 = vadd.f32 %v3146, %v3260
    %v3262 = vpop.f32.mrb[0].mxu0
    %v3263 = vadd.f32 %v3150, %v3262
    %v3264 = vpop.f32.mrb[0].mxu0
    %v3265 = vpop.f32.mrb[0].mxu0
    %3266 = vdwg.mxu0
    %3267 = vmatprep.subr.bf16.mxu0 %v3110
    %3268 = vmatpush1.bf16.msra.mxu0 %v3109
    %3269 = vmatprep.subr.bf16.mxu0 %v3126
    %3270 = vmatpush1.bf16.msra.mxu0 %v3125
    %3271 = vmatprep.subr.bf16.mxu0 0
    %3272 = vmatpush1.bf16.msra.mxu0 0
    %3273 = vmatprep.subr.bf16.mxu0 0
    %3274 = vmatpush1.bf16.msra.mxu0 0
    %3275 = vmatprep.subr.bf16.mxu0 0
    %3276 = vmatpush1.bf16.msra.mxu0 0
    %3277 = vmatprep.subr.bf16.mxu0 0
    %3278 = vmatpush1.bf16.msra.mxu0 0
    %3279 = vmatprep.subr.bf16.mxu0 0
    %3280 = vmatpush1.bf16.msra.mxu0 0
    %3281 = vmatprep.subr.bf16.mxu0 0
    %3282 = vmatpush1.bf16.msra.mxu0 0
    %3283 = vmatprep.subr.bf16.mxu0 0
    %3284 = vmatpush1.bf16.msra.mxu0 0
    %3285 = vmatprep.subr.bf16.mxu0 0
    %3286 = vmatpush1.bf16.msra.mxu0 0
    %3287 = vmatprep.subr.bf16.mxu0 0
    %3288 = vmatpush1.bf16.msra.mxu0 0
    %3289 = vmatprep.subr.bf16.mxu0 0
    %3290 = vmatpush1.bf16.msra.mxu0 0
    %3291 = vmatprep.subr.bf16.mxu0 0
    %3292 = vmatpush1.bf16.msra.mxu0 0
    %3293 = vmatprep.subr.bf16.mxu0 0
    %3294 = vmatpush1.bf16.msra.mxu0 0
    %3295 = vmatprep.subr.bf16.mxu0 0
    %3296 = vmatpush1.bf16.msra.mxu0 0
    %3297 = vmatprep.subr.bf16.mxu0 0
    %3298 = vmatpush1.bf16.msra.mxu0 0
    %3299 = vmatprep.mubr.bf16.mxu0 0
    %3300 = vmatmul.mubr.bf16.gmra.mrb[0].mxu0 %v3224
    %v3301 = vpop.f32.mrb[0].mxu0
    %v3302 = vadd.f32 %v3154, %v3301
    %v3303 = vpop.f32.mrb[0].mxu0
    %v3304 = vadd.f32 %v3158, %v3303
    %v3305 = vpop.f32.mrb[0].mxu0
    %v3306 = vpop.f32.mrb[0].mxu0
    %3307 = vdwg.mxu0
    %3308 = vmatprep.subr.bf16.mxu0 %v3112
    %3309 = vmatpush1.bf16.msra.mxu0 %v3111
    %3310 = vmatprep.subr.bf16.mxu0 %v3128
    %3311 = vmatpush1.bf16.msra.mxu0 %v3127
    %3312 = vmatprep.subr.bf16.mxu0 0
    %3313 = vmatpush1.bf16.msra.mxu0 0
    %3314 = vmatprep.subr.bf16.mxu0 0
    %3315 = vmatpush1.bf16.msra.mxu0 0
    %3316 = vmatprep.subr.bf16.mxu0 0
    %3317 = vmatpush1.bf16.msra.mxu0 0
    %3318 = vmatprep.subr.bf16.mxu0 0
    %3319 = vmatpush1.bf16.msra.mxu0 0
    %3320 = vmatprep.subr.bf16.mxu0 0
    %3321 = vmatpush1.bf16.msra.mxu0 0
    %3322 = vmatprep.subr.bf16.mxu0 0
    %3323 = vmatpush1.bf16.msra.mxu0 0
    %3324 = vmatprep.subr.bf16.mxu0 0
    %3325 = vmatpush1.bf16.msra.mxu0 0
    %3326 = vmatprep.subr.bf16.mxu0 0
    %3327 = vmatpush1.bf16.msra.mxu0 0
    %3328 = vmatprep.subr.bf16.mxu0 0
    %3329 = vmatpush1.bf16.msra.mxu0 0
    %3330 = vmatprep.subr.bf16.mxu0 0
    %3331 = vmatpush1.bf16.msra.mxu0 0
    %3332 = vmatprep.subr.bf16.mxu0 0
    %3333 = vmatpush1.bf16.msra.mxu0 0
    %3334 = vmatprep.subr.bf16.mxu0 0
    %3335 = vmatpush1.bf16.msra.mxu0 0
    %3336 = vmatprep.subr.bf16.mxu0 0
    %3337 = vmatpush1.bf16.msra.mxu0 0
    %3338 = vmatprep.subr.bf16.mxu0 0
    %3339 = vmatpush1.bf16.msra.mxu0 0
    %3340 = vmatprep.mubr.bf16.mxu0 0
    %3341 = vmatmul.mubr.bf16.gmra.mrb[0].mxu0 %v3224
    %v3342 = vpop.f32.mrb[0].mxu0
    %v3343 = vadd.f32 %v3162, %v3342
    %v3344 = vpop.f32.mrb[0].mxu0
    %v3345 = vadd.f32 %v3166, %v3344
    %v3346 = vpop.f32.mrb[0].mxu0
    %v3347 = vpop.f32.mrb[0].mxu0
    %3348 = vdwg.mxu0
    %3349 = vmatprep.subr.bf16.mxu0 %v3114
    %3350 = vmatpush1.bf16.msra.mxu0 %v3113
    %3351 = vmatprep.subr.bf16.mxu0 %v3130
    %3352 = vmatpush1.bf16.msra.mxu0 %v3129
    %3353 = vmatprep.subr.bf16.mxu0 0
    %3354 = vmatpush1.bf16.msra.mxu0 0
    %3355 = vmatprep.subr.bf16.mxu0 0
    %3356 = vmatpush1.bf16.msra.mxu0 0
    %3357 = vmatprep.subr.bf16.mxu0 0
    %3358 = vmatpush1.bf16.msra.mxu0 0
    %3359 = vmatprep.subr.bf16.mxu0 0
    %3360 = vmatpush1.bf16.msra.mxu0 0
    %3361 = vmatprep.subr.bf16.mxu0 0
    %3362 = vmatpush1.bf16.msra.mxu0 0
    %3363 = vmatprep.subr.bf16.mxu0 0
    %3364 = vmatpush1.bf16.msra.mxu0 0
    %3365 = vmatprep.subr.bf16.mxu0 0
    %3366 = vmatpush1.bf16.msra.mxu0 0
    %3367 = vmatprep.subr.bf16.mxu0 0
    %3368 = vmatpush1.bf16.msra.mxu0 0
    %3369 = vmatprep.subr.bf16.mxu0 0
    %3370 = vmatpush1.bf16.msra.mxu0 0
    %3371 = vmatprep.subr.bf16.mxu0 0
    %3372 = vmatpush1.bf16.msra.mxu0 0
    %3373 = vmatprep.subr.bf16.mxu0 0
    %3374 = vmatpush1.bf16.msra.mxu0 0
    %3375 = vmatprep.subr.bf16.mxu0 0
    %3376 = vmatpush1.bf16.msra.mxu0 0
    %3377 = vmatprep.subr.bf16.mxu0 0
    %3378 = vmatpush1.bf16.msra.mxu0 0
    %3379 = vmatprep.subr.bf16.mxu0 0
    %3380 = vmatpush1.bf16.msra.mxu0 0
    %3381 = vmatprep.mubr.bf16.mxu0 0
    %3382 = vmatmul.mubr.bf16.gmra.mrb[0].mxu0 %v3224
    %v3383 = vpop.f32.mrb[0].mxu0
    %v3384 = vadd.f32 %v3170, %v3383
    %v3385 = vpop.f32.mrb[0].mxu0
    %v3386 = vadd.f32 %v3174, %v3385
    %v3387 = vpop.f32.mrb[0].mxu0
    %v3388 = vpop.f32.mrb[0].mxu0
    %3389 = vdwg.mxu0
    %3390 = vmatprep.subr.bf16.mxu0 %v3116
    %3391 = vmatpush1.bf16.msra.mxu0 %v3115
    %3392 = vmatprep.subr.bf16.mxu0 %v3132
    %3393 = vmatpush1.bf16.msra.mxu0 %v3131
    %3394 = vmatprep.subr.bf16.mxu0 0
    %3395 = vmatpush1.bf16.msra.mxu0 0
    %3396 = vmatprep.subr.bf16.mxu0 0
    %3397 = vmatpush1.bf16.msra.mxu0 0
    %3398 = vmatprep.subr.bf16.mxu0 0
    %3399 = vmatpush1.bf16.msra.mxu0 0
    %3400 = vmatprep.subr.bf16.mxu0 0
    %3401 = vmatpush1.bf16.msra.mxu0 0
    %3402 = vmatprep.subr.bf16.mxu0 0
    %3403 = vmatpush1.bf16.msra.mxu0 0
    %3404 = vmatprep.subr.bf16.mxu0 0
    %3405 = vmatpush1.bf16.msra.mxu0 0
    %3406 = vmatprep.subr.bf16.mxu0 0
    %3407 = vmatpush1.bf16.msra.mxu0 0
    %3408 = vmatprep.subr.bf16.mxu0 0
    %3409 = vmatpush1.bf16.msra.mxu0 0
    %3410 = vmatprep.subr.bf16.mxu0 0
    %3411 = vmatpush1.bf16.msra.mxu0 0
    %3412 = vmatprep.subr.bf16.mxu0 0
    %3413 = vmatpush1.bf16.msra.mxu0 0
    %3414 = vmatprep.subr.bf16.mxu0 0
    %3415 = vmatpush1.bf16.msra.mxu0 0
    %3416 = vmatprep.subr.bf16.mxu0 0
    %3417 = vmatpush1.bf16.msra.mxu0 0
    %3418 = vmatprep.subr.bf16.mxu0 0
    %3419 = vmatpush1.bf16.msra.mxu0 0
    %3420 = vmatprep.subr.bf16.mxu0 0
    %3421 = vmatpush1.bf16.msra.mxu0 0
    %3422 = vmatprep.mubr.bf16.mxu0 0
    %3423 = vmatmul.mubr.bf16.gmra.mrb[0].mxu0 %v3224
    %v3424 = vpop.f32.mrb[0].mxu0
    %v3425 = vadd.f32 %v3178, %v3424
    %v3426 = vpop.f32.mrb[0].mxu0
    %v3427 = vadd.f32 %v3182, %v3426
    %v3428 = vpop.f32.mrb[0].mxu0
    %v3429 = vpop.f32.mrb[0].mxu0
    %3430 = vdwg.mxu0
    %3431 = vmatprep.subr.bf16.mxu0 %v3118
    %3432 = vmatpush1.bf16.msra.mxu0 %v3117
    %3433 = vmatprep.subr.bf16.mxu0 %v3134
    %3434 = vmatpush1.bf16.msra.mxu0 %v3133
    %3435 = vmatprep.subr.bf16.mxu0 0
    %3436 = vmatpush1.bf16.msra.mxu0 0
    %3437 = vmatprep.subr.bf16.mxu0 0
    %3438 = vmatpush1.bf16.msra.mxu0 0
    %3439 = vmatprep.subr.bf16.mxu0 0
    %3440 = vmatpush1.bf16.msra.mxu0 0
    %3441 = vmatprep.subr.bf16.mxu0 0
    %3442 = vmatpush1.bf16.msra.mxu0 0
    %3443 = vmatprep.subr.bf16.mxu0 0
    %3444 = vmatpush1.bf16.msra.mxu0 0
    %3445 = vmatprep.subr.bf16.mxu0 0
    %3446 = vmatpush1.bf16.msra.mxu0 0
    %3447 = vmatprep.subr.bf16.mxu0 0
    %3448 = vmatpush1.bf16.msra.mxu0 0
    %3449 = vmatprep.subr.bf16.mxu0 0
    %3450 = vmatpush1.bf16.msra.mxu0 0
    %3451 = vmatprep.subr.bf16.mxu0 0
    %3452 = vmatpush1.bf16.msra.mxu0 0
    %3453 = vmatprep.subr.bf16.mxu0 0
    %3454 = vmatpush1.bf16.msra.mxu0 0
    %3455 = vmatprep.subr.bf16.mxu0 0
    %3456 = vmatpush1.bf16.msra.mxu0 0
    %3457 = vmatprep.subr.bf16.mxu0 0
    %3458 = vmatpush1.bf16.msra.mxu0 0
    %3459 = vmatprep.subr.bf16.mxu0 0
    %3460 = vmatpush1.bf16.msra.mxu0 0
    %3461 = vmatprep.subr.bf16.mxu0 0
    %3462 = vmatpush1.bf16.msra.mxu0 0
    %3463 = vmatprep.mubr.bf16.mxu0 0
    %3464 = vmatmul.mubr.bf16.gmra.mrb[0].mxu0 %v3224
    %v3465 = vpop.f32.mrb[0].mxu0
    %v3466 = vadd.f32 %v3186, %v3465
    %v3467 = vpop.f32.mrb[0].mxu0
    %v3468 = vadd.f32 %v3190, %v3467
    %v3469 = vpop.f32.mrb[0].mxu0
    %v3470 = vpop.f32.mrb[0].mxu0
    %3471 = vdwg.mxu0
    %3472 = vmatprep.subr.bf16.mxu0 %v3120
    %3473 = vmatpush1.bf16.msra.mxu0 %v3119
    %3474 = vmatprep.subr.bf16.mxu0 %v3136
    %3475 = vmatpush1.bf16.msra.mxu0 %v3135
    %3476 = vmatprep.subr.bf16.mxu0 0
    %3477 = vmatpush1.bf16.msra.mxu0 0
    %3478 = vmatprep.subr.bf16.mxu0 0
    %3479 = vmatpush1.bf16.msra.mxu0 0
    %3480 = vmatprep.subr.bf16.mxu0 0
    %3481 = vmatpush1.bf16.msra.mxu0 0
    %3482 = vmatprep.subr.bf16.mxu0 0
    %3483 = vmatpush1.bf16.msra.mxu0 0
    %3484 = vmatprep.subr.bf16.mxu0 0
    %3485 = vmatpush1.bf16.msra.mxu0 0
    %3486 = vmatprep.subr.bf16.mxu0 0
    %3487 = vmatpush1.bf16.msra.mxu0 0
    %3488 = vmatprep.subr.bf16.mxu0 0
    %3489 = vmatpush1.bf16.msra.mxu0 0
    %3490 = vmatprep.subr.bf16.mxu0 0
    %3491 = vmatpush1.bf16.msra.mxu0 0
    %3492 = vmatprep.subr.bf16.mxu0 0
    %3493 = vmatpush1.bf16.msra.mxu0 0
    %3494 = vmatprep.subr.bf16.mxu0 0
    %3495 = vmatpush1.bf16.msra.mxu0 0
    %3496 = vmatprep.subr.bf16.mxu0 0
    %3497 = vmatpush1.bf16.msra.mxu0 0
    %3498 = vmatprep.subr.bf16.mxu0 0
    %3499 = vmatpush1.bf16.msra.mxu0 0
    %3500 = vmatprep.subr.bf16.mxu0 0
    %3501 = vmatpush1.bf16.msra.mxu0 0
    %3502 = vmatprep.subr.bf16.mxu0 0
    %3503 = vmatpush1.bf16.msra.mxu0 0
    %3504 = vmatprep.mubr.bf16.mxu0 0
    %3505 = vmatmul.mubr.bf16.gmra.mrb[0].mxu0 %v3224
    %v3506 = vpop.f32.mrb[0].mxu0
    %v3507 = vadd.f32 %v3194, %v3506
    %v3508 = vpop.f32.mrb[0].mxu0
    %v3509 = vadd.f32 %v3198, %v3508
    %v3510 = vpop.f32.mrb[0].mxu0
    %v3511 = vpop.f32.mrb[0].mxu0
    %3512 = vdwg.mxu0
    %3513 = vmatprep.subr.bf16.mxu0 %v3122
    %3514 = vmatpush1.bf16.msra.mxu0 %v3121
    %3515 = vmatprep.subr.bf16.mxu0 %v3138
    %3516 = vmatpush1.bf16.msra.mxu0 %v3137
    %3517 = vmatprep.subr.bf16.mxu0 0
    %3518 = vmatpush1.bf16.msra.mxu0 0
    %3519 = vmatprep.subr.bf16.mxu0 0
    %3520 = vmatpush1.bf16.msra.mxu0 0
    %3521 = vmatprep.subr.bf16.mxu0 0
    %3522 = vmatpush1.bf16.msra.mxu0 0
    %3523 = vmatprep.subr.bf16.mxu0 0
    %3524 = vmatpush1.bf16.msra.mxu0 0
    %3525 = vmatprep.subr.bf16.mxu0 0
    %3526 = vmatpush1.bf16.msra.mxu0 0
    %3527 = vmatprep.subr.bf16.mxu0 0
    %3528 = vmatpush1.bf16.msra.mxu0 0
    %3529 = vmatprep.subr.bf16.mxu0 0
    %3530 = vmatpush1.bf16.msra.mxu0 0
    %3531 = vmatprep.subr.bf16.mxu0 0
    %3532 = vmatpush1.bf16.msra.mxu0 0
    %3533 = vmatprep.subr.bf16.mxu0 0
    %3534 = vmatpush1.bf16.msra.mxu0 0
    %3535 = vmatprep.subr.bf16.mxu0 0
    %3536 = vmatpush1.bf16.msra.mxu0 0
    %3537 = vmatprep.subr.bf16.mxu0 0
    %3538 = vmatpush1.bf16.msra.mxu0 0
    %3539 = vmatprep.subr.bf16.mxu0 0
    %3540 = vmatpush1.bf16.msra.mxu0 0
    %3541 = vmatprep.subr.bf16.mxu0 0
    %3542 = vmatpush1.bf16.msra.mxu0 0
    %3543 = vmatprep.subr.bf16.mxu0 0
    %3544 = vmatpush1.bf16.msra.mxu0 0
    %3545 = vmatprep.mubr.bf16.mxu0 0
    %3546 = vmatmul.mubr.bf16.gmra.mrb[0].mxu0 %v3224
    %v3547 = vpop.f32.mrb[0].mxu0
    %v3548 = vadd.f32 %v3202, %v3547
    %v3549 = vpop.f32.mrb[0].mxu0
    %v3550 = vadd.f32 %v3206, %v3549
    %v3551 = vpop.f32.mrb[0].mxu0
    %v3552 = vpop.f32.mrb[0].mxu0
    %3553 = vdwg.mxu0
    %v3554 = vmax.f32 %v3261, 0.0
    %v3555 = vmax.f32 %v3263, 0.0
    %v3556 = vmax.f32 %v3302, 0.0
    %v3557 = vmax.f32 %v3304, 0.0
    %v3558 = vmax.f32 %v3343, 0.0
    %v3559 = vmax.f32 %v3345, 0.0
    %v3560 = vmax.f32 %v3384, 0.0
    %v3561 = vmax.f32 %v3386, 0.0
    %v3562 = vmax.f32 %v3425, 0.0
    %v3563 = vmax.f32 %v3427, 0.0
    %v3564 = vmax.f32 %v3466, 0.0
    %v3565 = vmax.f32 %v3468, 0.0
    %v3566 = vmax.f32 %v3507, 0.0
    %v3567 = vmax.f32 %v3509, 0.0
    %v3568 = vmax.f32 %v3548, 0.0
    %v3569 = vmax.f32 %v3550, 0.0
    %s3570 = smul.u32 4, 256
    %s3571 = smul.u32 %s3570, 1
    %s3572 = sshll.u32 %s3571, 4
    %3573 = dma.done %s340, %s3572
    %v3574 = vpack.c.bf16 %v3554, %v3554
    %v3575 = vpack.c.bf16 %v3555, %v3555
    %v3576 = vpack.c.bf16 %v3556, %v3556
    %v3577 = vpack.c.bf16 %v3557, %v3557
    %v3578 = vpack.c.bf16 %v3558, %v3558
    %v3579 = vpack.c.bf16 %v3559, %v3559
    %v3580 = vpack.c.bf16 %v3560, %v3560
    %v3581 = vpack.c.bf16 %v3561, %v3561
    %v3582 = vpack.c.bf16 %v3562, %v3562
    %v3583 = vpack.c.bf16 %v3563, %v3563
    %v3584 = vpack.c.bf16 %v3564, %v3564
    %v3585 = vpack.c.bf16 %v3565, %v3565
    %v3586 = vpack.c.bf16 %v3566, %v3566
    %v3587 = vpack.c.bf16 %v3567, %v3567
    %v3588 = vpack.c.bf16 %v3568, %v3568
    %v3589 = vpack.c.bf16 %v3569, %v3569
    %v3590 = vld [vmem:[#allocation3] sm:$0xff]
    %v3591 = vld [vmem:[#allocation3 + $0x8] sm:$0xff]
    %v3592 = vld [vmem:[#allocation3 + $0x10] sm:$0xff]
    %v3593 = vld [vmem:[#allocation3 + $0x18] sm:$0xff]
    %v3594 = vld [vmem:[#allocation3 + $0x20] sm:$0xff]
    %v3595 = vld [vmem:[#allocation3 + $0x28] sm:$0xff]
    %v3596 = vld [vmem:[#allocation3 + $0x30] sm:$0xff]
    %v3597 = vld [vmem:[#allocation3 + $0x38] sm:$0xff]
    %v3598 = vld [vmem:[#allocation3 + $0x40] sm:$0xff]
    %v3599 = vld [vmem:[#allocation3 + $0x48] sm:$0xff]
    %v3600 = vld [vmem:[#allocation3 + $0x50] sm:$0xff]
    %v3601 = vld [vmem:[#allocation3 + $0x58] sm:$0xff]
    %v3602 = vld [vmem:[#allocation3 + $0x60] sm:$0xff]
    %v3603 = vld [vmem:[#allocation3 + $0x68] sm:$0xff]
    %v3604 = vld [vmem:[#allocation3 + $0x70] sm:$0xff]
    %v3605 = vld [vmem:[#allocation3 + $0x78] sm:$0xff]
    %v3606 = vld [vmem:[#allocation3 + $0x80] sm:$0xff]
    %v3607 = vld [vmem:[#allocation3 + $0x88] sm:$0xff]
    %v3608 = vld [vmem:[#allocation3 + $0x90] sm:$0xff]
    %v3609 = vld [vmem:[#allocation3 + $0x98] sm:$0xff]
    %v3610 = vld [vmem:[#allocation3 + $0xa0] sm:$0xff]
    %v3611 = vld [vmem:[#allocation3 + $0xa8] sm:$0xff]
    %v3612 = vld [vmem:[#allocation3 + $0xb0] sm:$0xff]
    %v3613 = vld [vmem:[#allocation3 + $0xb8] sm:$0xff]
    %v3614 = vld [vmem:[#allocation3 + $0xc0] sm:$0xff]
    %v3615 = vld [vmem:[#allocation3 + $0xc8] sm:$0xff]
    %v3616 = vld [vmem:[#allocation3 + $0xd0] sm:$0xff]
    %v3617 = vld [vmem:[#allocation3 + $0xd8] sm:$0xff]
    %v3618 = vld [vmem:[#allocation3 + $0xe0] sm:$0xff]
    %v3619 = vld [vmem:[#allocation3 + $0xe8] sm:$0xff]
    %v3620 = vld [vmem:[#allocation3 + $0xf0] sm:$0xff]
    %v3621 = vld [vmem:[#allocation3 + $0xf8] sm:$0xff]
    %v3622 = vld [vmem:[#allocation3 + $0x100] sm:$0xff]
    %v3623 = vld [vmem:[#allocation3 + $0x108] sm:$0xff]
    %v3624 = vld [vmem:[#allocation3 + $0x110] sm:$0xff]
    %v3625 = vld [vmem:[#allocation3 + $0x118] sm:$0xff]
    %v3626 = vld [vmem:[#allocation3 + $0x120] sm:$0xff]
    %v3627 = vld [vmem:[#allocation3 + $0x128] sm:$0xff]
    %v3628 = vld [vmem:[#allocation3 + $0x130] sm:$0xff]
    %v3629 = vld [vmem:[#allocation3 + $0x138] sm:$0xff]
    %v3630 = vld [vmem:[#allocation3 + $0x140] sm:$0xff]
    %v3631 = vld [vmem:[#allocation3 + $0x148] sm:$0xff]
    %v3632 = vld [vmem:[#allocation3 + $0x150] sm:$0xff]
    %v3633 = vld [vmem:[#allocation3 + $0x158] sm:$0xff]
    %v3634 = vld [vmem:[#allocation3 + $0x160] sm:$0xff]
    %v3635 = vld [vmem:[#allocation3 + $0x168] sm:$0xff]
    %v3636 = vld [vmem:[#allocation3 + $0x170] sm:$0xff]
    %v3637 = vld [vmem:[#allocation3 + $0x178] sm:$0xff]
    %v3638 = vld [vmem:[#allocation3 + $0x180] sm:$0xff]
    %v3639 = vld [vmem:[#allocation3 + $0x188] sm:$0xff]
    %v3640 = vld [vmem:[#allocation3 + $0x190] sm:$0xff]
    %v3641 = vld [vmem:[#allocation3 + $0x198] sm:$0xff]
    %v3642 = vld [vmem:[#allocation3 + $0x1a0] sm:$0xff]
    %v3643 = vld [vmem:[#allocation3 + $0x1a8] sm:$0xff]
    %v3644 = vld [vmem:[#allocation3 + $0x1b0] sm:$0xff]
    %v3645 = vld [vmem:[#allocation3 + $0x1b8] sm:$0xff]
    %v3646 = vld [vmem:[#allocation3 + $0x1c0] sm:$0xff]
    %v3647 = vld [vmem:[#allocation3 + $0x1c8] sm:$0xff]
    %v3648 = vld [vmem:[#allocation3 + $0x1d0] sm:$0xff]
    %v3649 = vld [vmem:[#allocation3 + $0x1d8] sm:$0xff]
    %v3650 = vld [vmem:[#allocation3 + $0x1e0] sm:$0xff]
    %v3651 = vld [vmem:[#allocation3 + $0x1e8] sm:$0xff]
    %v3652 = vld [vmem:[#allocation3 + $0x1f0] sm:$0xff]
    %v3653 = vld [vmem:[#allocation3 + $0x1f8] sm:$0xff]
    %v3654 = vld [vmem:[#allocation3 + $0x200] sm:$0xff]
    %v3655 = vld [vmem:[#allocation3 + $0x208] sm:$0xff]
    %v3656 = vld [vmem:[#allocation3 + $0x210] sm:$0xff]
    %v3657 = vld [vmem:[#allocation3 + $0x218] sm:$0xff]
    %v3658 = vld [vmem:[#allocation3 + $0x220] sm:$0xff]
    %v3659 = vld [vmem:[#allocation3 + $0x228] sm:$0xff]
    %v3660 = vld [vmem:[#allocation3 + $0x230] sm:$0xff]
    %v3661 = vld [vmem:[#allocation3 + $0x238] sm:$0xff]
    %v3662 = vld [vmem:[#allocation3 + $0x240] sm:$0xff]
    %v3663 = vld [vmem:[#allocation3 + $0x248] sm:$0xff]
    %v3664 = vld [vmem:[#allocation3 + $0x250] sm:$0xff]
    %v3665 = vld [vmem:[#allocation3 + $0x258] sm:$0xff]
    %v3666 = vld [vmem:[#allocation3 + $0x260] sm:$0xff]
    %v3667 = vld [vmem:[#allocation3 + $0x268] sm:$0xff]
    %v3668 = vld [vmem:[#allocation3 + $0x270] sm:$0xff]
    %v3669 = vld [vmem:[#allocation3 + $0x278] sm:$0xff]
    %v3670 = vld [vmem:[#allocation3 + $0x280] sm:$0xff]
    %v3671 = vld [vmem:[#allocation3 + $0x288] sm:$0xff]
    %v3672 = vld [vmem:[#allocation3 + $0x290] sm:$0xff]
    %v3673 = vld [vmem:[#allocation3 + $0x298] sm:$0xff]
    %v3674 = vld [vmem:[#allocation3 + $0x2a0] sm:$0xff]
    %v3675 = vld [vmem:[#allocation3 + $0x2a8] sm:$0xff]
    %v3676 = vld [vmem:[#allocation3 + $0x2b0] sm:$0xff]
    %v3677 = vld [vmem:[#allocation3 + $0x2b8] sm:$0xff]
    %v3678 = vld [vmem:[#allocation3 + $0x2c0] sm:$0xff]
    %v3679 = vld [vmem:[#allocation3 + $0x2c8] sm:$0xff]
    %v3680 = vld [vmem:[#allocation3 + $0x2d0] sm:$0xff]
    %v3681 = vld [vmem:[#allocation3 + $0x2d8] sm:$0xff]
    %v3682 = vld [vmem:[#allocation3 + $0x2e0] sm:$0xff]
    %v3683 = vld [vmem:[#allocation3 + $0x2e8] sm:$0xff]
    %v3684 = vld [vmem:[#allocation3 + $0x2f0] sm:$0xff]
    %v3685 = vld [vmem:[#allocation3 + $0x2f8] sm:$0xff]
    %v3686 = vld [vmem:[#allocation3 + $0x300] sm:$0xff]
    %v3687 = vld [vmem:[#allocation3 + $0x308] sm:$0xff]
    %v3688 = vld [vmem:[#allocation3 + $0x310] sm:$0xff]
    %v3689 = vld [vmem:[#allocation3 + $0x318] sm:$0xff]
    %v3690 = vld [vmem:[#allocation3 + $0x320] sm:$0xff]
    %v3691 = vld [vmem:[#allocation3 + $0x328] sm:$0xff]
    %v3692 = vld [vmem:[#allocation3 + $0x330] sm:$0xff]
    %v3693 = vld [vmem:[#allocation3 + $0x338] sm:$0xff]
    %v3694 = vld [vmem:[#allocation3 + $0x340] sm:$0xff]
    %v3695 = vld [vmem:[#allocation3 + $0x348] sm:$0xff]
    %v3696 = vld [vmem:[#allocation3 + $0x350] sm:$0xff]
    %v3697 = vld [vmem:[#allocation3 + $0x358] sm:$0xff]
    %v3698 = vld [vmem:[#allocation3 + $0x360] sm:$0xff]
    %v3699 = vld [vmem:[#allocation3 + $0x368] sm:$0xff]
    %v3700 = vld [vmem:[#allocation3 + $0x370] sm:$0xff]
    %v3701 = vld [vmem:[#allocation3 + $0x378] sm:$0xff]
    %v3702 = vld [vmem:[#allocation3 + $0x380] sm:$0xff]
    %v3703 = vld [vmem:[#allocation3 + $0x388] sm:$0xff]
    %v3704 = vld [vmem:[#allocation3 + $0x390] sm:$0xff]
    %v3705 = vld [vmem:[#allocation3 + $0x398] sm:$0xff]
    %v3706 = vld [vmem:[#allocation3 + $0x3a0] sm:$0xff]
    %v3707 = vld [vmem:[#allocation3 + $0x3a8] sm:$0xff]
    %v3708 = vld [vmem:[#allocation3 + $0x3b0] sm:$0xff]
    %v3709 = vld [vmem:[#allocation3 + $0x3b8] sm:$0xff]
    %v3710 = vld [vmem:[#allocation3 + $0x3c0] sm:$0xff]
    %v3711 = vld [vmem:[#allocation3 + $0x3c8] sm:$0xff]
    %v3712 = vld [vmem:[#allocation3 + $0x3d0] sm:$0xff]
    %v3713 = vld [vmem:[#allocation3 + $0x3d8] sm:$0xff]
    %v3714 = vld [vmem:[#allocation3 + $0x3e0] sm:$0xff]
    %v3715 = vld [vmem:[#allocation3 + $0x3e8] sm:$0xff]
    %v3716 = vld [vmem:[#allocation3 + $0x3f0] sm:$0xff]
    %v3717 = vld [vmem:[#allocation3 + $0x3f8] sm:$0xff]
    %v3718 = vld [vmem:[%s7] sm:$0x1]
    %v3720 = vlaneseq
    %v3721 = vshrl.u32 %v3720, 7
    %v3722 = vsub.s32 0, %v3721
    %v3723 = vrot.slane %v3718, %v3722
    %3725 = vmatprep.subr.bf16.mxu0 0
    %3726 = vmatpush1.bf16.msra.mxu0 %v3590
    %3727 = vmatprep.subr.bf16.mxu0 0
    %3728 = vmatpush1.bf16.msra.mxu0 %v3591
    %3729 = vmatprep.subr.bf16.mxu0 0
    %3730 = vmatpush1.bf16.msra.mxu0 %v3592
    %3731 = vmatprep.subr.bf16.mxu0 0
    %3732 = vmatpush1.bf16.msra.mxu0 %v3593
    %3733 = vmatprep.subr.bf16.mxu0 0
    %3734 = vmatpush1.bf16.msra.mxu0 %v3594
    %3735 = vmatprep.subr.bf16.mxu0 0
    %3736 = vmatpush1.bf16.msra.mxu0 %v3595
    %3737 = vmatprep.subr.bf16.mxu0 0
    %3738 = vmatpush1.bf16.msra.mxu0 %v3596
    %3739 = vmatprep.subr.bf16.mxu0 0
    %3740 = vmatpush1.bf16.msra.mxu0 %v3597
    %3741 = vmatprep.subr.bf16.mxu0 0
    %3742 = vmatpush1.bf16.msra.mxu0 %v3598
    %3743 = vmatprep.subr.bf16.mxu0 0
    %3744 = vmatpush1.bf16.msra.mxu0 %v3599
    %3745 = vmatprep.subr.bf16.mxu0 0
    %3746 = vmatpush1.bf16.msra.mxu0 %v3600
    %3747 = vmatprep.subr.bf16.mxu0 0
    %3748 = vmatpush1.bf16.msra.mxu0 %v3601
    %3749 = vmatprep.subr.bf16.mxu0 0
    %3750 = vmatpush1.bf16.msra.mxu0 %v3602
    %3751 = vmatprep.subr.bf16.mxu0 0
    %3752 = vmatpush1.bf16.msra.mxu0 %v3603
    %3753 = vmatprep.subr.bf16.mxu0 0
    %3754 = vmatpush1.bf16.msra.mxu0 %v3604
    %3755 = vmatprep.subr.bf16.mxu0 0
    %3756 = vmatpush1.bf16.msra.mxu0 %v3605
    %3757 = vmatprep.mubr.bf16.mxu0 %v3575
    %3758 = vmatmul.mubr.bf16.gmra.mrb[0].mxu0 %v3574
    %v3759 = vpop.f32.mrb[0].mxu0
    %v3760 = vadd.f32 %v3723, %v3759
    %v3761 = vpop.f32.mrb[0].mxu0
    %v3762 = vpop.f32.mrb[0].mxu0
    %v3763 = vpop.f32.mrb[0].mxu0
    %3764 = vdwg.mxu0
    %3765 = vmatprep.subr.bf16.mxu0 0
    %3766 = vmatpush1.bf16.msra.mxu0 %v3606
    %3767 = vmatprep.subr.bf16.mxu0 0
    %3768 = vmatpush1.bf16.msra.mxu0 %v3607
    %3769 = vmatprep.subr.bf16.mxu0 0
    %3770 = vmatpush1.bf16.msra.mxu0 %v3608
    %3771 = vmatprep.subr.bf16.mxu0 0
    %3772 = vmatpush1.bf16.msra.mxu0 %v3609
    %3773 = vmatprep.subr.bf16.mxu0 0
    %3774 = vmatpush1.bf16.msra.mxu0 %v3610
    %3775 = vmatprep.subr.bf16.mxu0 0
    %3776 = vmatpush1.bf16.msra.mxu0 %v3611
    %3777 = vmatprep.subr.bf16.mxu0 0
    %3778 = vmatpush1.bf16.msra.mxu0 %v3612
    %3779 = vmatprep.subr.bf16.mxu0 0
    %3780 = vmatpush1.bf16.msra.mxu0 %v3613
    %3781 = vmatprep.subr.bf16.mxu0 0
    %3782 = vmatpush1.bf16.msra.mxu0 %v3614
    %3783 = vmatprep.subr.bf16.mxu0 0
    %3784 = vmatpush1.bf16.msra.mxu0 %v3615
    %3785 = vmatprep.subr.bf16.mxu0 0
    %3786 = vmatpush1.bf16.msra.mxu0 %v3616
    %3787 = vmatprep.subr.bf16.mxu0 0
    %3788 = vmatpush1.bf16.msra.mxu0 %v3617
    %3789 = vmatprep.subr.bf16.mxu0 0
    %3790 = vmatpush1.bf16.msra.mxu0 %v3618
    %3791 = vmatprep.subr.bf16.mxu0 0
    %3792 = vmatpush1.bf16.msra.mxu0 %v3619
    %3793 = vmatprep.subr.bf16.mxu0 0
    %3794 = vmatpush1.bf16.msra.mxu0 %v3620
    %3795 = vmatprep.subr.bf16.mxu0 0
    %3796 = vmatpush1.bf16.msra.mxu0 %v3621
    %3797 = vmatprep.mubr.bf16.mxu0 %v3577
    %3798 = vmatmul.mubr.bf16.gmra.mrb[0].mxu0 %v3576
    %v3799 = vpop.f32.mrb[0].mxu0
    %v3800 = vadd.f32 %v3760, %v3799
    %v3801 = vpop.f32.mrb[0].mxu0
    %v3802 = vpop.f32.mrb[0].mxu0
    %v3803 = vpop.f32.mrb[0].mxu0
    %3804 = vdwg.mxu0
    %3805 = vmatprep.subr.bf16.mxu0 0
    %3806 = vmatpush1.bf16.msra.mxu0 %v3622
    %3807 = vmatprep.subr.bf16.mxu0 0
    %3808 = vmatpush1.bf16.msra.mxu0 %v3623
    %3809 = vmatprep.subr.bf16.mxu0 0
    %3810 = vmatpush1.bf16.msra.mxu0 %v3624
    %3811 = vmatprep.subr.bf16.mxu0 0
    %3812 = vmatpush1.bf16.msra.mxu0 %v3625
    %3813 = vmatprep.subr.bf16.mxu0 0
    %3814 = vmatpush1.bf16.msra.mxu0 %v3626
    %3815 = vmatprep.subr.bf16.mxu0 0
    %3816 = vmatpush1.bf16.msra.mxu0 %v3627
    %3817 = vmatprep.subr.bf16.mxu0 0
    %3818 = vmatpush1.bf16.msra.mxu0 %v3628
    %3819 = vmatprep.subr.bf16.mxu0 0
    %3820 = vmatpush1.bf16.msra.mxu0 %v3629
    %3821 = vmatprep.subr.bf16.mxu0 0
    %3822 = vmatpush1.bf16.msra.mxu0 %v3630
    %3823 = vmatprep.subr.bf16.mxu0 0
    %3824 = vmatpush1.bf16.msra.mxu0 %v3631
    %3825 = vmatprep.subr.bf16.mxu0 0
    %3826 = vmatpush1.bf16.msra.mxu0 %v3632
    %3827 = vmatprep.subr.bf16.mxu0 0
    %3828 = vmatpush1.bf16.msra.mxu0 %v3633
    %3829 = vmatprep.subr.bf16.mxu0 0
    %3830 = vmatpush1.bf16.msra.mxu0 %v3634
    %3831 = vmatprep.subr.bf16.mxu0 0
    %3832 = vmatpush1.bf16.msra.mxu0 %v3635
    %3833 = vmatprep.subr.bf16.mxu0 0
    %3834 = vmatpush1.bf16.msra.mxu0 %v3636
    %3835 = vmatprep.subr.bf16.mxu0 0
    %3836 = vmatpush1.bf16.msra.mxu0 %v3637
    %3837 = vmatprep.mubr.bf16.mxu0 %v3579
    %3838 = vmatmul.mubr.bf16.gmra.mrb[0].mxu0 %v3578
    %v3839 = vpop.f32.mrb[0].mxu0
    %v3840 = vadd.f32 %v3800, %v3839
    %v3841 = vpop.f32.mrb[0].mxu0
    %v3842 = vpop.f32.mrb[0].mxu0
    %v3843 = vpop.f32.mrb[0].mxu0
    %3844 = vdwg.mxu0
    %3845 = vmatprep.subr.bf16.mxu0 0
    %3846 = vmatpush1.bf16.msra.mxu0 %v3638
    %3847 = vmatprep.subr.bf16.mxu0 0
    %3848 = vmatpush1.bf16.msra.mxu0 %v3639
    %3849 = vmatprep.subr.bf16.mxu0 0
    %3850 = vmatpush1.bf16.msra.mxu0 %v3640
    %3851 = vmatprep.subr.bf16.mxu0 0
    %3852 = vmatpush1.bf16.msra.mxu0 %v3641
    %3853 = vmatprep.subr.bf16.mxu0 0
    %3854 = vmatpush1.bf16.msra.mxu0 %v3642
    %3855 = vmatprep.subr.bf16.mxu0 0
    %3856 = vmatpush1.bf16.msra.mxu0 %v3643
    %3857 = vmatprep.subr.bf16.mxu0 0
    %3858 = vmatpush1.bf16.msra.mxu0 %v3644
    %3859 = vmatprep.subr.bf16.mxu0 0
    %3860 = vmatpush1.bf16.msra.mxu0 %v3645
    %3861 = vmatprep.subr.bf16.mxu0 0
    %3862 = vmatpush1.bf16.msra.mxu0 %v3646
    %3863 = vmatprep.subr.bf16.mxu0 0
    %3864 = vmatpush1.bf16.msra.mxu0 %v3647
    %3865 = vmatprep.subr.bf16.mxu0 0
    %3866 = vmatpush1.bf16.msra.mxu0 %v3648
    %3867 = vmatprep.subr.bf16.mxu0 0
    %3868 = vmatpush1.bf16.msra.mxu0 %v3649
    %3869 = vmatprep.subr.bf16.mxu0 0
    %3870 = vmatpush1.bf16.msra.mxu0 %v3650
    %3871 = vmatprep.subr.bf16.mxu0 0
    %3872 = vmatpush1.bf16.msra.mxu0 %v3651
    %3873 = vmatprep.subr.bf16.mxu0 0
    %3874 = vmatpush1.bf16.msra.mxu0 %v3652
    %3875 = vmatprep.subr.bf16.mxu0 0
    %3876 = vmatpush1.bf16.msra.mxu0 %v3653
    %3877 = vmatprep.mubr.bf16.mxu0 %v3581
    %3878 = vmatmul.mubr.bf16.gmra.mrb[0].mxu0 %v3580
    %v3879 = vpop.f32.mrb[0].mxu0
    %v3880 = vadd.f32 %v3840, %v3879
    %v3881 = vpop.f32.mrb[0].mxu0
    %v3882 = vpop.f32.mrb[0].mxu0
    %v3883 = vpop.f32.mrb[0].mxu0
    %3884 = vdwg.mxu0
    %3885 = vmatprep.subr.bf16.mxu0 0
    %3886 = vmatpush1.bf16.msra.mxu0 %v3654
    %3887 = vmatprep.subr.bf16.mxu0 0
    %3888 = vmatpush1.bf16.msra.mxu0 %v3655
    %3889 = vmatprep.subr.bf16.mxu0 0
    %3890 = vmatpush1.bf16.msra.mxu0 %v3656
    %3891 = vmatprep.subr.bf16.mxu0 0
    %3892 = vmatpush1.bf16.msra.mxu0 %v3657
    %3893 = vmatprep.subr.bf16.mxu0 0
    %3894 = vmatpush1.bf16.msra.mxu0 %v3658
    %3895 = vmatprep.subr.bf16.mxu0 0
    %3896 = vmatpush1.bf16.msra.mxu0 %v3659
    %3897 = vmatprep.subr.bf16.mxu0 0
    %3898 = vmatpush1.bf16.msra.mxu0 %v3660
    %3899 = vmatprep.subr.bf16.mxu0 0
    %3900 = vmatpush1.bf16.msra.mxu0 %v3661
    %3901 = vmatprep.subr.bf16.mxu0 0
    %3902 = vmatpush1.bf16.msra.mxu0 %v3662
    %3903 = vmatprep.subr.bf16.mxu0 0
    %3904 = vmatpush1.bf16.msra.mxu0 %v3663
    %3905 = vmatprep.subr.bf16.mxu0 0
    %3906 = vmatpush1.bf16.msra.mxu0 %v3664
    %3907 = vmatprep.subr.bf16.mxu0 0
    %3908 = vmatpush1.bf16.msra.mxu0 %v3665
    %3909 = vmatprep.subr.bf16.mxu0 0
    %3910 = vmatpush1.bf16.msra.mxu0 %v3666
    %3911 = vmatprep.subr.bf16.mxu0 0
    %3912 = vmatpush1.bf16.msra.mxu0 %v3667
    %3913 = vmatprep.subr.bf16.mxu0 0
    %3914 = vmatpush1.bf16.msra.mxu0 %v3668
    %3915 = vmatprep.subr.bf16.mxu0 0
    %3916 = vmatpush1.bf16.msra.mxu0 %v3669
    %3917 = vmatprep.mubr.bf16.mxu0 %v3583
    %3918 = vmatmul.mubr.bf16.gmra.mrb[0].mxu0 %v3582
    %v3919 = vpop.f32.mrb[0].mxu0
    %v3920 = vadd.f32 %v3880, %v3919
    %v3921 = vpop.f32.mrb[0].mxu0
    %v3922 = vpop.f32.mrb[0].mxu0
    %v3923 = vpop.f32.mrb[0].mxu0
    %3924 = vdwg.mxu0
    %3925 = vmatprep.subr.bf16.mxu0 0
    %3926 = vmatpush1.bf16.msra.mxu0 %v3670
    %3927 = vmatprep.subr.bf16.mxu0 0
    %3928 = vmatpush1.bf16.msra.mxu0 %v3671
    %3929 = vmatprep.subr.bf16.mxu0 0
    %3930 = vmatpush1.bf16.msra.mxu0 %v3672
    %3931 = vmatprep.subr.bf16.mxu0 0
    %3932 = vmatpush1.bf16.msra.mxu0 %v3673
    %3933 = vmatprep.subr.bf16.mxu0 0
    %3934 = vmatpush1.bf16.msra.mxu0 %v3674
    %3935 = vmatprep.subr.bf16.mxu0 0
    %3936 = vmatpush1.bf16.msra.mxu0 %v3675
    %3937 = vmatprep.subr.bf16.mxu0 0
    %3938 = vmatpush1.bf16.msra.mxu0 %v3676
    %3939 = vmatprep.subr.bf16.mxu0 0
    %3940 = vmatpush1.bf16.msra.mxu0 %v3677
    %3941 = vmatprep.subr.bf16.mxu0 0
    %3942 = vmatpush1.bf16.msra.mxu0 %v3678
    %3943 = vmatprep.subr.bf16.mxu0 0
    %3944 = vmatpush1.bf16.msra.mxu0 %v3679
    %3945 = vmatprep.subr.bf16.mxu0 0
    %3946 = vmatpush1.bf16.msra.mxu0 %v3680
    %3947 = vmatprep.subr.bf16.mxu0 0
    %3948 = vmatpush1.bf16.msra.mxu0 %v3681
    %3949 = vmatprep.subr.bf16.mxu0 0
    %3950 = vmatpush1.bf16.msra.mxu0 %v3682
    %3951 = vmatprep.subr.bf16.mxu0 0
    %3952 = vmatpush1.bf16.msra.mxu0 %v3683
    %3953 = vmatprep.subr.bf16.mxu0 0
    %3954 = vmatpush1.bf16.msra.mxu0 %v3684
    %3955 = vmatprep.subr.bf16.mxu0 0
    %3956 = vmatpush1.bf16.msra.mxu0 %v3685
    %3957 = vmatprep.mubr.bf16.mxu0 %v3585
    %3958 = vmatmul.mubr.bf16.gmra.mrb[0].mxu0 %v3584
    %v3959 = vpop.f32.mrb[0].mxu0
    %v3960 = vadd.f32 %v3920, %v3959
    %v3961 = vpop.f32.mrb[0].mxu0
    %v3962 = vpop.f32.mrb[0].mxu0
    %v3963 = vpop.f32.mrb[0].mxu0
    %3964 = vdwg.mxu0
    %3965 = vmatprep.subr.bf16.mxu0 0
    %3966 = vmatpush1.bf16.msra.mxu0 %v3686
    %3967 = vmatprep.subr.bf16.mxu0 0
    %3968 = vmatpush1.bf16.msra.mxu0 %v3687
    %3969 = vmatprep.subr.bf16.mxu0 0
    %3970 = vmatpush1.bf16.msra.mxu0 %v3688
    %3971 = vmatprep.subr.bf16.mxu0 0
    %3972 = vmatpush1.bf16.msra.mxu0 %v3689
    %3973 = vmatprep.subr.bf16.mxu0 0
    %3974 = vmatpush1.bf16.msra.mxu0 %v3690
    %3975 = vmatprep.subr.bf16.mxu0 0
    %3976 = vmatpush1.bf16.msra.mxu0 %v3691
    %3977 = vmatprep.subr.bf16.mxu0 0
    %3978 = vmatpush1.bf16.msra.mxu0 %v3692
    %3979 = vmatprep.subr.bf16.mxu0 0
    %3980 = vmatpush1.bf16.msra.mxu0 %v3693
    %3981 = vmatprep.subr.bf16.mxu0 0
    %3982 = vmatpush1.bf16.msra.mxu0 %v3694
    %3983 = vmatprep.subr.bf16.mxu0 0
    %3984 = vmatpush1.bf16.msra.mxu0 %v3695
    %3985 = vmatprep.subr.bf16.mxu0 0
    %3986 = vmatpush1.bf16.msra.mxu0 %v3696
    %3987 = vmatprep.subr.bf16.mxu0 0
    %3988 = vmatpush1.bf16.msra.mxu0 %v3697
    %3989 = vmatprep.subr.bf16.mxu0 0
    %3990 = vmatpush1.bf16.msra.mxu0 %v3698
    %3991 = vmatprep.subr.bf16.mxu0 0
    %3992 = vmatpush1.bf16.msra.mxu0 %v3699
    %3993 = vmatprep.subr.bf16.mxu0 0
    %3994 = vmatpush1.bf16.msra.mxu0 %v3700
    %3995 = vmatprep.subr.bf16.mxu0 0
    %3996 = vmatpush1.bf16.msra.mxu0 %v3701
    %3997 = vmatprep.mubr.bf16.mxu0 %v3587
    %3998 = vmatmul.mubr.bf16.gmra.mrb[0].mxu0 %v3586
    %v3999 = vpop.f32.mrb[0].mxu0
    %v4000 = vadd.f32 %v3960, %v3999
    %v4001 = vpop.f32.mrb[0].mxu0
    %v4002 = vpop.f32.mrb[0].mxu0
    %v4003 = vpop.f32.mrb[0].mxu0
    %4004 = vdwg.mxu0
    %4005 = vmatprep.subr.bf16.mxu0 0
    %4006 = vmatpush1.bf16.msra.mxu0 %v3702
    %4007 = vmatprep.subr.bf16.mxu0 0
    %4008 = vmatpush1.bf16.msra.mxu0 %v3703
    %4009 = vmatprep.subr.bf16.mxu0 0
    %4010 = vmatpush1.bf16.msra.mxu0 %v3704
    %4011 = vmatprep.subr.bf16.mxu0 0
    %4012 = vmatpush1.bf16.msra.mxu0 %v3705
    %4013 = vmatprep.subr.bf16.mxu0 0
    %4014 = vmatpush1.bf16.msra.mxu0 %v3706
    %4015 = vmatprep.subr.bf16.mxu0 0
    %4016 = vmatpush1.bf16.msra.mxu0 %v3707
    %4017 = vmatprep.subr.bf16.mxu0 0
    %4018 = vmatpush1.bf16.msra.mxu0 %v3708
    %4019 = vmatprep.subr.bf16.mxu0 0
    %4020 = vmatpush1.bf16.msra.mxu0 %v3709
    %4021 = vmatprep.subr.bf16.mxu0 0
    %4022 = vmatpush1.bf16.msra.mxu0 %v3710
    %4023 = vmatprep.subr.bf16.mxu0 0
    %4024 = vmatpush1.bf16.msra.mxu0 %v3711
    %4025 = vmatprep.subr.bf16.mxu0 0
    %4026 = vmatpush1.bf16.msra.mxu0 %v3712
    %4027 = vmatprep.subr.bf16.mxu0 0
    %4028 = vmatpush1.bf16.msra.mxu0 %v3713
    %4029 = vmatprep.subr.bf16.mxu0 0
    %4030 = vmatpush1.bf16.msra.mxu0 %v3714
    %4031 = vmatprep.subr.bf16.mxu0 0
    %4032 = vmatpush1.bf16.msra.mxu0 %v3715
    %4033 = vmatprep.subr.bf16.mxu0 0
    %4034 = vmatpush1.bf16.msra.mxu0 %v3716
    %4035 = vmatprep.subr.bf16.mxu0 0
    %4036 = vmatpush1.bf16.msra.mxu0 %v3717
    %4037 = vmatprep.mubr.bf16.mxu0 %v3589
    %4038 = vmatmul.mubr.bf16.gmra.mrb[0].mxu0 %v3588
    %v4039 = vpop.f32.mrb[0].mxu0
    %v4040 = vadd.f32 %v4000, %v4039
    %v4041 = vpop.f32.mrb[0].mxu0
    %v4042 = vpop.f32.mrb[0].mxu0
    %v4043 = vpop.f32.mrb[0].mxu0
    %4044 = vdwg.mxu0
    %4045 = vst [vmem:[#allocation5] sm:$0x3] %v4040
    // Predicated region
    $region105: #{original_forward.1} parent=1 // pred_check
      _
    $region106: #{original_forward.1} parent=1 // pred_check_branch
      %4047 = sbr.rel (0) target = $region108
    $region107: #{original_forward.1} parent=1 // pred_region
      _
    $region108: #{original_forward.1} parent=1 // pred_fallthru
      _
    // Predicated region
    $region109: #{original_forward.1} parent=1 // pred_check
      _
    $region110: #{original_forward.1} parent=1 // pred_check_branch
      %4049 = sbr.rel (0) target = $region112
    $region111: #{original_forward.1} parent=1 // pred_region
      _
    $region112: #{original_forward.1} parent=1 // pred_fallthru
      _
    // Predicated region
    $region113: #{original_forward.1} parent=1 // pred_check
      _
    $region114: #{original_forward.1} parent=1 // pred_check_branch
      %4051 = sbr.rel (0) target = $region116
    $region115: #{original_forward.1} parent=1 // pred_region
      %s4053 = ssub.s32 32, 32
      %4054 = vsyncadd [#allocation6], %s4053
      %s4056 = sshll.u32 [#allocation5], 4
      %s4057 = int_to_ptr.vmem [resolvable:$true] %s4056
      %4059 = dma.vmem_to_hbm [thread:$0]  %s4057, 32, %s12, [#allocation6]
    $region116: #{original_forward.1} parent=1 // pred_fallthru
      _
    // Predicated region
    $region117: #{original_forward.1} parent=1 // pred_check
      _
    $region118: #{original_forward.1} parent=1 // pred_check_branch
      %4061 = sbr.rel (0) target = $region120
    $region119: #{original_forward.1} parent=1 // pred_region
      _
    $region120: #{original_forward.1} parent=1 // pred_fallthru
      _
    // Predicated region
    $region121: #{original_forward.1} parent=1 // pred_check
      _
    $region122: #{original_forward.1} parent=1 // pred_check_branch
      %4063 = sbr.rel (0) target = $region124
    $region123: #{original_forward.1} parent=1 // pred_region
      _
    $region124: #{original_forward.1} parent=1 // pred_fallthru
      _
    // Predicated region
    $region125: #{original_forward.1} parent=1 // pred_check
      _
    $region126: #{original_forward.1} parent=1 // pred_check_branch
      %4065 = sbr.rel (0) target = $region128
    $region127: #{original_forward.1} parent=1 // pred_region
      %4066 = dma.done [#allocation6], 32
    $region128: #{original_forward.1} parent=1 // pred_fallthru
      _
    %4067 = vsyncpa [#allocation6], 1
  %4068 = vsyncmov [#allocation4]
  %s4069 = vpop.sfrf %4068
  %p4070 = scmp.eq.s32.totalorder %s4069, 0
  %p4071 = pneg %p4070
  %4073 = shalt.err (%p4071)
  %s4074 = scalar_lea.sflag [#allocation4], 1
  %4075 = vsyncmov %s4074
  %s4076 = vpop.sfrf %4075
  %p4077 = scmp.eq.s32.totalorder %s4076, 0
  %p4078 = pneg %p4077
  %4080 = shalt.err (%p4078)

</llo_original>
